<compile_context>
chip_gen: v5e
topology: v5e:2x2
jax: 0.10.0
libtpu: 0.0.40
codegen_flags: <defaults>
</compile_context>

<pallas_src>
import functools

import jax
import jax.numpy as jnp
from jax.experimental import pallas as pl
from jax.experimental.pallas import tpu as pltpu


# --------------------------- hardware-derived knobs ------------------------

def _default_vmem_limit():
    # Derive the scoped-VMEM limit per generation (v7x: 64 MiB physical,
    # v5e/v6e: 128 MiB) instead of one hard-coded constant.
    try:
        cap = getattr(pltpu.get_tpu_info(), "vmem_capacity_bytes", None)
        if cap:
            return int(min(cap * 3 // 4, 100 * 1024 * 1024))
    except Exception:
        pass
    return 48 * 1024 * 1024


_VMEM_LIMIT = _default_vmem_limit()


def _resident_spec(shape, index_map):
    """BlockSpec for a block whose index never changes (weights/biases):
    request single buffering so large weights are not duplicated in VMEM."""
    try:
        return pl.BlockSpec(shape, index_map, pipeline_mode=pl.Buffered(1))
    except Exception:
        return pl.BlockSpec(shape, index_map)


# ----------------------------- Pallas kernels ------------------------------

def _conv_kernel(x_ref, w_ref, b_ref, o_ref, *, kh, kw, relu):
    """Stride-1 conv on an already padded (+ space-to-depth'd) NHWC block.

    The k*k tap gather ("im2col") happens here, in VMEM: taps are contiguous
    slices of the input block, concatenated along the lane (channel) dim and
    fed to ONE MXU matmul with K = kh*kw*C.  uint8 inputs (conv1) are widened
    on-chip; the bias ref may be position dependent (conv1) or per-channel.
    """
    x = x_ref[...]
    if jnp.issubdtype(x.dtype, jnp.integer):
        x = x.astype(jnp.float32)          # uint8 -> f32 widen in-kernel
    x = x.astype(jnp.bfloat16)
    tb, hp, wp, c = x.shape
    oh, ow = hp - kh + 1, wp - kw + 1
    slabs = [x[:, a:a + oh, b:b + ow, :] for a in range(kh) for b in range(kw)]
    patches = jnp.concatenate(slabs, axis=-1) if len(slabs) > 1 else slabs[0]
    patches = patches.reshape(tb * oh * ow, kh * kw * c)
    y = jnp.dot(patches, w_ref[...], preferred_element_type=jnp.float32)
    y = y.reshape(tb, oh, ow, -1) + b_ref[...]
    if relu:
        y = jnp.maximum(y, 0.0)
    o_ref[...] = y.astype(o_ref.dtype)


def _fc_head_kernel(x_ref, fw_ref, fb_ref, hw_ref, hb_ref, o_ref):
    # Fused:  feat = relu(x @ fc_w + fc_b);  out = feat @ [actor_w|value_w] + b
    h = jnp.dot(x_ref[...].astype(jnp.bfloat16), fw_ref[...],
                preferred_element_type=jnp.float32)
    h = jnp.maximum(h + fb_ref[...], 0.0)
    y = jnp.dot(h.astype(hw_ref.dtype), hw_ref[...],
                preferred_element_type=jnp.float32)
    o_ref[...] = (y + hb_ref[...]).astype(o_ref.dtype)


# --------------------------- pallas_call wrappers ---------------------------

def _batch_tile(batch, cap=8):
    # >= 2 grid steps whenever possible so ("parallel",) can use both v7x cores.
    if batch < 2:
        return batch
    return max(1, min(cap, batch // 2))


def conv_stride1(x, w_mat, bias, kh, kw, *, relu, out_dtype=jnp.bfloat16):
    """y = act(conv_{stride1}(x) + bias); x: (B, HP, WP, C) padded NHWC."""
    B, HP, WP, C = x.shape
    OH, OW = HP - kh + 1, WP - kw + 1
    K, OC = w_mat.shape
    assert K == kh * kw * C
    tb = _batch_tile(B)
    grid = (pl.cdiv(B, tb),)
    flops = 2 * B * OH * OW * K * OC
    bytes_accessed = int(x.size * x.dtype.itemsize + w_mat.size * 2
                         + bias.size * 4
                         + B * OH * OW * OC * jnp.dtype(out_dtype).itemsize)
    return pl.pallas_call(
        functools.partial(_conv_kernel, kh=kh, kw=kw, relu=relu),
        out_shape=jax.ShapeDtypeStruct((B, OH, OW, OC), out_dtype),
        grid=grid,
        in_specs=[
            pl.BlockSpec((tb, HP, WP, C), lambda i: (i, 0, 0, 0)),
            _resident_spec((K, OC), lambda i: (0, 0)),
            _resident_spec(bias.shape, lambda i: (0, 0, 0, 0)),
        ],
        out_specs=pl.BlockSpec((tb, OH, OW, OC), lambda i: (i, 0, 0, 0)),
        compiler_params=pltpu.CompilerParams(
            dimension_semantics=("parallel",),
            vmem_limit_bytes=_VMEM_LIMIT),
        cost_estimate=pl.CostEstimate(flops=flops, transcendentals=0,
                                      bytes_accessed=bytes_accessed),
    )(x, w_mat, bias)


def _row_tile(m, cap):
    if m < 16:
        return m
    t = min(cap, pl.cdiv(m, 2))          # >= 2 grid steps when M allows
    return max(8, (t // 8) * 8)


def fc_head(x, fc_w, fc_b, head_w, head_b, *, row_cap=512):
    """Fused fc(ReLU) + combined lane-dense actor/value head (one call)."""
    M, K = x.shape
    _, H = fc_w.shape
    _, NH = head_w.shape
    tm = _row_tile(M, row_cap)
    grid = (pl.cdiv(M, tm),)
    flops = 2 * M * K * H + 2 * M * H * NH
    bytes_accessed = int(M * K * x.dtype.itemsize + K * H * 2 + H * NH * 2
                         + (H + NH) * 4 + M * NH * 4)
    return pl.pallas_call(
        _fc_head_kernel,
        out_shape=jax.ShapeDtypeStruct((M, NH), jnp.float32),
        grid=grid,
        in_specs=[
            pl.BlockSpec((tm, K), lambda i: (i, 0)),
            _resident_spec((K, H), lambda i: (0, 0)),    # resident fc weight
            _resident_spec((1, H), lambda i: (0, 0)),
            _resident_spec((H, NH), lambda i: (0, 0)),   # resident head weight
            _resident_spec((1, NH), lambda i: (0, 0)),
        ],
        out_specs=pl.BlockSpec((tm, NH), lambda i: (i, 0)),
        compiler_params=pltpu.CompilerParams(
            dimension_semantics=("parallel",),
            vmem_limit_bytes=_VMEM_LIMIT),
        cost_estimate=pl.CostEstimate(flops=flops, transcendentals=0,
                                      bytes_accessed=bytes_accessed),
    )(x, fc_w, fc_b, head_w, head_b)


# ------------------------ activation layout (no copies of patches) ---------

def _conv_out(n, k, s, p):
    return (n + 2 * p - k) // s + 1


def _pad_and_space_to_depth(x, k, s, p):
    """Zero-pad + factor-s space-to-depth (pure layout, NO duplication).

    Turns a stride-s conv (kernel k, pad p) into a stride-1 conv with kernel
    k//s over s*s*C channels, so the Pallas kernel only needs contiguous tap
    slices (no strided gathers, no im2col patch matrix in HBM).
    """
    B, H, W, C = x.shape
    OH, OW = _conv_out(H, k, s, p), _conv_out(W, k, s, p)
    UH, UW = (OH - 1) * s + k, (OW - 1) * s + k      # rows/cols actually read
    x = jnp.pad(x, ((0, 0), (p, UH - H - p), (p, UW - W - p), (0, 0)))
    if s > 1:
        x = x.reshape(B, UH // s, s, UW // s, s, C)
        x = x.transpose(0, 1, 3, 2, 4, 5).reshape(B, UH // s, UW // s, s * s * C)
    return x


# ----------------------- one-time parameter preparation ---------------------

def _pack_conv_weight(w_oihw, k, s):
    """torch (OC, IC, KH, KW) -> (K, OC) matching the in-kernel patch layout
    after pad + space-to-depth (taps a-major/b-minor, channels (r, q, c))."""
    OC, IC, KH, KW = w_oihw.shape
    assert KH == k and KW == k and k % s == 0
    kg = k // s
    w = jnp.transpose(w_oihw, (2, 3, 1, 0))            # (KH, KW, IC, OC)
    w = w.reshape(kg, s, kg, s, IC, OC)                # (a, r, b, q, IC, OC)
    w = jnp.transpose(w, (0, 2, 1, 3, 4, 5))           # (a, b, r, q, IC, OC)
    return w.reshape(kg * kg * s * s * IC, OC)


def prepare_params(params, obs_hw):
    """One-time parameter packing (hoisted out of the per-step forward)."""
    H, W = obs_hw
    OC1 = params["c1_w"].shape[0]
    OH1, OW1 = _conv_out(H, 8, 4, 4), _conv_out(W, 8, 4, 4)
    OH2, OW2 = _conv_out(OH1, 4, 2, 2), _conv_out(OW1, 4, 2, 2)
    OH3, OW3 = _conv_out(OH2, 3, 1, 1), _conv_out(OW2, 3, 1, 1)

    prep = {}
    # conv1: fold (x - 127.5)/127.5 exactly.  Scale goes into the weights; the
    # offset goes into a position-dependent bias map, because the reference
    # zero-pads AFTER normalization (padded taps contribute 0, so the offset
    # correction is -sum of weights over IN-BOUNDS taps only).
    prep["c1_w"] = _pack_conv_weight(params["c1_w"] * (1.0 / 127.5),
                                     8, 4).astype(jnp.bfloat16)
    UH1, UW1 = (OH1 - 1) * 4 + 8, (OW1 - 1) * 4 + 8
    inb = jnp.pad(jnp.ones((H, W), jnp.float32),
                  ((4, UH1 - H - 4), (4, UW1 - W - 4)))
    wsum = jnp.sum(params["c1_w"], axis=1)             # (OC1, 8, 8)
    corr = jnp.zeros((OH1, OW1, OC1), jnp.float32)
    for i in range(8):
        for j in range(8):
            win = inb[i:i + (OH1 - 1) * 4 + 1:4, j:j + (OW1 - 1) * 4 + 1:4]
            corr = corr + win[:, :, None] * wsum[:, i, j][None, None, :]
    prep["c1_b"] = ((params["c1_b"][None, None, :] - corr)[None]
                    ).astype(jnp.float32)              # (1, OH1, OW1, OC1)

    prep["c2_w"] = _pack_conv_weight(params["c2_w"], 4, 2).astype(jnp.bfloat16)
    prep["c2_b"] = params["c2_b"].astype(jnp.float32).reshape(1, 1, 1, -1)
    prep["c3_w"] = _pack_conv_weight(params["c3_w"], 3, 1).astype(jnp.bfloat16)
    prep["c3_b"] = params["c3_b"].astype(jnp.float32).reshape(1, 1, 1, -1)

    # fc: reproduce torch's NCHW nn.Flatten() ordering (conv stack stays NHWC)
    # by permuting fc_w rows once here.
    C3 = params["c3_w"].shape[0]
    fc_w = params["fc_w"].reshape(C3, OH3, OW3, -1).transpose(1, 2, 0, 3)
    prep["fc_w"] = fc_w.reshape(OH3 * OW3 * C3, -1).astype(jnp.bfloat16)
    prep["fc_b"] = params["fc_b"].astype(jnp.float32).reshape(1, -1)

    # actor & value heads fused into one lane-dense (pad-to-128) weight.
    A = params["actor_w"].shape[1]
    head_w = jnp.concatenate([params["actor_w"], params["value_w"]], axis=1)
    head_b = jnp.concatenate([params["actor_b"], params["value_b"]], axis=0)
    nh_pad = pl.cdiv(A + 1, 128) * 128
    prep["head_w"] = jnp.pad(head_w, ((0, 0), (0, nh_pad - (A + 1)))
                             ).astype(jnp.bfloat16)
    prep["head_b"] = jnp.pad(head_b, (0, nh_pad - (A + 1))
                             ).astype(jnp.float32).reshape(1, -1)
    return prep


# ------------------------------- forward pass ------------------------------

def atari_actor_critic_forward(obs_u8, prep, *, action_dim):
    """Returns (logits, value) — logits parameterize the Categorical pi."""
    # NCHW uint8 -> NHWC (channels on the lane axis); stays uint8 all the way
    # into the conv1 kernel, which widens/normalizes on-chip.
    x = jnp.transpose(obs_u8, (0, 2, 3, 1))

    x = _pad_and_space_to_depth(x, 8, 4, 4)            # uint8, no duplication
    x = conv_stride1(x, prep["c1_w"], prep["c1_b"], 2, 2, relu=True)
    x = _pad_and_space_to_depth(x, 4, 2, 2)
    x = conv_stride1(x, prep["c2_w"], prep["c2_b"], 2, 2, relu=True)
    x = _pad_and_space_to_depth(x, 3, 1, 1)
    x = conv_stride1(x, prep["c3_w"], prep["c3_b"], 3, 3, relu=True)

    feat = x.reshape(x.shape[0], -1)                   # NHWC flatten; fc_w rows
                                                       # pre-permuted to match.
    out = fc_head(feat, prep["fc_w"], prep["fc_b"],
                  prep["head_w"], prep["head_b"])
    logits = out[:, :action_dim]
    # TODO(synk): torch.distributions.Categorical has no Pallas equivalent;
    # we return the raw logits that parameterize it.
    value = out[:, action_dim]
    return logits, value


# --------------------------- synthetic parameters ---------------------------

def init_params(key, in_channels, h, w, action_dim):
    """Deterministic synthetic parameters (shapes per the torch module)."""
    def uniform(k, shape, fan_in):
        bound = 1.0 / jnp.sqrt(jnp.float32(fan_in))
        return jax.random.uniform(k, shape, jnp.float32, -bound, bound)

    ks = jax.random.split(key, 12)
    h1, w1 = _conv_out(h, 8, 4, 4), _conv_out(w, 8, 4, 4)
    h2, w2 = _conv_out(h1, 4, 2, 2), _conv_out(w1, 4, 2, 2)
    h3, w3 = _conv_out(h2, 3, 1, 1), _conv_out(w2, 3, 1, 1)
    flat = 64 * h3 * w3

    p = {}
    p["c1_w"] = uniform(ks[0], (32, in_channels, 8, 8), in_channels * 64)
    p["c1_b"] = uniform(ks[1], (32,), in_channels * 64)
    p["c2_w"] = uniform(ks[2], (64, 32, 4, 4), 32 * 16)
    p["c2_b"] = uniform(ks[3], (64,), 32 * 16)
    p["c3_w"] = uniform(ks[4], (64, 64, 3, 3), 64 * 9)
    p["c3_b"] = uniform(ks[5], (64,), 64 * 9)
    p["fc_w"] = uniform(ks[6], (flat, 512), flat)
    p["fc_b"] = uniform(ks[7], (512,), flat)
    p["actor_w"] = uniform(ks[8], (512, action_dim), 512)
    p["actor_b"] = uniform(ks[9], (action_dim,), 512)
    p["value_w"] = uniform(ks[10], (512, 1), 512)
    p["value_b"] = uniform(ks[11], (1,), 512)
    return p


if __name__ == "__main__":
    key = jax.random.PRNGKey(0)
    k_obs, k_params = jax.random.split(key)

    B, C, H, W = 2, 4, 16, 16
    action_dim = 6

    obs = jax.random.randint(k_obs, (B, C, H, W), 0, 255,
                             dtype=jnp.int32).astype(jnp.uint8)
    params = init_params(k_params, C, H, W, action_dim)

    # One-time parameter packing (hoisted out of the per-step graph).
    prep = prepare_params(params, (H, W))

    fwd = jax.jit(functools.partial(atari_actor_critic_forward,
                                    action_dim=action_dim))
    logits, value = fwd(obs, prep)
    jax.block_until_ready((logits, value))

    assert logits.shape == (B, action_dim)
    assert value.shape == (B,)
    print("KERNEL_OK")
</pallas_src>

<mosaic_0001>
module attributes {stable_mosaic.version = 11 : i64} {
  func.func @_conv_kernel(%arg0: i32, %arg1: memref<1x6x6x64xi8, #tpu.memory_space<vmem>>, %arg2: memref<256x32xbf16, #tpu.memory_space<vmem>>, %arg3: memref<1x5x5x32xf32, #tpu.memory_space<vmem>>, %arg4: memref<1x5x5x32xbf16, #tpu.memory_space<vmem>>) attributes {dimension_semantics = [#tpu.dimension_semantics<parallel>], iteration_bounds = array<i64: 2>, scalar_prefetch = 0 : i64, scratch_operands = 0 : i64, tpu.core_type = #tpu.core_type<tc>, window_params = [{transform_indices = @transform_0, window_bounds = array<i64: 1, 6, 6, 64>}, {pipeline_mode = #tpu.pipeline_mode<synchronous>, transform_indices = @transform_1, window_bounds = array<i64: 256, 32>}, {pipeline_mode = #tpu.pipeline_mode<synchronous>, transform_indices = @transform_2, window_bounds = array<i64: 1, 5, 5, 32>}, {transform_indices = @transform_3, window_bounds = array<i64: 1, 5, 5, 32>}]} {
    %c0 = arith.constant 0 : index
    %c0_0 = arith.constant 0 : index
    %c0_1 = arith.constant 0 : index
    %c0_2 = arith.constant 0 : index
    %0 = vector.load %arg1[%c0, %c0_0, %c0_1, %c0_2] : memref<1x6x6x64xi8, #tpu.memory_space<vmem>>, vector<1x6x6x64xi8>
    %1 = arith.uitofp %0 : vector<1x6x6x64xi8> to vector<1x6x6x64xf32>
    %2 = arith.truncf %1 : vector<1x6x6x64xf32> to vector<1x6x6x64xbf16>
    %3 = vector.extract_strided_slice %2 {offsets = [0, 0, 0, 0], sizes = [1, 5, 5, 64], strides = [1, 1, 1, 1]} : vector<1x6x6x64xbf16> to vector<1x5x5x64xbf16>
    %4 = vector.extract_strided_slice %2 {offsets = [0, 0, 1, 0], sizes = [1, 5, 5, 64], strides = [1, 1, 1, 1]} : vector<1x6x6x64xbf16> to vector<1x5x5x64xbf16>
    %5 = vector.extract_strided_slice %2 {offsets = [0, 1, 0, 0], sizes = [1, 5, 5, 64], strides = [1, 1, 1, 1]} : vector<1x6x6x64xbf16> to vector<1x5x5x64xbf16>
    %6 = vector.extract_strided_slice %2 {offsets = [0, 1, 1, 0], sizes = [1, 5, 5, 64], strides = [1, 1, 1, 1]} : vector<1x6x6x64xbf16> to vector<1x5x5x64xbf16>
    %7 = tpu.concatenate %3, %4, %5, %6 in 3 : vector<1x5x5x64xbf16>, vector<1x5x5x64xbf16>, vector<1x5x5x64xbf16>, vector<1x5x5x64xbf16> -> vector<1x5x5x256xbf16>
    %8 = vector.shape_cast %7 : vector<1x5x5x256xbf16> to vector<25x256xbf16>
    %c0_3 = arith.constant 0 : index
    %c0_4 = arith.constant 0 : index
    %9 = vector.load %arg2[%c0_3, %c0_4] : memref<256x32xbf16, #tpu.memory_space<vmem>>, vector<256x32xbf16>
    %cst = arith.constant dense<0.000000e+00> : vector<25x32xf32>
    %10 = tpu.matmul %8, %9, %cst {dimension_numbers = #tpu.dot_dimension_numbers<[1], [0], [0], [1], [0, 0, 1, 1], [], []>} : vector<25x256xbf16>, vector<256x32xbf16>, vector<25x32xf32> -> vector<25x32xf32>
    %11 = vector.shape_cast %10 : vector<25x32xf32> to vector<1x5x5x32xf32>
    %c0_5 = arith.constant 0 : index
    %c0_6 = arith.constant 0 : index
    %c0_7 = arith.constant 0 : index
    %c0_8 = arith.constant 0 : index
    %12 = vector.load %arg3[%c0_5, %c0_6, %c0_7, %c0_8] : memref<1x5x5x32xf32, #tpu.memory_space<vmem>>, vector<1x5x5x32xf32>
    %13 = arith.addf %11, %12 : vector<1x5x5x32xf32>
    %cst_9 = arith.constant 0.000000e+00 : f32
    %14 = vector.broadcast %cst_9 : f32 to vector<1x5x5x32xf32>
    %15 = arith.maximumf %13, %14 : vector<1x5x5x32xf32>
    %16 = arith.truncf %15 : vector<1x5x5x32xf32> to vector<1x5x5x32xbf16>
    %c0_10 = arith.constant 0 : index
    %c0_11 = arith.constant 0 : index
    %c0_12 = arith.constant 0 : index
    %c0_13 = arith.constant 0 : index
    %17 = vector.load %arg4[%c0_10, %c0_11, %c0_12, %c0_13] : memref<1x5x5x32xbf16, #tpu.memory_space<vmem>>, vector<1x5x5x32xbf16>
    tpu.vector_store %arg4[%c0_10, %c0_11, %c0_12, %c0_13], %16 {strides = array<i32>} : memref<1x5x5x32xbf16, #tpu.memory_space<vmem>>, vector<1x5x5x32xbf16>,
    return
  }
  func.func @transform_0(%arg0: i32) -> (i32, i32, i32, i32) {
    %c0_i32 = arith.constant 0 : i32
    %c0_i32_0 = arith.constant 0 : i32
    %c0_i32_1 = arith.constant 0 : i32
    %c0_i32_2 = arith.constant 0 : i32
    return %arg0, %c0_i32, %c0_i32_0, %c0_i32_1 : i32, i32, i32, i32
  }
  func.func @transform_1(%arg0: i32) -> (i32, i32) {
    %c0_i32 = arith.constant 0 : i32
    %c0_i32_0 = arith.constant 0 : i32
    %c0_i32_1 = arith.constant 0 : i32
    return %c0_i32, %c0_i32_0 : i32, i32
  }
  func.func @transform_2(%arg0: i32) -> (i32, i32, i32, i32) {
    %c0_i32 = arith.constant 0 : i32
    %c0_i32_0 = arith.constant 0 : i32
    %c0_i32_1 = arith.constant 0 : i32
    %c0_i32_2 = arith.constant 0 : i32
    %c0_i32_3 = arith.constant 0 : i32
    return %c0_i32, %c0_i32_0, %c0_i32_1, %c0_i32_2 : i32, i32, i32, i32
  }
  func.func @transform_3(%arg0: i32) -> (i32, i32, i32, i32) {
    %c0_i32 = arith.constant 0 : i32
    %c0_i32_0 = arith.constant 0 : i32
    %c0_i32_1 = arith.constant 0 : i32
    %c0_i32_2 = arith.constant 0 : i32
    return %arg0, %c0_i32, %c0_i32_0, %c0_i32_1 : i32, i32, i32, i32
  }
}

module attributes {stable_mosaic.version = 11 : i64} {
  func.func @_conv_kernel(%arg0: i32, %arg1: memref<1x4x4x128xbf16, #tpu.memory_space<vmem>>, %arg2: memref<512x64xbf16, #tpu.memory_space<vmem>>, %arg3: memref<1x1x1x64xf32, #tpu.memory_space<vmem>>, %arg4: memref<1x3x3x64xbf16, #tpu.memory_space<vmem>>) attributes {dimension_semantics = [#tpu.dimension_semantics<parallel>], iteration_bounds = array<i64: 2>, scalar_prefetch = 0 : i64, scratch_operands = 0 : i64, tpu.core_type = #tpu.core_type<tc>, window_params = [{transform_indices = @transform_0, window_bounds = array<i64: 1, 4, 4, 128>}, {pipeline_mode = #tpu.pipeline_mode<synchronous>, transform_indices = @transform_1, window_bounds = array<i64: 512, 64>}, {pipeline_mode = #tpu.pipeline_mode<synchronous>, transform_indices = @transform_2, window_bounds = array<i64: 1, 1, 1, 64>}, {transform_indices = @transform_3, window_bounds = array<i64: 1, 3, 3, 64>}]} {
    %c0 = arith.constant 0 : index
    %c0_0 = arith.constant 0 : index
    %c0_1 = arith.constant 0 : index
    %c0_2 = arith.constant 0 : index
    %0 = vector.load %arg1[%c0, %c0_0, %c0_1, %c0_2] : memref<1x4x4x128xbf16, #tpu.memory_space<vmem>>, vector<1x4x4x128xbf16>
    %1 = vector.extract_strided_slice %0 {offsets = [0, 0, 0, 0], sizes = [1, 3, 3, 128], strides = [1, 1, 1, 1]} : vector<1x4x4x128xbf16> to vector<1x3x3x128xbf16>
    %2 = vector.extract_strided_slice %0 {offsets = [0, 0, 1, 0], sizes = [1, 3, 3, 128], strides = [1, 1, 1, 1]} : vector<1x4x4x128xbf16> to vector<1x3x3x128xbf16>
    %3 = vector.extract_strided_slice %0 {offsets = [0, 1, 0, 0], sizes = [1, 3, 3, 128], strides = [1, 1, 1, 1]} : vector<1x4x4x128xbf16> to vector<1x3x3x128xbf16>
    %4 = vector.extract_strided_slice %0 {offsets = [0, 1, 1, 0], sizes = [1, 3, 3, 128], strides = [1, 1, 1, 1]} : vector<1x4x4x128xbf16> to vector<1x3x3x128xbf16>
    %5 = tpu.concatenate %1, %2, %3, %4 in 3 : vector<1x3x3x128xbf16>, vector<1x3x3x128xbf16>, vector<1x3x3x128xbf16>, vector<1x3x3x128xbf16> -> vector<1x3x3x512xbf16>
    %6 = vector.shape_cast %5 : vector<1x3x3x512xbf16> to vector<9x512xbf16>
    %c0_3 = arith.constant 0 : index
    %c0_4 = arith.constant 0 : index
    %7 = vector.load %arg2[%c0_3, %c0_4] : memref<512x64xbf16, #tpu.memory_space<vmem>>, vector<512x64xbf16>
    %cst = arith.constant dense<0.000000e+00> : vector<9x64xf32>
    %8 = tpu.matmul %6, %7, %cst {dimension_numbers = #tpu.dot_dimension_numbers<[1], [0], [0], [1], [0, 0, 1, 1], [], []>} : vector<9x512xbf16>, vector<512x64xbf16>, vector<9x64xf32> -> vector<9x64xf32>
    %9 = vector.shape_cast %8 : vector<9x64xf32> to vector<1x3x3x64xf32>
    %c0_5 = arith.constant 0 : index
    %c0_6 = arith.constant 0 : index
    %c0_7 = arith.constant 0 : index
    %c0_8 = arith.constant 0 : index
    %10 = vector.load %arg3[%c0_5, %c0_6, %c0_7, %c0_8] : memref<1x1x1x64xf32, #tpu.memory_space<vmem>>, vector<1x1x1x64xf32>
    %11 = vector.broadcast %10 : vector<1x1x1x64xf32> to vector<1x3x3x64xf32>
    %12 = arith.addf %9, %11 : vector<1x3x3x64xf32>
    %cst_9 = arith.constant 0.000000e+00 : f32
    %13 = vector.broadcast %cst_9 : f32 to vector<1x3x3x64xf32>
    %14 = arith.maximumf %12, %13 : vector<1x3x3x64xf32>
    %15 = arith.truncf %14 : vector<1x3x3x64xf32> to vector<1x3x3x64xbf16>
    %c0_10 = arith.constant 0 : index
    %c0_11 = arith.constant 0 : index
    %c0_12 = arith.constant 0 : index
    %c0_13 = arith.constant 0 : index
    %16 = vector.load %arg4[%c0_10, %c0_11, %c0_12, %c0_13] : memref<1x3x3x64xbf16, #tpu.memory_space<vmem>>, vector<1x3x3x64xbf16>
    tpu.vector_store %arg4[%c0_10, %c0_11, %c0_12, %c0_13], %15 {strides = array<i32>} : memref<1x3x3x64xbf16, #tpu.memory_space<vmem>>, vector<1x3x3x64xbf16>,
    return
  }
  func.func @transform_0(%arg0: i32) -> (i32, i32, i32, i32) {
    %c0_i32 = arith.constant 0 : i32
    %c0_i32_0 = arith.constant 0 : i32
    %c0_i32_1 = arith.constant 0 : i32
    %c0_i32_2 = arith.constant 0 : i32
    return %arg0, %c0_i32, %c0_i32_0, %c0_i32_1 : i32, i32, i32, i32
  }
  func.func @transform_1(%arg0: i32) -> (i32, i32) {
    %c0_i32 = arith.constant 0 : i32
    %c0_i32_0 = arith.constant 0 : i32
    %c0_i32_1 = arith.constant 0 : i32
    return %c0_i32, %c0_i32_0 : i32, i32
  }
  func.func @transform_2(%arg0: i32) -> (i32, i32, i32, i32) {
    %c0_i32 = arith.constant 0 : i32
    %c0_i32_0 = arith.constant 0 : i32
    %c0_i32_1 = arith.constant 0 : i32
    %c0_i32_2 = arith.constant 0 : i32
    %c0_i32_3 = arith.constant 0 : i32
    return %c0_i32, %c0_i32_0, %c0_i32_1, %c0_i32_2 : i32, i32, i32, i32
  }
  func.func @transform_3(%arg0: i32) -> (i32, i32, i32, i32) {
    %c0_i32 = arith.constant 0 : i32
    %c0_i32_0 = arith.constant 0 : i32
    %c0_i32_1 = arith.constant 0 : i32
    %c0_i32_2 = arith.constant 0 : i32
    return %arg0, %c0_i32, %c0_i32_0, %c0_i32_1 : i32, i32, i32, i32
  }
}

module attributes {stable_mosaic.version = 11 : i64} {
  func.func @_fc_head_kernel(%arg0: i32, %arg1: memref<2x576xbf16, #tpu.memory_space<vmem>>, %arg2: memref<576x512xbf16, #tpu.memory_space<vmem>>, %arg3: memref<1x512xf32, #tpu.memory_space<vmem>>, %arg4: memref<512x128xbf16, #tpu.memory_space<vmem>>, %arg5: memref<1x128xf32, #tpu.memory_space<vmem>>, %arg6: memref<2x128xf32, #tpu.memory_space<vmem>>) attributes {dimension_semantics = [#tpu.dimension_semantics<parallel>], iteration_bounds = array<i64: 1>, scalar_prefetch = 0 : i64, scratch_operands = 0 : i64, tpu.core_type = #tpu.core_type<tc>, window_params = [{transform_indices = @transform_0, window_bounds = array<i64: 2, 576>}, {pipeline_mode = #tpu.pipeline_mode<synchronous>, transform_indices = @transform_1, window_bounds = array<i64: 576, 512>}, {pipeline_mode = #tpu.pipeline_mode<synchronous>, transform_indices = @transform_2, window_bounds = array<i64: 1, 512>}, {pipeline_mode = #tpu.pipeline_mode<synchronous>, transform_indices = @transform_3, window_bounds = array<i64: 512, 128>}, {pipeline_mode = #tpu.pipeline_mode<synchronous>, transform_indices = @transform_4, window_bounds = array<i64: 1, 128>}, {transform_indices = @transform_5, window_bounds = array<i64: 2, 128>}]} {
    %c0 = arith.constant 0 : index
    %c0_0 = arith.constant 0 : index
    %0 = vector.load %arg1[%c0, %c0_0] : memref<2x576xbf16, #tpu.memory_space<vmem>>, vector<2x576xbf16>
    %c0_1 = arith.constant 0 : index
    %c0_2 = arith.constant 0 : index
    %1 = vector.load %arg2[%c0_1, %c0_2] : memref<576x512xbf16, #tpu.memory_space<vmem>>, vector<576x512xbf16>
    %cst = arith.constant dense<0.000000e+00> : vector<2x512xf32>
    %2 = tpu.matmul %0, %1, %cst {dimension_numbers = #tpu.dot_dimension_numbers<[1], [0], [0], [1], [0, 0, 1, 1], [], []>} : vector<2x576xbf16>, vector<576x512xbf16>, vector<2x512xf32> -> vector<2x512xf32>
    %c0_3 = arith.constant 0 : index
    %c0_4 = arith.constant 0 : index
    %3 = vector.load %arg3[%c0_3, %c0_4] : memref<1x512xf32, #tpu.memory_space<vmem>>, vector<1x512xf32>
    %4 = vector.broadcast %3 : vector<1x512xf32> to vector<2x512xf32>
    %5 = arith.addf %2, %4 : vector<2x512xf32>
    %cst_5 = arith.constant 0.000000e+00 : f32
    %6 = vector.broadcast %cst_5 : f32 to vector<2x512xf32>
    %7 = arith.maximumf %5, %6 : vector<2x512xf32>
    %8 = arith.truncf %7 : vector<2x512xf32> to vector<2x512xbf16>
    %c0_6 = arith.constant 0 : index
    %c0_7 = arith.constant 0 : index
    %9 = vector.load %arg4[%c0_6, %c0_7] : memref<512x128xbf16, #tpu.memory_space<vmem>>, vector<512x128xbf16>
    %cst_8 = arith.constant dense<0.000000e+00> : vector<2x128xf32>
    %10 = tpu.matmul %8, %9, %cst_8 {dimension_numbers = #tpu.dot_dimension_numbers<[1], [0], [0], [1], [0, 0, 1, 1], [], []>} : vector<2x512xbf16>, vector<512x128xbf16>, vector<2x128xf32> -> vector<2x128xf32>
    %c0_9 = arith.constant 0 : index
    %c0_10 = arith.constant 0 : index
    %11 = vector.load %arg5[%c0_9, %c0_10] : memref<1x128xf32, #tpu.memory_space<vmem>>, vector<1x128xf32>
    %12 = vector.broadcast %11 : vector<1x128xf32> to vector<2x128xf32>
    %13 = arith.addf %10, %12 : vector<2x128xf32>
    %c0_11 = arith.constant 0 : index
    %c0_12 = arith.constant 0 : index
    %14 = vector.load %arg6[%c0_11, %c0_12] : memref<2x128xf32, #tpu.memory_space<vmem>>, vector<2x128xf32>
    tpu.vector_store %arg6[%c0_11, %c0_12], %13 {strides = array<i32>} : memref<2x128xf32, #tpu.memory_space<vmem>>, vector<2x128xf32>,
    return
  }
  func.func @transform_0(%arg0: i32) -> (i32, i32) {
    %c0_i32 = arith.constant 0 : i32
    %c0_i32_0 = arith.constant 0 : i32
    return %arg0, %c0_i32 : i32, i32
  }
  func.func @transform_1(%arg0: i32) -> (i32, i32) {
    %c0_i32 = arith.constant 0 : i32
    %c0_i32_0 = arith.constant 0 : i32
    %c0_i32_1 = arith.constant 0 : i32
    return %c0_i32, %c0_i32_0 : i32, i32
  }
  func.func @transform_2(%arg0: i32) -> (i32, i32) {
    %c0_i32 = arith.constant 0 : i32
    %c0_i32_0 = arith.constant 0 : i32
    %c0_i32_1 = arith.constant 0 : i32
    return %c0_i32, %c0_i32_0 : i32, i32
  }
  func.func @transform_3(%arg0: i32) -> (i32, i32) {
    %c0_i32 = arith.constant 0 : i32
    %c0_i32_0 = arith.constant 0 : i32
    %c0_i32_1 = arith.constant 0 : i32
    return %c0_i32, %c0_i32_0 : i32, i32
  }
  func.func @transform_4(%arg0: i32) -> (i32, i32) {
    %c0_i32 = arith.constant 0 : i32
    %c0_i32_0 = arith.constant 0 : i32
    %c0_i32_1 = arith.constant 0 : i32
    return %c0_i32, %c0_i32_0 : i32, i32
  }
  func.func @transform_5(%arg0: i32) -> (i32, i32) {
    %c0_i32 = arith.constant 0 : i32
    %c0_i32_0 = arith.constant 0 : i32
    return %arg0, %c0_i32 : i32, i32
  }
}

module attributes {stable_mosaic.version = 11 : i64} {
  func.func @_conv_kernel(%arg0: i32, %arg1: memref<1x5x5x64xbf16, #tpu.memory_space<vmem>>, %arg2: memref<576x64xbf16, #tpu.memory_space<vmem>>, %arg3: memref<1x1x1x64xf32, #tpu.memory_space<vmem>>, %arg4: memref<1x3x3x64xbf16, #tpu.memory_space<vmem>>) attributes {dimension_semantics = [#tpu.dimension_semantics<parallel>], iteration_bounds = array<i64: 2>, scalar_prefetch = 0 : i64, scratch_operands = 0 : i64, tpu.core_type = #tpu.core_type<tc>, window_params = [{transform_indices = @transform_0, window_bounds = array<i64: 1, 5, 5, 64>}, {pipeline_mode = #tpu.pipeline_mode<synchronous>, transform_indices = @transform_1, window_bounds = array<i64: 576, 64>}, {pipeline_mode = #tpu.pipeline_mode<synchronous>, transform_indices = @transform_2, window_bounds = array<i64: 1, 1, 1, 64>}, {transform_indices = @transform_3, window_bounds = array<i64: 1, 3, 3, 64>}]} {
    %c0 = arith.constant 0 : index
    %c0_0 = arith.constant 0 : index
    %c0_1 = arith.constant 0 : index
    %c0_2 = arith.constant 0 : index
    %0 = vector.load %arg1[%c0, %c0_0, %c0_1, %c0_2] : memref<1x5x5x64xbf16, #tpu.memory_space<vmem>>, vector<1x5x5x64xbf16>
    %1 = vector.extract_strided_slice %0 {offsets = [0, 0, 0, 0], sizes = [1, 3, 3, 64], strides = [1, 1, 1, 1]} : vector<1x5x5x64xbf16> to vector<1x3x3x64xbf16>
    %2 = vector.extract_strided_slice %0 {offsets = [0, 0, 1, 0], sizes = [1, 3, 3, 64], strides = [1, 1, 1, 1]} : vector<1x5x5x64xbf16> to vector<1x3x3x64xbf16>
    %3 = vector.extract_strided_slice %0 {offsets = [0, 0, 2, 0], sizes = [1, 3, 3, 64], strides = [1, 1, 1, 1]} : vector<1x5x5x64xbf16> to vector<1x3x3x64xbf16>
    %4 = vector.extract_strided_slice %0 {offsets = [0, 1, 0, 0], sizes = [1, 3, 3, 64], strides = [1, 1, 1, 1]} : vector<1x5x5x64xbf16> to vector<1x3x3x64xbf16>
    %5 = vector.extract_strided_slice %0 {offsets = [0, 1, 1, 0], sizes = [1, 3, 3, 64], strides = [1, 1, 1, 1]} : vector<1x5x5x64xbf16> to vector<1x3x3x64xbf16>
    %6 = vector.extract_strided_slice %0 {offsets = [0, 1, 2, 0], sizes = [1, 3, 3, 64], strides = [1, 1, 1, 1]} : vector<1x5x5x64xbf16> to vector<1x3x3x64xbf16>
    %7 = vector.extract_strided_slice %0 {offsets = [0, 2, 0, 0], sizes = [1, 3, 3, 64], strides = [1, 1, 1, 1]} : vector<1x5x5x64xbf16> to vector<1x3x3x64xbf16>
    %8 = vector.extract_strided_slice %0 {offsets = [0, 2, 1, 0], sizes = [1, 3, 3, 64], strides = [1, 1, 1, 1]} : vector<1x5x5x64xbf16> to vector<1x3x3x64xbf16>
    %9 = vector.extract_strided_slice %0 {offsets = [0, 2, 2, 0], sizes = [1, 3, 3, 64], strides = [1, 1, 1, 1]} : vector<1x5x5x64xbf16> to vector<1x3x3x64xbf16>
    %10 = tpu.concatenate %1, %2, %3, %4, %5, %6, %7, %8, %9 in 3 : vector<1x3x3x64xbf16>, vector<1x3x3x64xbf16>, vector<1x3x3x64xbf16>, vector<1x3x3x64xbf16>, vector<1x3x3x64xbf16>, vector<1x3x3x64xbf16>, vector<1x3x3x64xbf16>, vector<1x3x3x64xbf16>, vector<1x3x3x64xbf16> -> vector<1x3x3x576xbf16>
    %11 = vector.shape_cast %10 : vector<1x3x3x576xbf16> to vector<9x576xbf16>
    %c0_3 = arith.constant 0 : index
    %c0_4 = arith.constant 0 : index
    %12 = vector.load %arg2[%c0_3, %c0_4] : memref<576x64xbf16, #tpu.memory_space<vmem>>, vector<576x64xbf16>
    %cst = arith.constant dense<0.000000e+00> : vector<9x64xf32>
    %13 = tpu.matmul %11, %12, %cst {dimension_numbers = #tpu.dot_dimension_numbers<[1], [0], [0], [1], [0, 0, 1, 1], [], []>} : vector<9x576xbf16>, vector<576x64xbf16>, vector<9x64xf32> -> vector<9x64xf32>
    %14 = vector.shape_cast %13 : vector<9x64xf32> to vector<1x3x3x64xf32>
    %c0_5 = arith.constant 0 : index
    %c0_6 = arith.constant 0 : index
    %c0_7 = arith.constant 0 : index
    %c0_8 = arith.constant 0 : index
    %15 = vector.load %arg3[%c0_5, %c0_6, %c0_7, %c0_8] : memref<1x1x1x64xf32, #tpu.memory_space<vmem>>, vector<1x1x1x64xf32>
    %16 = vector.broadcast %15 : vector<1x1x1x64xf32> to vector<1x3x3x64xf32>
    %17 = arith.addf %14, %16 : vector<1x3x3x64xf32>
    %cst_9 = arith.constant 0.000000e+00 : f32
    %18 = vector.broadcast %cst_9 : f32 to vector<1x3x3x64xf32>
    %19 = arith.maximumf %17, %18 : vector<1x3x3x64xf32>
    %20 = arith.truncf %19 : vector<1x3x3x64xf32> to vector<1x3x3x64xbf16>
    %c0_10 = arith.constant 0 : index
    %c0_11 = arith.constant 0 : index
    %c0_12 = arith.constant 0 : index
    %c0_13 = arith.constant 0 : index
    %21 = vector.load %arg4[%c0_10, %c0_11, %c0_12, %c0_13] : memref<1x3x3x64xbf16, #tpu.memory_space<vmem>>, vector<1x3x3x64xbf16>
    tpu.vector_store %arg4[%c0_10, %c0_11, %c0_12, %c0_13], %20 {strides = array<i32>} : memref<1x3x3x64xbf16, #tpu.memory_space<vmem>>, vector<1x3x3x64xbf16>,
    return
  }
  func.func @transform_0(%arg0: i32) -> (i32, i32, i32, i32) {
    %c0_i32 = arith.constant 0 : i32
    %c0_i32_0 = arith.constant 0 : i32
    %c0_i32_1 = arith.constant 0 : i32
    %c0_i32_2 = arith.constant 0 : i32
    return %arg0, %c0_i32, %c0_i32_0, %c0_i32_1 : i32, i32, i32, i32
  }
  func.func @transform_1(%arg0: i32) -> (i32, i32) {
    %c0_i32 = arith.constant 0 : i32
    %c0_i32_0 = arith.constant 0 : i32
    %c0_i32_1 = arith.constant 0 : i32
    return %c0_i32, %c0_i32_0 : i32, i32
  }
  func.func @transform_2(%arg0: i32) -> (i32, i32, i32, i32) {
    %c0_i32 = arith.constant 0 : i32
    %c0_i32_0 = arith.constant 0 : i32
    %c0_i32_1 = arith.constant 0 : i32
    %c0_i32_2 = arith.constant 0 : i32
    %c0_i32_3 = arith.constant 0 : i32
    return %c0_i32, %c0_i32_0, %c0_i32_1, %c0_i32_2 : i32, i32, i32, i32
  }
  func.func @transform_3(%arg0: i32) -> (i32, i32, i32, i32) {
    %c0_i32 = arith.constant 0 : i32
    %c0_i32_0 = arith.constant 0 : i32
    %c0_i32_1 = arith.constant 0 : i32
    %c0_i32_2 = arith.constant 0 : i32
    return %arg0, %c0_i32, %c0_i32_0, %c0_i32_1 : i32, i32, i32, i32
  }
}

</mosaic_0001>

<llo_original>
// kernel: atari_actor_critic_forward.4
$region0: #{atari_actor_critic_forward.4}
  #allocation0 [shape = 'u32[]', space=smem, size = 0x4, offset = 0x4, fixed_abs, tag = 'smem constant byte address 0x4 - core index']
  #allocation1 [shape = 'u32[72,128]{1,0:T(1,128)}', space=vmem, size = 0x9000, scoped, tag = 'internal scratch']
  %s0 = inlined_call_operand.vmem [shape: u8[2,6,6,64], index: 0, kind: input, shape index: {}]
  %s1 = inlined_call_operand.vmem [shape: bf16[256,32], index: 1, kind: input, shape index: {}]
  %s2 = inlined_call_operand.vmem [shape: f32[1,5,5,32], index: 2, kind: input, shape index: {}]
  %s3 = inlined_call_operand.vmem [shape: bf16[2,5,5,32], index: 3, kind: output, shape index: {}]
  %s4 = sld [smem:[#allocation0]]
  $region45: #{atari_actor_critic_forward.4} parent=0
    _
  %s6 = ssub.s32 1, %s4
  %s7 = scalar_select 0, %s6, %s4
  loop: start=0, step=1, limit=4
  $region2: #{atari_actor_critic_forward.4} parent=0 // loop_pre_header
    _
  $region3: #{atari_actor_critic_forward.4} parent=0 // loop_header
    %s9 = sphi 0, %s13
    %p10 = scmp.ge.s32.totalorder %s9, 4
    %s19 = sphi 0, %s21
    %s22 = sphi 0, %s19
    %s23 = sphi 0, %s22
    %s39 = sphi 0, %s23
    %s43 = sphi 0, %s43
    %s45 = sphi 0, %s43
    %s46 = sphi 0, %s45
    %s60 = sphi 0, %s46
    %s64 = sphi 0, %s64
    %s66 = sphi 0, %s64
    %s67 = sphi 0, %s66
    %s81 = sphi 0, %s67
    %s87 = sphi 0, %s89
    %s90 = sphi 0, %s87
    %s91 = sphi 0, %s90
    %s107 = sphi 0, %s91
  $region4: #{atari_actor_critic_forward.4} parent=0 // loop_header_branch
    %12 = sbr.rel (%p10) target = $region8
  $region5: #{atari_actor_critic_forward.4} parent=0 // loop_body
    %s14 = ssub.s32 %s9, 1
    %s15 = ssub.s32 %s9, 2
    %s16 = sadd.s32 %s9, 1
    %s17 = ssub.s32 %s9, %s16
    %p18 = scmp.eq.s32.totalorder %s17, 0
    %s20 = sadd.s32 %s19, 1
    %s21 = scalar_select %p18, %s19, %s20
    %p24 = pneg %p18
    %p25 = scmp.eq.s32.totalorder %s9, 1
    %p26 = por %p24, %p25
    %p27 = scmp.ne.s32.totalorder %s19, %s22
    %p28 = scmp.eq.s32.totalorder %s9, 0
    %p29 = por %p27, %p28
    %p30 = scmp.ne.s32.totalorder %s19, %s22
    %p31 = scmp.eq.s32.totalorder %s14, 1
    %p32 = por %p30, %p31
    %p33 = scmp.ne.s32.totalorder %s22, %s23
    %p34 = scmp.eq.s32.totalorder %s14, 0
    %p35 = por %p33, %p34
    %p36 = scmp.ne.s32.totalorder %s22, %s23
    %p37 = scmp.eq.s32.totalorder %s15, 1
    %p38 = por %p36, %p37
    %p40 = scmp.ne.s32.totalorder %s23, %s39
    %p41 = scmp.eq.s32.totalorder %s15, 0
    %p42 = por %p40, %p41
    %s44 = sadd.s32 %s43, 1
    %p47 = scmp.eq.s32.totalorder %s9, 1
    %p48 = scmp.ne.s32.totalorder %s43, %s45
    %p49 = scmp.eq.s32.totalorder %s9, 0
    %p50 = por %p48, %p49
    %p51 = scmp.ne.s32.totalorder %s43, %s45
    %p52 = scmp.eq.s32.totalorder %s14, 1
    %p53 = por %p51, %p52
    %p54 = scmp.ne.s32.totalorder %s45, %s46
    %p55 = scmp.eq.s32.totalorder %s14, 0
    %p56 = por %p54, %p55
    %p57 = scmp.ne.s32.totalorder %s45, %s46
    %p58 = scmp.eq.s32.totalorder %s15, 1
    %p59 = por %p57, %p58
    %p61 = scmp.ne.s32.totalorder %s46, %s60
    %p62 = scmp.eq.s32.totalorder %s15, 0
    %p63 = por %p61, %p62
    %s65 = sadd.s32 %s64, 1
    %p68 = scmp.eq.s32.totalorder %s9, 1
    %p69 = scmp.ne.s32.totalorder %s64, %s66
    %p70 = scmp.eq.s32.totalorder %s9, 0
    %p71 = por %p69, %p70
    %p72 = scmp.ne.s32.totalorder %s64, %s66
    %p73 = scmp.eq.s32.totalorder %s14, 1
    %p74 = por %p72, %p73
    %p75 = scmp.ne.s32.totalorder %s66, %s67
    %p76 = scmp.eq.s32.totalorder %s14, 0
    %p77 = por %p75, %p76
    %p78 = scmp.ne.s32.totalorder %s66, %s67
    %p79 = scmp.eq.s32.totalorder %s15, 1
    %p80 = por %p78, %p79
    %p82 = scmp.ne.s32.totalorder %s67, %s81
    %p83 = scmp.eq.s32.totalorder %s15, 0
    %p84 = por %p82, %p83
    %s85 = ssub.s32 %s9, %s16
    %p86 = scmp.eq.s32.totalorder %s85, 0
    %s88 = sadd.s32 %s87, 1
    %s89 = scalar_select %p86, %s87, %s88
    %p92 = pneg %p86
    %p93 = scmp.eq.s32.totalorder %s9, 1
    %p94 = por %p92, %p93
    %p95 = scmp.ne.s32.totalorder %s87, %s90
    %p96 = scmp.eq.s32.totalorder %s9, 0
    %p97 = por %p95, %p96
    %p98 = scmp.ne.s32.totalorder %s87, %s90
    %p99 = scmp.eq.s32.totalorder %s14, 1
    %p100 = por %p98, %p99
    %p101 = scmp.ne.s32.totalorder %s90, %s91
    %p102 = scmp.eq.s32.totalorder %s14, 0
    %p103 = por %p101, %p102
    %p104 = scmp.ne.s32.totalorder %s90, %s91
    %p105 = scmp.eq.s32.totalorder %s15, 1
    %p106 = por %p104, %p105
    %p108 = scmp.ne.s32.totalorder %s91, %s107
    %p109 = scmp.eq.s32.totalorder %s15, 0
    %p110 = por %p108, %p109
    %p111 = scmp.le.s32.totalorder 1, %s9
    %p112 = scmp.lt.s32.totalorder %s9, 3
    %p113 = pnand %p111, %p112
    %p114 = pneg %p113
    // Predicated region
    $region9: #{atari_actor_critic_forward.4} parent=5 // pred_check
      _
    $region10: #{atari_actor_critic_forward.4} parent=5 // pred_check_branch
      %116 = sbr.rel (%p113) target = $region12
    $region11: #{atari_actor_critic_forward.4} parent=5 // pred_region
      %s117 = ssub.s32 %s9, 1
      // Predicated region
      $region13: #{atari_actor_critic_forward.4} parent=11 // pred_check
        %p118 = pneg %p56
      $region14: #{atari_actor_critic_forward.4} parent=11 // pred_check_branch
        %120 = sbr.rel (%p118) target = $region16
      $region15: #{atari_actor_critic_forward.4} parent=11 // pred_region
        _
      $region16: #{atari_actor_critic_forward.4} parent=11 // pred_fallthru
        _
      // Predicated region
      $region17: #{atari_actor_critic_forward.4} parent=11 // pred_check
        %p121 = pneg %p77
      $region18: #{atari_actor_critic_forward.4} parent=11 // pred_check_branch
        %123 = sbr.rel (%p121) target = $region20
      $region19: #{atari_actor_critic_forward.4} parent=11 // pred_region
        _
      $region20: #{atari_actor_critic_forward.4} parent=11 // pred_fallthru
        _
    $region12: #{atari_actor_critic_forward.4} parent=5 // pred_fallthru
      _
    %p124 = scmp.lt.s32.totalorder %s9, 2
    // Predicated region
    $region21: #{atari_actor_critic_forward.4} parent=5 // pred_check
      %p125 = pneg %p124
    $region22: #{atari_actor_critic_forward.4} parent=5 // pred_check_branch
      %127 = sbr.rel (%p125) target = $region24
    $region23: #{atari_actor_critic_forward.4} parent=5 // pred_region
      // Predicated region
      $region25: #{atari_actor_critic_forward.4} parent=23 // pred_check
        %p128 = pneg %p29
      $region26: #{atari_actor_critic_forward.4} parent=23 // pred_check_branch
        %130 = sbr.rel (%p128) target = $region28
      $region27: #{atari_actor_critic_forward.4} parent=23 // pred_region
        %p131 = scmp.lt.s32.totalorder %s9, 1
        %s132 = scalar_select %p131, %s9, 1
        %s133 = smul.addr %s132, 6
        %s134 = smul.addr %s133, 2
        %s135 = scalar_lea.vmem %s0, %s134
      $region28: #{atari_actor_critic_forward.4} parent=23 // pred_fallthru
        _
    $region24: #{atari_actor_critic_forward.4} parent=5 // pred_fallthru
      _
    %p136 = scmp.le.s32.totalorder 1, %s9
    %p137 = scmp.lt.s32.totalorder %s9, 3
    %p138 = pnand %p136, %p137
    %p139 = pneg %p138
    // Predicated region
    $region29: #{atari_actor_critic_forward.4} parent=5 // pred_check
      _
    $region30: #{atari_actor_critic_forward.4} parent=5 // pred_check_branch
      %141 = sbr.rel (%p138) target = $region32
    $region31: #{atari_actor_critic_forward.4} parent=5 // pred_region
      %s142 = ssub.s32 %s9, 1
      %p143 = scmp.lt.s32.totalorder %s14, 1
      %s144 = scalar_select %p143, %s14, 1
      %s145 = smul.addr %s144, 6
      %s146 = smul.addr %s145, 2
      %s147 = scalar_lea.vmem %s0, %s146
      %p148 = pneg %p35
      %p149 = pneg %p32
      %p150 = pneg %p56
      %p151 = pneg %p53
      %p152 = pneg %p77
      %p153 = pneg %p74
      %p154 = pneg %p103
      %p155 = pneg %p100
      %p156 = scmp.lt.s32.totalorder %s14, 1
      %s157 = scalar_select %p156, %s14, 1
      %s158 = smul.addr %s157, 5
      %s159 = smul.addr %s158, 4
      %s160 = scalar_lea.vmem %s3, %s159
      %p161 = scmp.lt.s32.totalorder %s14, 1
      %s162 = scalar_select %p161, %s14, 1
      %s163 = smul.addr %s162, 6
      %s164 = smul.addr %s163, 2
      %s165 = scalar_lea.vmem %s0, %s164
      %p166 = scmp.lt.s32.totalorder %s14, 1
      %s167 = scalar_select %p166, %s14, 1
      %s168 = smul.addr %s167, 5
      %s169 = smul.addr %s168, 4
      %s170 = scalar_lea.vmem %s3, %s169
      %v171 = vld [vmem:[%s165] sm:$0x3]
      %v172 = vld [vmem:[%s165 + $0x2] sm:$0x3]
      %v173 = vld [vmem:[%s165 + $0x4] sm:$0x3]
      %v174 = vld [vmem:[%s165 + $0x6] sm:$0x3]
      %v175 = vld [vmem:[%s165 + $0x8] sm:$0x3]
      %v176 = vld [vmem:[%s165 + $0xa] sm:$0x3]
      %v177 = vunpack.c.0.s8 %v171
      %v178 = vunpack.c.0.s8 %v172
      %v179 = vunpack.c.0.s8 %v173
      %v180 = vunpack.c.0.s8 %v174
      %v181 = vunpack.c.0.s8 %v175
      %v182 = vunpack.c.0.s8 %v176
      %v183 = vand.u32 %v177, 255
      %v184 = vand.u32 %v178, 255
      %v185 = vand.u32 %v179, 255
      %v186 = vand.u32 %v180, 255
      %v187 = vand.u32 %v181, 255
      %v188 = vand.u32 %v182, 255
      %v189 = vcvt.s32.f32 %v183
      %v190 = vcvt.s32.f32 %v184
      %v191 = vcvt.s32.f32 %v185
      %v192 = vcvt.s32.f32 %v186
      %v193 = vcvt.s32.f32 %v187
      %v194 = vcvt.s32.f32 %v188
      %v195 = vpack.c.bf16 %v189, %v189
      %v196 = vpack.c.bf16 %v190, %v190
      %v197 = vpack.c.bf16 %v191, %v191
      %v198 = vpack.c.bf16 %v192, %v192
      %v199 = vpack.c.bf16 %v193, %v193
      %v200 = vpack.c.bf16 %v194, %v194
      %v206 = vunpack.c.l.b16 %v195
      %v207 = vunpack.c.l.b16 %v196
      %v208 = vunpack.c.l.b16 %v197
      %v209 = vunpack.c.l.b16 %v198
      %v210 = vunpack.c.l.b16 %v199
      %v211 = vpack.c.b16 %v206, %v206
      %v212 = vpack.c.b16 %v207, %v207
      %v213 = vpack.c.b16 %v208, %v208
      %v214 = vpack.c.b16 %v209, %v209
      %v215 = vpack.c.b16 %v210, %v210
      %v217 = vshrl.u32 %v211, 16
      %v219 = vshll.u32 %v211, 16
      %v221 = vrot.slane %v219, 1
      %v222 = vor.u32 %v217, %v221
      %v224 = vshrl.u32 %v212, 16
      %v226 = vshll.u32 %v212, 16
      %v228 = vrot.slane %v226, 1
      %v229 = vor.u32 %v224, %v228
      %v231 = vshrl.u32 %v213, 16
      %v233 = vshll.u32 %v213, 16
      %v235 = vrot.slane %v233, 1
      %v236 = vor.u32 %v231, %v235
      %v238 = vshrl.u32 %v214, 16
      %v240 = vshll.u32 %v214, 16
      %v242 = vrot.slane %v240, 1
      %v243 = vor.u32 %v238, %v242
      %v245 = vshrl.u32 %v215, 16
      %v247 = vshll.u32 %v215, 16
      %v249 = vrot.slane %v247, 1
      %v250 = vor.u32 %v245, %v249
      %251 = vrot.lane.b32.xlu0 %v222, 64
      %v252 = vpop.permute.xlu0 %251
      %253 = vrot.lane.b32.xlu0 %v229, 64
      %v254 = vpop.permute.xlu0 %253
      %255 = vrot.lane.b32.xlu0 %v236, 64
      %v256 = vpop.permute.xlu0 %255
      %257 = vrot.lane.b32.xlu0 %v243, 64
      %v258 = vpop.permute.xlu0 %257
      %259 = vrot.lane.b32.xlu0 %v250, 64
      %v260 = vpop.permute.xlu0 %259
      %v262 = vunpack.c.l.b16 %v200
      %v263 = vpack.c.b16 %v262, %v262
      %v265 = vshrl.u32 %v263, 16
      %v267 = vshll.u32 %v263, 16
      %v269 = vrot.slane %v267, 1
      %v270 = vor.u32 %v265, %v269
      %271 = vrot.lane.b32.xlu0 %v270, 64
      %v272 = vpop.permute.xlu0 %271
      %vm273 = vcmask 523264
      %v276 = vsel %vm273, %v195, %v252
      %v279 = vsel %vm273, %v196, %v254
      %v282 = vsel %vm273, %v197, %v256
      %v285 = vsel %vm273, %v198, %v258
      %v288 = vsel %vm273, %v199, %v260
      %v291 = vsel %vm273, %v200, %v272
      %v297 = vrot.slane %v279, 7
      %v298 = vrot.slane %v282, 7
      %v299 = vrot.slane %v285, 7
      %v300 = vrot.slane %v288, 7
      %v301 = vrot.slane %v291, 7
      %vm302 = vcmask 1040384
      %v304 = vsel %vm302, %v276, %v297
      %vm306 = vcmask 1041409
      %v307 = vsel %vm306, %v276, %v297
      %v309 = vrot.slane %v307, 1
      %vm310 = vcmask 1042434
      %v311 = vsel %vm310, %v276, %v297
      %v313 = vrot.slane %v311, 2
      %v315 = vsel %vm302, %v279, %v298
      %v317 = vsel %vm306, %v279, %v298
      %v319 = vrot.slane %v317, 1
      %v320 = vsel %vm310, %v279, %v298
      %v322 = vrot.slane %v320, 2
      %v324 = vsel %vm302, %v282, %v299
      %v326 = vsel %vm306, %v282, %v299
      %v328 = vrot.slane %v326, 1
      %v329 = vsel %vm310, %v282, %v299
      %v331 = vrot.slane %v329, 2
      %v333 = vsel %vm302, %v285, %v300
      %v335 = vsel %vm306, %v285, %v300
      %v337 = vrot.slane %v335, 1
      %v338 = vsel %vm310, %v285, %v300
      %v340 = vrot.slane %v338, 2
      %v342 = vsel %vm302, %v288, %v301
      %v344 = vsel %vm306, %v288, %v301
      %v346 = vrot.slane %v344, 1
      %v347 = vsel %vm310, %v288, %v301
      %v349 = vrot.slane %v347, 2
      %v350 = vunpack.i.l.s16 %v304
      %v351 = vunpack.i.h.s16 %v304
      %v352 = vunpack.i.l.s16 %v309
      %v353 = vunpack.i.h.s16 %v309
      %v354 = vunpack.i.l.s16 %v313
      %v355 = vunpack.i.l.s16 %v315
      %v356 = vunpack.i.h.s16 %v315
      %v357 = vunpack.i.l.s16 %v319
      %v358 = vunpack.i.h.s16 %v319
      %v359 = vunpack.i.l.s16 %v322
      %v360 = vunpack.i.l.s16 %v324
      %v361 = vunpack.i.h.s16 %v324
      %v362 = vunpack.i.l.s16 %v328
      %v363 = vunpack.i.h.s16 %v328
      %v364 = vunpack.i.l.s16 %v331
      %v365 = vunpack.i.l.s16 %v333
      %v366 = vunpack.i.h.s16 %v333
      %v367 = vunpack.i.l.s16 %v337
      %v368 = vunpack.i.h.s16 %v337
      %v369 = vunpack.i.l.s16 %v340
      %v370 = vunpack.i.l.s16 %v342
      %v371 = vunpack.i.h.s16 %v342
      %v372 = vunpack.i.l.s16 %v346
      %v373 = vunpack.i.h.s16 %v346
      %v374 = vunpack.i.l.s16 %v349
      %v375 = vld [vmem:[%s1] sm:$0xf]
      %v376 = vld [vmem:[%s1 + $0x4] sm:$0xf]
      %v377 = vld [vmem:[%s1 + $0x8] sm:$0xf]
      %v378 = vld [vmem:[%s1 + $0xc] sm:$0xf]
      %v379 = vld [vmem:[%s1 + $0x10] sm:$0xf]
      %v380 = vld [vmem:[%s1 + $0x14] sm:$0xf]
      %v381 = vld [vmem:[%s1 + $0x18] sm:$0xf]
      %v382 = vld [vmem:[%s1 + $0x1c] sm:$0xf]
      %v383 = vld [vmem:[%s1 + $0x20] sm:$0xf]
      %v384 = vld [vmem:[%s1 + $0x24] sm:$0xf]
      %v385 = vld [vmem:[%s1 + $0x28] sm:$0xf]
      %v386 = vld [vmem:[%s1 + $0x2c] sm:$0xf]
      %v387 = vld [vmem:[%s1 + $0x30] sm:$0xf]
      %v388 = vld [vmem:[%s1 + $0x34] sm:$0xf]
      %v389 = vld [vmem:[%s1 + $0x38] sm:$0xf]
      %v390 = vld [vmem:[%s1 + $0x3c] sm:$0xf]
      %v391 = vld [vmem:[%s1 + $0x40] sm:$0xf]
      %v392 = vld [vmem:[%s1 + $0x44] sm:$0xf]
      %v393 = vld [vmem:[%s1 + $0x48] sm:$0xf]
      %v394 = vld [vmem:[%s1 + $0x4c] sm:$0xf]
      %v395 = vld [vmem:[%s1 + $0x50] sm:$0xf]
      %v396 = vld [vmem:[%s1 + $0x54] sm:$0xf]
      %v397 = vld [vmem:[%s1 + $0x58] sm:$0xf]
      %v398 = vld [vmem:[%s1 + $0x5c] sm:$0xf]
      %v399 = vld [vmem:[%s1 + $0x60] sm:$0xf]
      %v400 = vld [vmem:[%s1 + $0x64] sm:$0xf]
      %v401 = vld [vmem:[%s1 + $0x68] sm:$0xf]
      %v402 = vld [vmem:[%s1 + $0x6c] sm:$0xf]
      %v403 = vld [vmem:[%s1 + $0x70] sm:$0xf]
      %v404 = vld [vmem:[%s1 + $0x74] sm:$0xf]
      %v405 = vld [vmem:[%s1 + $0x78] sm:$0xf]
      %v406 = vld [vmem:[%s1 + $0x7c] sm:$0xf]
      %v407 = vpack.i.b16 %v351, %v350
      %v408 = vpack.i.b16 %v353, %v352
      %v409 = vpack.i.b16 %v355, %v354
      %v410 = vpack.i.b16 %v357, %v356
      %v411 = vpack.i.b16 %v359, %v358
      %v412 = vpack.i.b16 %v361, %v360
      %v413 = vpack.i.b16 %v363, %v362
      %v414 = vpack.i.b16 %v365, %v364
      %v415 = vpack.i.b16 %v367, %v366
      %v416 = vpack.i.b16 %v369, %v368
      %v417 = vpack.i.b16 %v371, %v370
      %v418 = vpack.i.b16 %v373, %v372
      %421 = vst [vmem:[#allocation1] ss:$9 sm:$0xff] %v407
      %s423 = scalar_lea.vmem [#allocation1], 1
      %424 = vst [vmem:[%s423] ss:$9 sm:$0xff] %v408
      %s426 = scalar_lea.vmem [#allocation1], 2
      %427 = vst [vmem:[%s426] ss:$9 sm:$0xff] %v409
      %s429 = scalar_lea.vmem [#allocation1], 3
      %430 = vst [vmem:[%s429] ss:$9 sm:$0xff] %v410
      %s432 = scalar_lea.vmem [#allocation1], 4
      %433 = vst [vmem:[%s432] ss:$9 sm:$0xff] %v411
      %s435 = scalar_lea.vmem [#allocation1], 5
      %436 = vst [vmem:[%s435] ss:$9 sm:$0xff] %v412
      %s438 = scalar_lea.vmem [#allocation1], 6
      %439 = vst [vmem:[%s438] ss:$9 sm:$0xff] %v413
      %s441 = scalar_lea.vmem [#allocation1], 7
      %442 = vst [vmem:[%s441] ss:$9 sm:$0xff] %v414
      %v443 = vld [vmem:[#allocation1] sm:$0xff]
      %v444 = vld [vmem:[#allocation1 + $0x9] sm:$0xff]
      %446 = vst [vmem:[#allocation1] ss:$9 sm:$0xff] %v415
      %448 = vst [vmem:[%s423] ss:$9 sm:$0xff] %v416
      %450 = vst [vmem:[%s426] ss:$9 sm:$0xff] %v417
      %452 = vst [vmem:[%s429] ss:$9 sm:$0xff] %v418
      %454 = vst [vmem:[%s432] ss:$9 sm:$0xff] %v374
      %v455 = vld [vmem:[#allocation1] sm:$0xff]
      %v456 = vld [vmem:[#allocation1 + $0x9] sm:$0xff]
      %v493 = vunpack.c.l.b16 %v375
      %v494 = vunpack.c.l.b16 %v376
      %v495 = vunpack.c.l.b16 %v377
      %v496 = vunpack.c.l.b16 %v378
      %v497 = vunpack.c.l.b16 %v379
      %v498 = vunpack.c.l.b16 %v380
      %v499 = vunpack.c.l.b16 %v381
      %v500 = vunpack.c.l.b16 %v382
      %v501 = vunpack.c.l.b16 %v383
      %v502 = vunpack.c.l.b16 %v384
      %v503 = vunpack.c.l.b16 %v385
      %v504 = vunpack.c.l.b16 %v386
      %v505 = vunpack.c.l.b16 %v387
      %v506 = vunpack.c.l.b16 %v388
      %v507 = vunpack.c.l.b16 %v389
      %v508 = vunpack.c.l.b16 %v390
      %v509 = vunpack.c.l.b16 %v391
      %v510 = vunpack.c.l.b16 %v392
      %v511 = vunpack.c.l.b16 %v393
      %v512 = vunpack.c.l.b16 %v394
      %v513 = vunpack.c.l.b16 %v395
      %v514 = vunpack.c.l.b16 %v396
      %v515 = vunpack.c.l.b16 %v397
      %v516 = vunpack.c.l.b16 %v398
      %v517 = vunpack.c.l.b16 %v399
      %v518 = vunpack.c.l.b16 %v400
      %v519 = vunpack.c.l.b16 %v401
      %v520 = vunpack.c.l.b16 %v402
      %v521 = vunpack.c.l.b16 %v403
      %v522 = vunpack.c.l.b16 %v404
      %v523 = vunpack.c.l.b16 %v405
      %v524 = vunpack.c.l.b16 %v406
      %v525 = vpack.c.b16 %v494, %v493
      %v526 = vpack.c.b16 %v496, %v495
      %v527 = vpack.c.b16 %v498, %v497
      %v528 = vpack.c.b16 %v500, %v499
      %v529 = vpack.c.b16 %v502, %v501
      %v530 = vpack.c.b16 %v504, %v503
      %v531 = vpack.c.b16 %v506, %v505
      %v532 = vpack.c.b16 %v508, %v507
      %v533 = vpack.c.b16 %v510, %v509
      %v534 = vpack.c.b16 %v512, %v511
      %v535 = vpack.c.b16 %v514, %v513
      %v536 = vpack.c.b16 %v516, %v515
      %v537 = vpack.c.b16 %v518, %v517
      %v538 = vpack.c.b16 %v520, %v519
      %v539 = vpack.c.b16 %v522, %v521
      %v540 = vpack.c.b16 %v524, %v523
      %557 = vmatpush.bf16.msra.mxu0 %v532
      %558 = vmatpush.bf16.msra.mxu0 %v531
      %559 = vmatpush.bf16.msra.mxu0 %v530
      %560 = vmatpush.bf16.msra.mxu0 %v529
      %561 = vmatpush.bf16.msra.mxu0 %v528
      %562 = vmatpush.bf16.msra.mxu0 %v527
      %563 = vmatpush.bf16.msra.mxu0 %v526
      %564 = vmatpush.bf16.msra.mxu0 %v525
      %565 = vmatmul.bf16.gmra.mxu0 %v443
      %v566 = vpop.f32.mrf.mxu0
      %v567 = vadd.f32 0.0, %v566
      %v568 = vpop.f32.mrf.mxu0
      %v569 = vadd.f32 0.0, %v568
      %570 = vmatmul.bf16.gmra.mxu0 %v455
      %v571 = vpop.f32.mrf.mxu0
      %v572 = vadd.f32 0.0, %v571
      %v573 = vpop.f32.mrf.mxu0
      %v574 = vadd.f32 0.0, %v573
      %575 = vdwg.mxu0
      %576 = vmatpush.bf16.msra.mxu0 %v540
      %577 = vmatpush.bf16.msra.mxu0 %v539
      %578 = vmatpush.bf16.msra.mxu0 %v538
      %579 = vmatpush.bf16.msra.mxu0 %v537
      %580 = vmatpush.bf16.msra.mxu0 %v536
      %581 = vmatpush.bf16.msra.mxu0 %v535
      %582 = vmatpush.bf16.msra.mxu0 %v534
      %583 = vmatpush.bf16.msra.mxu0 %v533
      %584 = vmatmul.bf16.gmra.mxu0 %v444
      %v585 = vpop.f32.mrf.mxu0
      %v586 = vadd.f32 %v567, %v585
      %v587 = vpop.f32.mrf.mxu0
      %v588 = vadd.f32 %v569, %v587
      %589 = vmatmul.bf16.gmra.mxu0 %v456
      %v590 = vpop.f32.mrf.mxu0
      %v591 = vadd.f32 %v572, %v590
      %v592 = vpop.f32.mrf.mxu0
      %v593 = vadd.f32 %v574, %v592
      %594 = vdwg.mxu0
      %v598 = vrot.slane %v586, 1
      %v599 = vrot.slane %v586, 2
      %v600 = vrot.slane %v586, 3
      %v601 = vrot.slane %v586, 4
      %v602 = vrot.slane %v586, 5
      %v603 = vrot.slane %v586, 6
      %v604 = vrot.slane %v586, 7
      %v605 = vrot.slane %v588, 1
      %v606 = vrot.slane %v588, 2
      %v607 = vrot.slane %v588, 3
      %v608 = vrot.slane %v588, 4
      %v609 = vrot.slane %v588, 5
      %v610 = vrot.slane %v588, 6
      %v611 = vrot.slane %v588, 7
      %v612 = vrot.slane %v591, 1
      %v613 = vrot.slane %v591, 2
      %v614 = vrot.slane %v591, 3
      %v615 = vrot.slane %v591, 4
      %v616 = vrot.slane %v591, 5
      %v617 = vrot.slane %v591, 6
      %v618 = vrot.slane %v591, 7
      %v640 = vld [vmem:[%s2] sm:$0x1f]
      %v641 = vld [vmem:[%s2 + $0x8] sm:$0x1f]
      %v642 = vld [vmem:[%s2 + $0x10] sm:$0x1f]
      %v643 = vld [vmem:[%s2 + $0x18] sm:$0x1f]
      %v644 = vld [vmem:[%s2 + $0x20] sm:$0x1f]
      %v650 = vrot.slane %v640, 1
      %v651 = vrot.slane %v640, 2
      %v652 = vrot.slane %v640, 3
      %v653 = vrot.slane %v640, 4
      %v654 = vrot.slane %v641, 1
      %v655 = vrot.slane %v641, 2
      %v656 = vrot.slane %v641, 3
      %v657 = vrot.slane %v641, 4
      %v658 = vrot.slane %v642, 1
      %v659 = vrot.slane %v642, 2
      %v660 = vrot.slane %v642, 3
      %v661 = vrot.slane %v642, 4
      %v662 = vrot.slane %v643, 1
      %v663 = vrot.slane %v643, 2
      %v664 = vrot.slane %v643, 3
      %v665 = vrot.slane %v643, 4
      %v666 = vrot.slane %v644, 1
      %v667 = vrot.slane %v644, 2
      %v668 = vrot.slane %v644, 3
      %v669 = vrot.slane %v644, 4
      %v690 = vadd.f32 %v586, %v640
      %v691 = vadd.f32 %v598, %v650
      %v692 = vadd.f32 %v599, %v651
      %v693 = vadd.f32 %v600, %v652
      %v694 = vadd.f32 %v601, %v653
      %v695 = vadd.f32 %v602, %v641
      %v696 = vadd.f32 %v603, %v654
      %v697 = vadd.f32 %v604, %v655
      %v698 = vadd.f32 %v588, %v656
      %v699 = vadd.f32 %v605, %v657
      %v700 = vadd.f32 %v606, %v642
      %v701 = vadd.f32 %v607, %v658
      %v702 = vadd.f32 %v608, %v659
      %v703 = vadd.f32 %v609, %v660
      %v704 = vadd.f32 %v610, %v661
      %v705 = vadd.f32 %v611, %v643
      %v706 = vadd.f32 %v591, %v662
      %v707 = vadd.f32 %v612, %v663
      %v708 = vadd.f32 %v613, %v664
      %v709 = vadd.f32 %v614, %v665
      %v710 = vadd.f32 %v615, %v644
      %v711 = vadd.f32 %v616, %v666
      %v712 = vadd.f32 %v617, %v667
      %v713 = vadd.f32 %v618, %v668
      %v714 = vadd.f32 %v593, %v669
      %v715 = vmax.f32 %v690, 0.0
      %v716 = vmax.f32 %v691, 0.0
      %v717 = vmax.f32 %v692, 0.0
      %v718 = vmax.f32 %v693, 0.0
      %v719 = vmax.f32 %v694, 0.0
      %v720 = vmax.f32 %v695, 0.0
      %v721 = vmax.f32 %v696, 0.0
      %v722 = vmax.f32 %v697, 0.0
      %v723 = vmax.f32 %v698, 0.0
      %v724 = vmax.f32 %v699, 0.0
      %v725 = vmax.f32 %v700, 0.0
      %v726 = vmax.f32 %v701, 0.0
      %v727 = vmax.f32 %v702, 0.0
      %v728 = vmax.f32 %v703, 0.0
      %v729 = vmax.f32 %v704, 0.0
      %v730 = vmax.f32 %v705, 0.0
      %v731 = vmax.f32 %v706, 0.0
      %v732 = vmax.f32 %v707, 0.0
      %v733 = vmax.f32 %v708, 0.0
      %v734 = vmax.f32 %v709, 0.0
      %v735 = vmax.f32 %v710, 0.0
      %v736 = vmax.f32 %v711, 0.0
      %v737 = vmax.f32 %v712, 0.0
      %v738 = vmax.f32 %v713, 0.0
      %v739 = vmax.f32 %v714, 0.0
      %765 = vst [vmem:[#allocation1] ss:$9 sm:$0xff] %v715
      %s766 = scalar_lea.vmem [#allocation1], 1
      %767 = vst [vmem:[%s766] ss:$9 sm:$0xff] %v716
      %s768 = scalar_lea.vmem [#allocation1], 2
      %769 = vst [vmem:[%s768] ss:$9 sm:$0xff] %v717
      %s770 = scalar_lea.vmem [#allocation1], 3
      %771 = vst [vmem:[%s770] ss:$9 sm:$0xff] %v718
      %s772 = scalar_lea.vmem [#allocation1], 4
      %773 = vst [vmem:[%s772] ss:$9 sm:$0xff] %v719
      %v774 = vld [vmem:[#allocation1] sm:$0xff]
      %775 = vst [vmem:[#allocation1] ss:$9 sm:$0xff] %v720
      %776 = vst [vmem:[%s766] ss:$9 sm:$0xff] %v721
      %777 = vst [vmem:[%s768] ss:$9 sm:$0xff] %v722
      %778 = vst [vmem:[%s770] ss:$9 sm:$0xff] %v723
      %779 = vst [vmem:[%s772] ss:$9 sm:$0xff] %v724
      %v780 = vld [vmem:[#allocation1] sm:$0xff]
      %781 = vst [vmem:[#allocation1] ss:$9 sm:$0xff] %v725
      %782 = vst [vmem:[%s766] ss:$9 sm:$0xff] %v726
      %783 = vst [vmem:[%s768] ss:$9 sm:$0xff] %v727
      %784 = vst [vmem:[%s770] ss:$9 sm:$0xff] %v728
      %785 = vst [vmem:[%s772] ss:$9 sm:$0xff] %v729
      %v786 = vld [vmem:[#allocation1] sm:$0xff]
      %787 = vst [vmem:[#allocation1] ss:$9 sm:$0xff] %v730
      %788 = vst [vmem:[%s766] ss:$9 sm:$0xff] %v731
      %789 = vst [vmem:[%s768] ss:$9 sm:$0xff] %v732
      %790 = vst [vmem:[%s770] ss:$9 sm:$0xff] %v733
      %791 = vst [vmem:[%s772] ss:$9 sm:$0xff] %v734
      %v792 = vld [vmem:[#allocation1] sm:$0xff]
      %793 = vst [vmem:[#allocation1] ss:$9 sm:$0xff] %v735
      %794 = vst [vmem:[%s766] ss:$9 sm:$0xff] %v736
      %795 = vst [vmem:[%s768] ss:$9 sm:$0xff] %v737
      %796 = vst [vmem:[%s770] ss:$9 sm:$0xff] %v738
      %797 = vst [vmem:[%s772] ss:$9 sm:$0xff] %v739
      %v798 = vld [vmem:[#allocation1] sm:$0xff]
      %v804 = vpack.c.bf16 %v774, %v774
      %v805 = vpack.c.bf16 %v780, %v780
      %v806 = vpack.c.bf16 %v786, %v786
      %v807 = vpack.c.bf16 %v792, %v792
      %v808 = vpack.c.bf16 %v798, %v798
      %vm809 = vcmask 256000
      %vm810 = vsmask.f32 2304
      %vm811 = vmand %vm809, %vm810
      %v812 = vld [vmem:[%s170] sm:$0x7]
      %v813 = vsel %vm811, %v804, %v812
      %814 = vst [vmem:[%s170] sm:$0x7] %v813
      %v815 = vld [vmem:[%s170 + $0x4] sm:$0x7]
      %v816 = vsel %vm811, %v805, %v815
      %817 = vst [vmem:[%s170 + $0x4] sm:$0x7] %v816
      %v818 = vld [vmem:[%s170 + $0x8] sm:$0x7]
      %v819 = vsel %vm811, %v806, %v818
      %820 = vst [vmem:[%s170 + $0x8] sm:$0x7] %v819
      %v821 = vld [vmem:[%s170 + $0xc] sm:$0x7]
      %v822 = vsel %vm811, %v807, %v821
      %823 = vst [vmem:[%s170 + $0xc] sm:$0x7] %v822
      %v824 = vld [vmem:[%s170 + $0x10] sm:$0x7]
      %v825 = vsel %vm811, %v808, %v824
      %826 = vst [vmem:[%s170 + $0x10] sm:$0x7] %v825
      %p827 = scmp.lt.s32.totalorder %s14, 1
      %s828 = scalar_select %p827, %s14, 1
      %s829 = smul.addr %s828, 5
      %s830 = smul.addr %s829, 4
      %s831 = scalar_lea.vmem %s3, %s830
      // Predicated region
      $region33: #{atari_actor_critic_forward.4} parent=31 // pred_check
        %p832 = pneg %p100
      $region34: #{atari_actor_critic_forward.4} parent=31 // pred_check_branch
        %834 = sbr.rel (%p832) target = $region36
      $region35: #{atari_actor_critic_forward.4} parent=31 // pred_region
        _
      $region36: #{atari_actor_critic_forward.4} parent=31 // pred_fallthru
        _
    $region32: #{atari_actor_critic_forward.4} parent=5 // pred_fallthru
      _
    %p835 = scmp.le.s32.totalorder 2, %s9
    // Predicated region
    $region37: #{atari_actor_critic_forward.4} parent=5 // pred_check
      %p836 = pneg %p835
    $region38: #{atari_actor_critic_forward.4} parent=5 // pred_check_branch
      %838 = sbr.rel (%p836) target = $region40
    $region39: #{atari_actor_critic_forward.4} parent=5 // pred_region
      %s839 = ssub.s32 %s9, 2
      // Predicated region
      $region41: #{atari_actor_critic_forward.4} parent=39 // pred_check
        %p840 = pneg %p106
      $region42: #{atari_actor_critic_forward.4} parent=39 // pred_check_branch
        %842 = sbr.rel (%p840) target = $region44
      $region43: #{atari_actor_critic_forward.4} parent=39 // pred_region
        %p843 = scmp.lt.s32.totalorder %s15, 1
        %s844 = scalar_select %p843, %s15, 1
        %s845 = smul.addr %s844, 5
        %s846 = smul.addr %s845, 4
        %s847 = scalar_lea.vmem %s3, %s846
      $region44: #{atari_actor_critic_forward.4} parent=39 // pred_fallthru
        _
    $region40: #{atari_actor_critic_forward.4} parent=5 // pred_fallthru
      _
  $region6: #{atari_actor_critic_forward.4} parent=0 // loop_footer
    %s13 = sadd.s32 1, %s9
  $region7: #{atari_actor_critic_forward.4} parent=0 // loop_footer_branch
    %8 = sbr.rel target = $region3
  $region8: #{atari_actor_critic_forward.4} parent=0 // loop_exit
    _

// kernel: atari_actor_critic_forward.5
$region0: #{atari_actor_critic_forward.5}
  #allocation0 [shape = 'u32[]', space=smem, size = 0x4, offset = 0x4, fixed_abs, tag = 'smem constant byte address 0x4 - core index']
  #allocation1 [shape = 'u32[72,128]{1,0:T(1,128)}', space=vmem, size = 0x9000, scoped, tag = 'internal scratch']
  %s0 = inlined_call_operand.vmem [shape: bf16[2,4,4,128], index: 0, kind: input, shape index: {}]
  %s1 = inlined_call_operand.vmem [shape: bf16[512,64], index: 1, kind: input, shape index: {}]
  %s2 = inlined_call_operand.vmem [shape: f32[1,1,1,64], index: 2, kind: input, shape index: {}]
  %s3 = inlined_call_operand.vmem [shape: bf16[2,3,3,64], index: 3, kind: output, shape index: {}]
  %s4 = sld [smem:[#allocation0]]
  $region45: #{atari_actor_critic_forward.5} parent=0
    _
  %s6 = ssub.s32 1, %s4
  %s7 = scalar_select 0, %s6, %s4
  loop: start=0, step=1, limit=4
  $region2: #{atari_actor_critic_forward.5} parent=0 // loop_pre_header
    _
  $region3: #{atari_actor_critic_forward.5} parent=0 // loop_header
    %s9 = sphi 0, %s13
    %p10 = scmp.ge.s32.totalorder %s9, 4
    %s19 = sphi 0, %s21
    %s22 = sphi 0, %s19
    %s23 = sphi 0, %s22
    %s39 = sphi 0, %s23
    %s43 = sphi 0, %s43
    %s45 = sphi 0, %s43
    %s46 = sphi 0, %s45
    %s60 = sphi 0, %s46
    %s64 = sphi 0, %s64
    %s66 = sphi 0, %s64
    %s67 = sphi 0, %s66
    %s81 = sphi 0, %s67
    %s87 = sphi 0, %s89
    %s90 = sphi 0, %s87
    %s91 = sphi 0, %s90
    %s107 = sphi 0, %s91
  $region4: #{atari_actor_critic_forward.5} parent=0 // loop_header_branch
    %12 = sbr.rel (%p10) target = $region8
  $region5: #{atari_actor_critic_forward.5} parent=0 // loop_body
    %s14 = ssub.s32 %s9, 1
    %s15 = ssub.s32 %s9, 2
    %s16 = sadd.s32 %s9, 1
    %s17 = ssub.s32 %s9, %s16
    %p18 = scmp.eq.s32.totalorder %s17, 0
    %s20 = sadd.s32 %s19, 1
    %s21 = scalar_select %p18, %s19, %s20
    %p24 = pneg %p18
    %p25 = scmp.eq.s32.totalorder %s9, 1
    %p26 = por %p24, %p25
    %p27 = scmp.ne.s32.totalorder %s19, %s22
    %p28 = scmp.eq.s32.totalorder %s9, 0
    %p29 = por %p27, %p28
    %p30 = scmp.ne.s32.totalorder %s19, %s22
    %p31 = scmp.eq.s32.totalorder %s14, 1
    %p32 = por %p30, %p31
    %p33 = scmp.ne.s32.totalorder %s22, %s23
    %p34 = scmp.eq.s32.totalorder %s14, 0
    %p35 = por %p33, %p34
    %p36 = scmp.ne.s32.totalorder %s22, %s23
    %p37 = scmp.eq.s32.totalorder %s15, 1
    %p38 = por %p36, %p37
    %p40 = scmp.ne.s32.totalorder %s23, %s39
    %p41 = scmp.eq.s32.totalorder %s15, 0
    %p42 = por %p40, %p41
    %s44 = sadd.s32 %s43, 1
    %p47 = scmp.eq.s32.totalorder %s9, 1
    %p48 = scmp.ne.s32.totalorder %s43, %s45
    %p49 = scmp.eq.s32.totalorder %s9, 0
    %p50 = por %p48, %p49
    %p51 = scmp.ne.s32.totalorder %s43, %s45
    %p52 = scmp.eq.s32.totalorder %s14, 1
    %p53 = por %p51, %p52
    %p54 = scmp.ne.s32.totalorder %s45, %s46
    %p55 = scmp.eq.s32.totalorder %s14, 0
    %p56 = por %p54, %p55
    %p57 = scmp.ne.s32.totalorder %s45, %s46
    %p58 = scmp.eq.s32.totalorder %s15, 1
    %p59 = por %p57, %p58
    %p61 = scmp.ne.s32.totalorder %s46, %s60
    %p62 = scmp.eq.s32.totalorder %s15, 0
    %p63 = por %p61, %p62
    %s65 = sadd.s32 %s64, 1
    %p68 = scmp.eq.s32.totalorder %s9, 1
    %p69 = scmp.ne.s32.totalorder %s64, %s66
    %p70 = scmp.eq.s32.totalorder %s9, 0
    %p71 = por %p69, %p70
    %p72 = scmp.ne.s32.totalorder %s64, %s66
    %p73 = scmp.eq.s32.totalorder %s14, 1
    %p74 = por %p72, %p73
    %p75 = scmp.ne.s32.totalorder %s66, %s67
    %p76 = scmp.eq.s32.totalorder %s14, 0
    %p77 = por %p75, %p76
    %p78 = scmp.ne.s32.totalorder %s66, %s67
    %p79 = scmp.eq.s32.totalorder %s15, 1
    %p80 = por %p78, %p79
    %p82 = scmp.ne.s32.totalorder %s67, %s81
    %p83 = scmp.eq.s32.totalorder %s15, 0
    %p84 = por %p82, %p83
    %s85 = ssub.s32 %s9, %s16
    %p86 = scmp.eq.s32.totalorder %s85, 0
    %s88 = sadd.s32 %s87, 1
    %s89 = scalar_select %p86, %s87, %s88
    %p92 = pneg %p86
    %p93 = scmp.eq.s32.totalorder %s9, 1
    %p94 = por %p92, %p93
    %p95 = scmp.ne.s32.totalorder %s87, %s90
    %p96 = scmp.eq.s32.totalorder %s9, 0
    %p97 = por %p95, %p96
    %p98 = scmp.ne.s32.totalorder %s87, %s90
    %p99 = scmp.eq.s32.totalorder %s14, 1
    %p100 = por %p98, %p99
    %p101 = scmp.ne.s32.totalorder %s90, %s91
    %p102 = scmp.eq.s32.totalorder %s14, 0
    %p103 = por %p101, %p102
    %p104 = scmp.ne.s32.totalorder %s90, %s91
    %p105 = scmp.eq.s32.totalorder %s15, 1
    %p106 = por %p104, %p105
    %p108 = scmp.ne.s32.totalorder %s91, %s107
    %p109 = scmp.eq.s32.totalorder %s15, 0
    %p110 = por %p108, %p109
    %p111 = scmp.le.s32.totalorder 1, %s9
    %p112 = scmp.lt.s32.totalorder %s9, 3
    %p113 = pnand %p111, %p112
    %p114 = pneg %p113
    // Predicated region
    $region9: #{atari_actor_critic_forward.5} parent=5 // pred_check
      _
    $region10: #{atari_actor_critic_forward.5} parent=5 // pred_check_branch
      %116 = sbr.rel (%p113) target = $region12
    $region11: #{atari_actor_critic_forward.5} parent=5 // pred_region
      %s117 = ssub.s32 %s9, 1
      // Predicated region
      $region13: #{atari_actor_critic_forward.5} parent=11 // pred_check
        %p118 = pneg %p56
      $region14: #{atari_actor_critic_forward.5} parent=11 // pred_check_branch
        %120 = sbr.rel (%p118) target = $region16
      $region15: #{atari_actor_critic_forward.5} parent=11 // pred_region
        _
      $region16: #{atari_actor_critic_forward.5} parent=11 // pred_fallthru
        _
      // Predicated region
      $region17: #{atari_actor_critic_forward.5} parent=11 // pred_check
        %p121 = pneg %p77
      $region18: #{atari_actor_critic_forward.5} parent=11 // pred_check_branch
        %123 = sbr.rel (%p121) target = $region20
      $region19: #{atari_actor_critic_forward.5} parent=11 // pred_region
        _
      $region20: #{atari_actor_critic_forward.5} parent=11 // pred_fallthru
        _
    $region12: #{atari_actor_critic_forward.5} parent=5 // pred_fallthru
      _
    %p124 = scmp.lt.s32.totalorder %s9, 2
    // Predicated region
    $region21: #{atari_actor_critic_forward.5} parent=5 // pred_check
      %p125 = pneg %p124
    $region22: #{atari_actor_critic_forward.5} parent=5 // pred_check_branch
      %127 = sbr.rel (%p125) target = $region24
    $region23: #{atari_actor_critic_forward.5} parent=5 // pred_region
      // Predicated region
      $region25: #{atari_actor_critic_forward.5} parent=23 // pred_check
        %p128 = pneg %p29
      $region26: #{atari_actor_critic_forward.5} parent=23 // pred_check_branch
        %130 = sbr.rel (%p128) target = $region28
      $region27: #{atari_actor_critic_forward.5} parent=23 // pred_region
        %p131 = scmp.lt.s32.totalorder %s9, 1
        %s132 = scalar_select %p131, %s9, 1
        %s133 = smul.addr %s132, 4
        %s134 = smul.addr %s133, 2
        %s135 = scalar_lea.vmem %s0, %s134
      $region28: #{atari_actor_critic_forward.5} parent=23 // pred_fallthru
        _
    $region24: #{atari_actor_critic_forward.5} parent=5 // pred_fallthru
      _
    %p136 = scmp.le.s32.totalorder 1, %s9
    %p137 = scmp.lt.s32.totalorder %s9, 3
    %p138 = pnand %p136, %p137
    %p139 = pneg %p138
    // Predicated region
    $region29: #{atari_actor_critic_forward.5} parent=5 // pred_check
      _
    $region30: #{atari_actor_critic_forward.5} parent=5 // pred_check_branch
      %141 = sbr.rel (%p138) target = $region32
    $region31: #{atari_actor_critic_forward.5} parent=5 // pred_region
      %s142 = ssub.s32 %s9, 1
      %p143 = scmp.lt.s32.totalorder %s14, 1
      %s144 = scalar_select %p143, %s14, 1
      %s145 = smul.addr %s144, 4
      %s146 = smul.addr %s145, 2
      %s147 = scalar_lea.vmem %s0, %s146
      %p148 = pneg %p35
      %p149 = pneg %p32
      %p150 = pneg %p56
      %p151 = pneg %p53
      %p152 = pneg %p77
      %p153 = pneg %p74
      %p154 = pneg %p103
      %p155 = pneg %p100
      %p156 = scmp.lt.s32.totalorder %s14, 1
      %s157 = scalar_select %p156, %s14, 1
      %s158 = smul.addr %s157, 3
      %s159 = smul.addr %s158, 2
      %s160 = scalar_lea.vmem %s3, %s159
      %p161 = scmp.lt.s32.totalorder %s14, 1
      %s162 = scalar_select %p161, %s14, 1
      %s163 = smul.addr %s162, 4
      %s164 = smul.addr %s163, 2
      %s165 = scalar_lea.vmem %s0, %s164
      %p166 = scmp.lt.s32.totalorder %s14, 1
      %s167 = scalar_select %p166, %s14, 1
      %s168 = smul.addr %s167, 3
      %s169 = smul.addr %s168, 2
      %s170 = scalar_lea.vmem %s3, %s169
      %v171 = vld [vmem:[%s165] sm:$0x3]
      %v172 = vld [vmem:[%s165 + $0x2] sm:$0x3]
      %v173 = vld [vmem:[%s165 + $0x4] sm:$0x3]
      %v174 = vld [vmem:[%s165 + $0x6] sm:$0x3]
      %176 = vst [vmem:[#allocation1] ss:$4 sm:$0xff] %v171
      %v177 = vld.sshfl [vmem:[#allocation1] sm:$0xff pattern:$0x73625140]
      %s179 = scalar_lea.vmem [#allocation1], 32
      %180 = vst [vmem:[%s179] ss:$4 sm:$0xff] %v172
      %v181 = vld.sshfl [vmem:[#allocation1 + $0x20] sm:$0xff pattern:$0x73625140]
      %183 = vst [vmem:[#allocation1] ss:$4 sm:$0xff] %v173
      %v184 = vld.sshfl [vmem:[#allocation1] sm:$0xff pattern:$0x73625140]
      %v185 = vshrl.u32 %v177, 16
      %v187 = vshll.u32 %v177, 16
      %v189 = vrot.slane %v187, 1
      %v190 = vor.u32 %v185, %v189
      %v191 = vshrl.u32 %v181, 16
      %v193 = vshll.u32 %v181, 16
      %v195 = vrot.slane %v193, 1
      %v196 = vor.u32 %v191, %v195
      %v197 = vshrl.u32 %v184, 16
      %v199 = vshll.u32 %v184, 16
      %v201 = vrot.slane %v199, 1
      %v202 = vor.u32 %v197, %v201
      %203 = vst [vmem:[#allocation1] ss:$4 sm:$0xff] %v172
      %v204 = vld.sshfl [vmem:[#allocation1] sm:$0xff pattern:$0x73625140]
      %s205 = scalar_lea.vmem [#allocation1], 32
      %206 = vst [vmem:[%s205] ss:$4 sm:$0xff] %v173
      %v207 = vld.sshfl [vmem:[#allocation1 + $0x20] sm:$0xff pattern:$0x73625140]
      %209 = vst [vmem:[#allocation1] ss:$4 sm:$0xff] %v174
      %v210 = vld.sshfl [vmem:[#allocation1] sm:$0xff pattern:$0x73625140]
      %v211 = vshrl.u32 %v204, 16
      %v213 = vshll.u32 %v204, 16
      %v215 = vrot.slane %v213, 1
      %v216 = vor.u32 %v211, %v215
      %v217 = vshrl.u32 %v207, 16
      %v219 = vshll.u32 %v207, 16
      %v221 = vrot.slane %v219, 1
      %v222 = vor.u32 %v217, %v221
      %v223 = vshrl.u32 %v210, 16
      %v225 = vshll.u32 %v210, 16
      %v227 = vrot.slane %v225, 1
      %v228 = vor.u32 %v223, %v227
      %v232 = vrot.slane %v190, 7
      %v233 = vrot.slane %v172, 6
      %v234 = vrot.slane %v216, 5
      %v235 = vrot.slane %v196, 7
      %v236 = vrot.slane %v173, 6
      %v237 = vrot.slane %v222, 5
      %v238 = vrot.slane %v202, 7
      %v239 = vrot.slane %v174, 6
      %v240 = vrot.slane %v228, 5
      %vm241 = vcmask 1040384
      %v243 = vsel %vm241, %v171, %v232
      %vm244 = vcmask 1042434
      %v247 = vsel %vm244, %v233, %v234
      %vm248 = vcmask 1041408
      %v249 = vsel %vm248, %v243, %v247
      %vm251 = vcmask 1041409
      %v252 = vsel %vm251, %v171, %v232
      %vm253 = vcmask 1043459
      %v254 = vsel %vm253, %v233, %v234
      %vm255 = vcmask 1042433
      %v256 = vsel %vm255, %v252, %v254
      %v258 = vrot.slane %v256, 1
      %v260 = vsel %vm241, %v172, %v235
      %v263 = vsel %vm244, %v236, %v237
      %v264 = vsel %vm248, %v260, %v263
      %v266 = vsel %vm251, %v172, %v235
      %v267 = vsel %vm253, %v236, %v237
      %v268 = vsel %vm255, %v266, %v267
      %v270 = vrot.slane %v268, 1
      %v272 = vsel %vm241, %v173, %v238
      %v275 = vsel %vm244, %v239, %v240
      %v276 = vsel %vm248, %v272, %v275
      %v278 = vsel %vm251, %v173, %v238
      %v279 = vsel %vm253, %v239, %v240
      %v280 = vsel %vm255, %v278, %v279
      %v282 = vrot.slane %v280, 1
      %v283 = vunpack.i.l.s16 %v249
      %v284 = vunpack.i.h.s16 %v249
      %v285 = vunpack.i.l.s16 %v258
      %v286 = vunpack.i.l.s16 %v264
      %v287 = vunpack.i.h.s16 %v264
      %v288 = vunpack.i.l.s16 %v270
      %v289 = vunpack.i.l.s16 %v276
      %v290 = vunpack.i.h.s16 %v276
      %v291 = vunpack.i.l.s16 %v282
      %v292 = vld [vmem:[%s1] sm:$0xf]
      %v293 = vld [vmem:[%s1 + $0x4] sm:$0xf]
      %v294 = vld [vmem:[%s1 + $0x8] sm:$0xf]
      %v295 = vld [vmem:[%s1 + $0xc] sm:$0xf]
      %v296 = vld [vmem:[%s1 + $0x10] sm:$0xf]
      %v297 = vld [vmem:[%s1 + $0x14] sm:$0xf]
      %v298 = vld [vmem:[%s1 + $0x18] sm:$0xf]
      %v299 = vld [vmem:[%s1 + $0x1c] sm:$0xf]
      %v300 = vld [vmem:[%s1 + $0x20] sm:$0xf]
      %v301 = vld [vmem:[%s1 + $0x24] sm:$0xf]
      %v302 = vld [vmem:[%s1 + $0x28] sm:$0xf]
      %v303 = vld [vmem:[%s1 + $0x2c] sm:$0xf]
      %v304 = vld [vmem:[%s1 + $0x30] sm:$0xf]
      %v305 = vld [vmem:[%s1 + $0x34] sm:$0xf]
      %v306 = vld [vmem:[%s1 + $0x38] sm:$0xf]
      %v307 = vld [vmem:[%s1 + $0x3c] sm:$0xf]
      %v308 = vld [vmem:[%s1 + $0x40] sm:$0xf]
      %v309 = vld [vmem:[%s1 + $0x44] sm:$0xf]
      %v310 = vld [vmem:[%s1 + $0x48] sm:$0xf]
      %v311 = vld [vmem:[%s1 + $0x4c] sm:$0xf]
      %v312 = vld [vmem:[%s1 + $0x50] sm:$0xf]
      %v313 = vld [vmem:[%s1 + $0x54] sm:$0xf]
      %v314 = vld [vmem:[%s1 + $0x58] sm:$0xf]
      %v315 = vld [vmem:[%s1 + $0x5c] sm:$0xf]
      %v316 = vld [vmem:[%s1 + $0x60] sm:$0xf]
      %v317 = vld [vmem:[%s1 + $0x64] sm:$0xf]
      %v318 = vld [vmem:[%s1 + $0x68] sm:$0xf]
      %v319 = vld [vmem:[%s1 + $0x6c] sm:$0xf]
      %v320 = vld [vmem:[%s1 + $0x70] sm:$0xf]
      %v321 = vld [vmem:[%s1 + $0x74] sm:$0xf]
      %v322 = vld [vmem:[%s1 + $0x78] sm:$0xf]
      %v323 = vld [vmem:[%s1 + $0x7c] sm:$0xf]
      %v324 = vld [vmem:[%s1 + $0x80] sm:$0xf]
      %v325 = vld [vmem:[%s1 + $0x84] sm:$0xf]
      %v326 = vld [vmem:[%s1 + $0x88] sm:$0xf]
      %v327 = vld [vmem:[%s1 + $0x8c] sm:$0xf]
      %v328 = vld [vmem:[%s1 + $0x90] sm:$0xf]
      %v329 = vld [vmem:[%s1 + $0x94] sm:$0xf]
      %v330 = vld [vmem:[%s1 + $0x98] sm:$0xf]
      %v331 = vld [vmem:[%s1 + $0x9c] sm:$0xf]
      %v332 = vld [vmem:[%s1 + $0xa0] sm:$0xf]
      %v333 = vld [vmem:[%s1 + $0xa4] sm:$0xf]
      %v334 = vld [vmem:[%s1 + $0xa8] sm:$0xf]
      %v335 = vld [vmem:[%s1 + $0xac] sm:$0xf]
      %v336 = vld [vmem:[%s1 + $0xb0] sm:$0xf]
      %v337 = vld [vmem:[%s1 + $0xb4] sm:$0xf]
      %v338 = vld [vmem:[%s1 + $0xb8] sm:$0xf]
      %v339 = vld [vmem:[%s1 + $0xbc] sm:$0xf]
      %v340 = vld [vmem:[%s1 + $0xc0] sm:$0xf]
      %v341 = vld [vmem:[%s1 + $0xc4] sm:$0xf]
      %v342 = vld [vmem:[%s1 + $0xc8] sm:$0xf]
      %v343 = vld [vmem:[%s1 + $0xcc] sm:$0xf]
      %v344 = vld [vmem:[%s1 + $0xd0] sm:$0xf]
      %v345 = vld [vmem:[%s1 + $0xd4] sm:$0xf]
      %v346 = vld [vmem:[%s1 + $0xd8] sm:$0xf]
      %v347 = vld [vmem:[%s1 + $0xdc] sm:$0xf]
      %v348 = vld [vmem:[%s1 + $0xe0] sm:$0xf]
      %v349 = vld [vmem:[%s1 + $0xe4] sm:$0xf]
      %v350 = vld [vmem:[%s1 + $0xe8] sm:$0xf]
      %v351 = vld [vmem:[%s1 + $0xec] sm:$0xf]
      %v352 = vld [vmem:[%s1 + $0xf0] sm:$0xf]
      %v353 = vld [vmem:[%s1 + $0xf4] sm:$0xf]
      %v354 = vld [vmem:[%s1 + $0xf8] sm:$0xf]
      %v355 = vld [vmem:[%s1 + $0xfc] sm:$0xf]
      %v356 = vpack.i.b16 %v284, %v283
      %v357 = vpack.i.b16 %v286, %v285
      %v358 = vpack.i.b16 %v288, %v287
      %v359 = vpack.i.b16 %v290, %v289
      %362 = vst [vmem:[#allocation1] ss:$9 sm:$0xff] %v356
      %s364 = scalar_lea.vmem [#allocation1], 1
      %365 = vst [vmem:[%s364] ss:$9 sm:$0xff] %v357
      %s367 = scalar_lea.vmem [#allocation1], 2
      %368 = vst [vmem:[%s367] ss:$9 sm:$0xff] %v358
      %s370 = scalar_lea.vmem [#allocation1], 3
      %371 = vst [vmem:[%s370] ss:$9 sm:$0xff] %v359
      %s373 = scalar_lea.vmem [#allocation1], 4
      %374 = vst [vmem:[%s373] ss:$9 sm:$0xff] %v291
      %v375 = vld [vmem:[#allocation1] sm:$0xff]
      %v376 = vld [vmem:[#allocation1 + $0x9] sm:$0xff]
      %v377 = vld [vmem:[#allocation1 + $0x12] sm:$0xff]
      %v378 = vld [vmem:[#allocation1 + $0x1b] sm:$0xff]
      %v447 = vunpack.c.l.b16 %v292
      %v448 = vunpack.c.l.b16 %v293
      %v449 = vunpack.c.l.b16 %v294
      %v450 = vunpack.c.l.b16 %v295
      %v451 = vunpack.c.l.b16 %v296
      %v452 = vunpack.c.l.b16 %v297
      %v453 = vunpack.c.l.b16 %v298
      %v454 = vunpack.c.l.b16 %v299
      %v455 = vunpack.c.l.b16 %v300
      %v456 = vunpack.c.l.b16 %v301
      %v457 = vunpack.c.l.b16 %v302
      %v458 = vunpack.c.l.b16 %v303
      %v459 = vunpack.c.l.b16 %v304
      %v460 = vunpack.c.l.b16 %v305
      %v461 = vunpack.c.l.b16 %v306
      %v462 = vunpack.c.l.b16 %v307
      %v463 = vunpack.c.l.b16 %v308
      %v464 = vunpack.c.l.b16 %v309
      %v465 = vunpack.c.l.b16 %v310
      %v466 = vunpack.c.l.b16 %v311
      %v467 = vunpack.c.l.b16 %v312
      %v468 = vunpack.c.l.b16 %v313
      %v469 = vunpack.c.l.b16 %v314
      %v470 = vunpack.c.l.b16 %v315
      %v471 = vunpack.c.l.b16 %v316
      %v472 = vunpack.c.l.b16 %v317
      %v473 = vunpack.c.l.b16 %v318
      %v474 = vunpack.c.l.b16 %v319
      %v475 = vunpack.c.l.b16 %v320
      %v476 = vunpack.c.l.b16 %v321
      %v477 = vunpack.c.l.b16 %v322
      %v478 = vunpack.c.l.b16 %v323
      %v479 = vunpack.c.l.b16 %v324
      %v480 = vunpack.c.l.b16 %v325
      %v481 = vunpack.c.l.b16 %v326
      %v482 = vunpack.c.l.b16 %v327
      %v483 = vunpack.c.l.b16 %v328
      %v484 = vunpack.c.l.b16 %v329
      %v485 = vunpack.c.l.b16 %v330
      %v486 = vunpack.c.l.b16 %v331
      %v487 = vunpack.c.l.b16 %v332
      %v488 = vunpack.c.l.b16 %v333
      %v489 = vunpack.c.l.b16 %v334
      %v490 = vunpack.c.l.b16 %v335
      %v491 = vunpack.c.l.b16 %v336
      %v492 = vunpack.c.l.b16 %v337
      %v493 = vunpack.c.l.b16 %v338
      %v494 = vunpack.c.l.b16 %v339
      %v495 = vunpack.c.l.b16 %v340
      %v496 = vunpack.c.l.b16 %v341
      %v497 = vunpack.c.l.b16 %v342
      %v498 = vunpack.c.l.b16 %v343
      %v499 = vunpack.c.l.b16 %v344
      %v500 = vunpack.c.l.b16 %v345
      %v501 = vunpack.c.l.b16 %v346
      %v502 = vunpack.c.l.b16 %v347
      %v503 = vunpack.c.l.b16 %v348
      %v504 = vunpack.c.l.b16 %v349
      %v505 = vunpack.c.l.b16 %v350
      %v506 = vunpack.c.l.b16 %v351
      %v507 = vunpack.c.l.b16 %v352
      %v508 = vunpack.c.l.b16 %v353
      %v509 = vunpack.c.l.b16 %v354
      %v510 = vunpack.c.l.b16 %v355
      %v511 = vpack.c.b16 %v448, %v447
      %v512 = vpack.c.b16 %v450, %v449
      %v513 = vpack.c.b16 %v452, %v451
      %v514 = vpack.c.b16 %v454, %v453
      %v515 = vpack.c.b16 %v456, %v455
      %v516 = vpack.c.b16 %v458, %v457
      %v517 = vpack.c.b16 %v460, %v459
      %v518 = vpack.c.b16 %v462, %v461
      %v519 = vpack.c.b16 %v464, %v463
      %v520 = vpack.c.b16 %v466, %v465
      %v521 = vpack.c.b16 %v468, %v467
      %v522 = vpack.c.b16 %v470, %v469
      %v523 = vpack.c.b16 %v472, %v471
      %v524 = vpack.c.b16 %v474, %v473
      %v525 = vpack.c.b16 %v476, %v475
      %v526 = vpack.c.b16 %v478, %v477
      %v527 = vpack.c.b16 %v480, %v479
      %v528 = vpack.c.b16 %v482, %v481
      %v529 = vpack.c.b16 %v484, %v483
      %v530 = vpack.c.b16 %v486, %v485
      %v531 = vpack.c.b16 %v488, %v487
      %v532 = vpack.c.b16 %v490, %v489
      %v533 = vpack.c.b16 %v492, %v491
      %v534 = vpack.c.b16 %v494, %v493
      %v535 = vpack.c.b16 %v496, %v495
      %v536 = vpack.c.b16 %v498, %v497
      %v537 = vpack.c.b16 %v500, %v499
      %v538 = vpack.c.b16 %v502, %v501
      %v539 = vpack.c.b16 %v504, %v503
      %v540 = vpack.c.b16 %v506, %v505
      %v541 = vpack.c.b16 %v508, %v507
      %v542 = vpack.c.b16 %v510, %v509
      %575 = vmatpush.bf16.msra.mxu0 %v518
      %576 = vmatpush.bf16.msra.mxu0 %v517
      %577 = vmatpush.bf16.msra.mxu0 %v516
      %578 = vmatpush.bf16.msra.mxu0 %v515
      %579 = vmatpush.bf16.msra.mxu0 %v514
      %580 = vmatpush.bf16.msra.mxu0 %v513
      %581 = vmatpush.bf16.msra.mxu0 %v512
      %582 = vmatpush.bf16.msra.mxu0 %v511
      %583 = vmatmul.bf16.gmra.mxu0 %v375
      %v584 = vpop.f32.mrf.mxu0
      %v585 = vadd.f32 0.0, %v584
      %v586 = vpop.f32.mrf.mxu0
      %v587 = vadd.f32 0.0, %v586
      %588 = vdwg.mxu0
      %589 = vmatpush.bf16.msra.mxu0 %v526
      %590 = vmatpush.bf16.msra.mxu0 %v525
      %591 = vmatpush.bf16.msra.mxu0 %v524
      %592 = vmatpush.bf16.msra.mxu0 %v523
      %593 = vmatpush.bf16.msra.mxu0 %v522
      %594 = vmatpush.bf16.msra.mxu0 %v521
      %595 = vmatpush.bf16.msra.mxu0 %v520
      %596 = vmatpush.bf16.msra.mxu0 %v519
      %597 = vmatmul.bf16.gmra.mxu0 %v376
      %v598 = vpop.f32.mrf.mxu0
      %v599 = vadd.f32 %v585, %v598
      %v600 = vpop.f32.mrf.mxu0
      %v601 = vadd.f32 %v587, %v600
      %602 = vdwg.mxu0
      %603 = vmatpush.bf16.msra.mxu0 %v534
      %604 = vmatpush.bf16.msra.mxu0 %v533
      %605 = vmatpush.bf16.msra.mxu0 %v532
      %606 = vmatpush.bf16.msra.mxu0 %v531
      %607 = vmatpush.bf16.msra.mxu0 %v530
      %608 = vmatpush.bf16.msra.mxu0 %v529
      %609 = vmatpush.bf16.msra.mxu0 %v528
      %610 = vmatpush.bf16.msra.mxu0 %v527
      %611 = vmatmul.bf16.gmra.mxu0 %v377
      %v612 = vpop.f32.mrf.mxu0
      %v613 = vadd.f32 %v599, %v612
      %v614 = vpop.f32.mrf.mxu0
      %v615 = vadd.f32 %v601, %v614
      %616 = vdwg.mxu0
      %617 = vmatpush.bf16.msra.mxu0 %v542
      %618 = vmatpush.bf16.msra.mxu0 %v541
      %619 = vmatpush.bf16.msra.mxu0 %v540
      %620 = vmatpush.bf16.msra.mxu0 %v539
      %621 = vmatpush.bf16.msra.mxu0 %v538
      %622 = vmatpush.bf16.msra.mxu0 %v537
      %623 = vmatpush.bf16.msra.mxu0 %v536
      %624 = vmatpush.bf16.msra.mxu0 %v535
      %625 = vmatmul.bf16.gmra.mxu0 %v378
      %v626 = vpop.f32.mrf.mxu0
      %v627 = vadd.f32 %v613, %v626
      %v628 = vpop.f32.mrf.mxu0
      %v629 = vadd.f32 %v615, %v628
      %630 = vdwg.mxu0
      %v632 = vrot.slane %v627, 1
      %v633 = vrot.slane %v627, 2
      %v634 = vrot.slane %v627, 3
      %v635 = vrot.slane %v627, 4
      %v636 = vrot.slane %v627, 5
      %v637 = vrot.slane %v627, 6
      %v638 = vrot.slane %v627, 7
      %v646 = vld [vmem:[%s2] sm:$0x1]
      %v648 = vperm.slane %v646, 0
      %v650 = vrot.slane %v648, 1
      %v651 = vrot.slane %v648, 2
      %v654 = vadd.f32 %v627, %v648
      %v655 = vadd.f32 %v632, %v650
      %v656 = vadd.f32 %v633, %v651
      %v657 = vadd.f32 %v634, %v648
      %v658 = vadd.f32 %v635, %v650
      %v659 = vadd.f32 %v636, %v651
      %v660 = vadd.f32 %v637, %v648
      %v661 = vadd.f32 %v638, %v650
      %v662 = vadd.f32 %v629, %v651
      %v663 = vmax.f32 %v654, 0.0
      %v664 = vmax.f32 %v655, 0.0
      %v665 = vmax.f32 %v656, 0.0
      %v666 = vmax.f32 %v657, 0.0
      %v667 = vmax.f32 %v658, 0.0
      %v668 = vmax.f32 %v659, 0.0
      %v669 = vmax.f32 %v660, 0.0
      %v670 = vmax.f32 %v661, 0.0
      %v671 = vmax.f32 %v662, 0.0
      %681 = vst [vmem:[#allocation1] ss:$9 sm:$0xff] %v663
      %s682 = scalar_lea.vmem [#allocation1], 1
      %683 = vst [vmem:[%s682] ss:$9 sm:$0xff] %v664
      %s684 = scalar_lea.vmem [#allocation1], 2
      %685 = vst [vmem:[%s684] ss:$9 sm:$0xff] %v665
      %v686 = vld [vmem:[#allocation1] sm:$0xff]
      %687 = vst [vmem:[#allocation1] ss:$9 sm:$0xff] %v666
      %688 = vst [vmem:[%s682] ss:$9 sm:$0xff] %v667
      %689 = vst [vmem:[%s684] ss:$9 sm:$0xff] %v668
      %v690 = vld [vmem:[#allocation1] sm:$0xff]
      %691 = vst [vmem:[#allocation1] ss:$9 sm:$0xff] %v669
      %692 = vst [vmem:[%s682] ss:$9 sm:$0xff] %v670
      %693 = vst [vmem:[%s684] ss:$9 sm:$0xff] %v671
      %v694 = vld [vmem:[#allocation1] sm:$0xff]
      %v698 = vpack.c.bf16 %v686, %v686
      %v699 = vpack.c.bf16 %v690, %v690
      %v700 = vpack.c.bf16 %v694, %v694
      %vm701 = vcmask 517120
      %vm702 = vsmask.f32 1280
      %vm703 = vmand %vm701, %vm702
      %v704 = vld [vmem:[%s170] sm:$0x3]
      %v705 = vsel %vm703, %v698, %v704
      %706 = vst [vmem:[%s170] sm:$0x3] %v705
      %v707 = vld [vmem:[%s170 + $0x2] sm:$0x3]
      %v708 = vsel %vm703, %v699, %v707
      %709 = vst [vmem:[%s170 + $0x2] sm:$0x3] %v708
      %v710 = vld [vmem:[%s170 + $0x4] sm:$0x3]
      %v711 = vsel %vm703, %v700, %v710
      %712 = vst [vmem:[%s170 + $0x4] sm:$0x3] %v711
      %p713 = scmp.lt.s32.totalorder %s14, 1
      %s714 = scalar_select %p713, %s14, 1
      %s715 = smul.addr %s714, 3
      %s716 = smul.addr %s715, 2
      %s717 = scalar_lea.vmem %s3, %s716
      // Predicated region
      $region33: #{atari_actor_critic_forward.5} parent=31 // pred_check
        %p718 = pneg %p100
      $region34: #{atari_actor_critic_forward.5} parent=31 // pred_check_branch
        %720 = sbr.rel (%p718) target = $region36
      $region35: #{atari_actor_critic_forward.5} parent=31 // pred_region
        _
      $region36: #{atari_actor_critic_forward.5} parent=31 // pred_fallthru
        _
    $region32: #{atari_actor_critic_forward.5} parent=5 // pred_fallthru
      _
    %p721 = scmp.le.s32.totalorder 2, %s9
    // Predicated region
    $region37: #{atari_actor_critic_forward.5} parent=5 // pred_check
      %p722 = pneg %p721
    $region38: #{atari_actor_critic_forward.5} parent=5 // pred_check_branch
      %724 = sbr.rel (%p722) target = $region40
    $region39: #{atari_actor_critic_forward.5} parent=5 // pred_region
      %s725 = ssub.s32 %s9, 2
      // Predicated region
      $region41: #{atari_actor_critic_forward.5} parent=39 // pred_check
        %p726 = pneg %p106
      $region42: #{atari_actor_critic_forward.5} parent=39 // pred_check_branch
        %728 = sbr.rel (%p726) target = $region44
      $region43: #{atari_actor_critic_forward.5} parent=39 // pred_region
        %p729 = scmp.lt.s32.totalorder %s15, 1
        %s730 = scalar_select %p729, %s15, 1
        %s731 = smul.addr %s730, 3
        %s732 = smul.addr %s731, 2
        %s733 = scalar_lea.vmem %s3, %s732
      $region44: #{atari_actor_critic_forward.5} parent=39 // pred_fallthru
        _
    $region40: #{atari_actor_critic_forward.5} parent=5 // pred_fallthru
      _
  $region6: #{atari_actor_critic_forward.5} parent=0 // loop_footer
    %s13 = sadd.s32 1, %s9
  $region7: #{atari_actor_critic_forward.5} parent=0 // loop_footer_branch
    %8 = sbr.rel target = $region3
  $region8: #{atari_actor_critic_forward.5} parent=0 // loop_exit
    _

// kernel: atari_actor_critic_forward.6
$region0: #{atari_actor_critic_forward.6}
  #allocation0 [shape = 'u32[]', space=smem, size = 0x4, offset = 0x4, fixed_abs, tag = 'smem constant byte address 0x4 - core index']
  #allocation1 [shape = 'u32[72,128]{1,0:T(1,128)}', space=vmem, size = 0x9000, scoped, tag = 'internal scratch']
  %s0 = inlined_call_operand.vmem [shape: bf16[2,5,5,64], index: 0, kind: input, shape index: {}]
  %s1 = inlined_call_operand.vmem [shape: bf16[576,64], index: 1, kind: input, shape index: {}]
  %s2 = inlined_call_operand.vmem [shape: f32[1,1,1,64], index: 2, kind: input, shape index: {}]
  %s3 = inlined_call_operand.vmem [shape: bf16[2,3,3,64], index: 3, kind: output, shape index: {}]
  %s4 = sld [smem:[#allocation0]]
  $region45: #{atari_actor_critic_forward.6} parent=0
    _
  %s6 = ssub.s32 1, %s4
  %s7 = scalar_select 0, %s6, %s4
  loop: start=0, step=1, limit=4
  $region2: #{atari_actor_critic_forward.6} parent=0 // loop_pre_header
    _
  $region3: #{atari_actor_critic_forward.6} parent=0 // loop_header
    %s9 = sphi 0, %s13
    %p10 = scmp.ge.s32.totalorder %s9, 4
    %s19 = sphi 0, %s21
    %s22 = sphi 0, %s19
    %s23 = sphi 0, %s22
    %s39 = sphi 0, %s23
    %s43 = sphi 0, %s43
    %s45 = sphi 0, %s43
    %s46 = sphi 0, %s45
    %s60 = sphi 0, %s46
    %s64 = sphi 0, %s64
    %s66 = sphi 0, %s64
    %s67 = sphi 0, %s66
    %s81 = sphi 0, %s67
    %s87 = sphi 0, %s89
    %s90 = sphi 0, %s87
    %s91 = sphi 0, %s90
    %s107 = sphi 0, %s91
  $region4: #{atari_actor_critic_forward.6} parent=0 // loop_header_branch
    %12 = sbr.rel (%p10) target = $region8
  $region5: #{atari_actor_critic_forward.6} parent=0 // loop_body
    %s14 = ssub.s32 %s9, 1
    %s15 = ssub.s32 %s9, 2
    %s16 = sadd.s32 %s9, 1
    %s17 = ssub.s32 %s9, %s16
    %p18 = scmp.eq.s32.totalorder %s17, 0
    %s20 = sadd.s32 %s19, 1
    %s21 = scalar_select %p18, %s19, %s20
    %p24 = pneg %p18
    %p25 = scmp.eq.s32.totalorder %s9, 1
    %p26 = por %p24, %p25
    %p27 = scmp.ne.s32.totalorder %s19, %s22
    %p28 = scmp.eq.s32.totalorder %s9, 0
    %p29 = por %p27, %p28
    %p30 = scmp.ne.s32.totalorder %s19, %s22
    %p31 = scmp.eq.s32.totalorder %s14, 1
    %p32 = por %p30, %p31
    %p33 = scmp.ne.s32.totalorder %s22, %s23
    %p34 = scmp.eq.s32.totalorder %s14, 0
    %p35 = por %p33, %p34
    %p36 = scmp.ne.s32.totalorder %s22, %s23
    %p37 = scmp.eq.s32.totalorder %s15, 1
    %p38 = por %p36, %p37
    %p40 = scmp.ne.s32.totalorder %s23, %s39
    %p41 = scmp.eq.s32.totalorder %s15, 0
    %p42 = por %p40, %p41
    %s44 = sadd.s32 %s43, 1
    %p47 = scmp.eq.s32.totalorder %s9, 1
    %p48 = scmp.ne.s32.totalorder %s43, %s45
    %p49 = scmp.eq.s32.totalorder %s9, 0
    %p50 = por %p48, %p49
    %p51 = scmp.ne.s32.totalorder %s43, %s45
    %p52 = scmp.eq.s32.totalorder %s14, 1
    %p53 = por %p51, %p52
    %p54 = scmp.ne.s32.totalorder %s45, %s46
    %p55 = scmp.eq.s32.totalorder %s14, 0
    %p56 = por %p54, %p55
    %p57 = scmp.ne.s32.totalorder %s45, %s46
    %p58 = scmp.eq.s32.totalorder %s15, 1
    %p59 = por %p57, %p58
    %p61 = scmp.ne.s32.totalorder %s46, %s60
    %p62 = scmp.eq.s32.totalorder %s15, 0
    %p63 = por %p61, %p62
    %s65 = sadd.s32 %s64, 1
    %p68 = scmp.eq.s32.totalorder %s9, 1
    %p69 = scmp.ne.s32.totalorder %s64, %s66
    %p70 = scmp.eq.s32.totalorder %s9, 0
    %p71 = por %p69, %p70
    %p72 = scmp.ne.s32.totalorder %s64, %s66
    %p73 = scmp.eq.s32.totalorder %s14, 1
    %p74 = por %p72, %p73
    %p75 = scmp.ne.s32.totalorder %s66, %s67
    %p76 = scmp.eq.s32.totalorder %s14, 0
    %p77 = por %p75, %p76
    %p78 = scmp.ne.s32.totalorder %s66, %s67
    %p79 = scmp.eq.s32.totalorder %s15, 1
    %p80 = por %p78, %p79
    %p82 = scmp.ne.s32.totalorder %s67, %s81
    %p83 = scmp.eq.s32.totalorder %s15, 0
    %p84 = por %p82, %p83
    %s85 = ssub.s32 %s9, %s16
    %p86 = scmp.eq.s32.totalorder %s85, 0
    %s88 = sadd.s32 %s87, 1
    %s89 = scalar_select %p86, %s87, %s88
    %p92 = pneg %p86
    %p93 = scmp.eq.s32.totalorder %s9, 1
    %p94 = por %p92, %p93
    %p95 = scmp.ne.s32.totalorder %s87, %s90
    %p96 = scmp.eq.s32.totalorder %s9, 0
    %p97 = por %p95, %p96
    %p98 = scmp.ne.s32.totalorder %s87, %s90
    %p99 = scmp.eq.s32.totalorder %s14, 1
    %p100 = por %p98, %p99
    %p101 = scmp.ne.s32.totalorder %s90, %s91
    %p102 = scmp.eq.s32.totalorder %s14, 0
    %p103 = por %p101, %p102
    %p104 = scmp.ne.s32.totalorder %s90, %s91
    %p105 = scmp.eq.s32.totalorder %s15, 1
    %p106 = por %p104, %p105
    %p108 = scmp.ne.s32.totalorder %s91, %s107
    %p109 = scmp.eq.s32.totalorder %s15, 0
    %p110 = por %p108, %p109
    %p111 = scmp.le.s32.totalorder 1, %s9
    %p112 = scmp.lt.s32.totalorder %s9, 3
    %p113 = pnand %p111, %p112
    %p114 = pneg %p113
    // Predicated region
    $region9: #{atari_actor_critic_forward.6} parent=5 // pred_check
      _
    $region10: #{atari_actor_critic_forward.6} parent=5 // pred_check_branch
      %116 = sbr.rel (%p113) target = $region12
    $region11: #{atari_actor_critic_forward.6} parent=5 // pred_region
      %s117 = ssub.s32 %s9, 1
      // Predicated region
      $region13: #{atari_actor_critic_forward.6} parent=11 // pred_check
        %p118 = pneg %p56
      $region14: #{atari_actor_critic_forward.6} parent=11 // pred_check_branch
        %120 = sbr.rel (%p118) target = $region16
      $region15: #{atari_actor_critic_forward.6} parent=11 // pred_region
        _
      $region16: #{atari_actor_critic_forward.6} parent=11 // pred_fallthru
        _
      // Predicated region
      $region17: #{atari_actor_critic_forward.6} parent=11 // pred_check
        %p121 = pneg %p77
      $region18: #{atari_actor_critic_forward.6} parent=11 // pred_check_branch
        %123 = sbr.rel (%p121) target = $region20
      $region19: #{atari_actor_critic_forward.6} parent=11 // pred_region
        _
      $region20: #{atari_actor_critic_forward.6} parent=11 // pred_fallthru
        _
    $region12: #{atari_actor_critic_forward.6} parent=5 // pred_fallthru
      _
    %p124 = scmp.lt.s32.totalorder %s9, 2
    // Predicated region
    $region21: #{atari_actor_critic_forward.6} parent=5 // pred_check
      %p125 = pneg %p124
    $region22: #{atari_actor_critic_forward.6} parent=5 // pred_check_branch
      %127 = sbr.rel (%p125) target = $region24
    $region23: #{atari_actor_critic_forward.6} parent=5 // pred_region
      // Predicated region
      $region25: #{atari_actor_critic_forward.6} parent=23 // pred_check
        %p128 = pneg %p29
      $region26: #{atari_actor_critic_forward.6} parent=23 // pred_check_branch
        %130 = sbr.rel (%p128) target = $region28
      $region27: #{atari_actor_critic_forward.6} parent=23 // pred_region
        %p131 = scmp.lt.s32.totalorder %s9, 1
        %s132 = scalar_select %p131, %s9, 1
        %s133 = smul.addr %s132, 5
        %s134 = smul.addr %s133, 4
        %s135 = scalar_lea.vmem %s0, %s134
      $region28: #{atari_actor_critic_forward.6} parent=23 // pred_fallthru
        _
    $region24: #{atari_actor_critic_forward.6} parent=5 // pred_fallthru
      _
    %p136 = scmp.le.s32.totalorder 1, %s9
    %p137 = scmp.lt.s32.totalorder %s9, 3
    %p138 = pnand %p136, %p137
    %p139 = pneg %p138
    // Predicated region
    $region29: #{atari_actor_critic_forward.6} parent=5 // pred_check
      _
    $region30: #{atari_actor_critic_forward.6} parent=5 // pred_check_branch
      %141 = sbr.rel (%p138) target = $region32
    $region31: #{atari_actor_critic_forward.6} parent=5 // pred_region
      %s142 = ssub.s32 %s9, 1
      %p143 = scmp.lt.s32.totalorder %s14, 1
      %s144 = scalar_select %p143, %s14, 1
      %s145 = smul.addr %s144, 5
      %s146 = smul.addr %s145, 4
      %s147 = scalar_lea.vmem %s0, %s146
      %p148 = pneg %p35
      %p149 = pneg %p32
      %p150 = pneg %p56
      %p151 = pneg %p53
      %p152 = pneg %p77
      %p153 = pneg %p74
      %p154 = pneg %p103
      %p155 = pneg %p100
      %p156 = scmp.lt.s32.totalorder %s14, 1
      %s157 = scalar_select %p156, %s14, 1
      %s158 = smul.addr %s157, 3
      %s159 = smul.addr %s158, 2
      %s160 = scalar_lea.vmem %s3, %s159
      %p161 = scmp.lt.s32.totalorder %s14, 1
      %s162 = scalar_select %p161, %s14, 1
      %s163 = smul.addr %s162, 5
      %s164 = smul.addr %s163, 4
      %s165 = scalar_lea.vmem %s0, %s164
      %p166 = scmp.lt.s32.totalorder %s14, 1
      %s167 = scalar_select %p166, %s14, 1
      %s168 = smul.addr %s167, 3
      %s169 = smul.addr %s168, 2
      %s170 = scalar_lea.vmem %s3, %s169
      %v172 = vld [vmem:[%s165] sm:$0x7]
      %v173 = vld [vmem:[%s165 + $0x4] sm:$0x7]
      %v174 = vld [vmem:[%s165 + $0x8] sm:$0x7]
      %v175 = vld [vmem:[%s165 + $0xc] sm:$0x7]
      %v176 = vld [vmem:[%s165 + $0x10] sm:$0x7]
      %v180 = vunpack.c.l.b16 %v172
      %v181 = vunpack.c.l.b16 %v173
      %v182 = vunpack.c.l.b16 %v174
      %v183 = vpack.c.b16 %v180, %v180
      %v184 = vpack.c.b16 %v181, %v181
      %v185 = vpack.c.b16 %v182, %v182
      %v187 = vshrl.u32 %v183, 16
      %v189 = vshll.u32 %v183, 16
      %v191 = vrot.slane %v189, 1
      %v192 = vor.u32 %v187, %v191
      %v194 = vshrl.u32 %v184, 16
      %v196 = vshll.u32 %v184, 16
      %v198 = vrot.slane %v196, 1
      %v199 = vor.u32 %v194, %v198
      %v201 = vshrl.u32 %v185, 16
      %v203 = vshll.u32 %v185, 16
      %v205 = vrot.slane %v203, 1
      %v206 = vor.u32 %v201, %v205
      %207 = vrot.lane.b32.xlu0 %v192, 64
      %v208 = vpop.permute.xlu0 %207
      %209 = vrot.lane.b32.xlu0 %v199, 64
      %v210 = vpop.permute.xlu0 %209
      %211 = vrot.lane.b32.xlu0 %v206, 64
      %v212 = vpop.permute.xlu0 %211
      %v213 = vrot.slane %v183, 1
      %v214 = vrot.slane %v184, 1
      %v215 = vrot.slane %v185, 1
      %v217 = vunpack.c.l.b16 %v175
      %v218 = vpack.c.b16 %v217, %v217
      %219 = vrot.lane.b32.xlu0 %v184, 64
      %v220 = vpop.permute.xlu0 %219
      %221 = vrot.lane.b32.xlu0 %v185, 64
      %v222 = vpop.permute.xlu0 %221
      %223 = vrot.lane.b32.xlu0 %v218, 64
      %v224 = vpop.permute.xlu0 %223
      %v226 = vshrl.u32 %v218, 16
      %v228 = vshll.u32 %v218, 16
      %v230 = vrot.slane %v228, 1
      %v231 = vor.u32 %v226, %v230
      %v232 = vrot.slane %v218, 1
      %233 = vrot.lane.b32.xlu0 %v214, 64
      %v234 = vpop.permute.xlu0 %233
      %235 = vrot.lane.b32.xlu0 %v215, 64
      %v236 = vpop.permute.xlu0 %235
      %237 = vrot.lane.b32.xlu0 %v232, 64
      %v238 = vpop.permute.xlu0 %237
      %v240 = vunpack.c.l.b16 %v176
      %v241 = vpack.c.b16 %v240, %v240
      %v243 = vshrl.u32 %v241, 16
      %v245 = vshll.u32 %v241, 16
      %v247 = vrot.slane %v245, 1
      %v248 = vor.u32 %v243, %v247
      %249 = vrot.lane.b32.xlu0 %v231, 64
      %v250 = vpop.permute.xlu0 %249
      %251 = vrot.lane.b32.xlu0 %v248, 64
      %v252 = vpop.permute.xlu0 %251
      %v253 = vrot.slane %v241, 1
      %vm254 = vcmask 523264
      %v257 = vsel %vm254, %v172, %v208
      %v260 = vsel %vm254, %v173, %v210
      %v263 = vsel %vm254, %v174, %v212
      %v266 = vsel %vm254, %v213, %v220
      %v269 = vsel %vm254, %v214, %v222
      %v272 = vsel %vm254, %v215, %v224
      %v275 = vsel %vm254, %v199, %v234
      %v278 = vsel %vm254, %v206, %v236
      %v281 = vsel %vm254, %v231, %v238
      %v284 = vsel %vm254, %v175, %v250
      %v287 = vsel %vm254, %v176, %v252
      %v297 = vrot.slane %v266, 7
      %v298 = vrot.slane %v275, 6
      %v299 = vrot.slane %v263, 5
      %v300 = vrot.slane %v215, 4
      %v301 = vrot.slane %v269, 7
      %v302 = vrot.slane %v278, 6
      %v303 = vrot.slane %v284, 5
      %v304 = vrot.slane %v232, 4
      %v305 = vrot.slane %v272, 7
      %v306 = vrot.slane %v281, 6
      %v307 = vrot.slane %v287, 5
      %v308 = vrot.slane %v253, 4
      %vm309 = vcmask 1040384
      %v311 = vsel %vm309, %v257, %v297
      %vm312 = vcmask 1041408
      %v314 = vsel %vm312, %v311, %v298
      %vm315 = vcmask 1043459
      %v318 = vsel %vm315, %v299, %v300
      %vm319 = vcmask 1042432
      %v320 = vsel %vm319, %v314, %v318
      %vm322 = vcmask 1041409
      %v323 = vsel %vm322, %v257, %v297
      %vm324 = vcmask 1042433
      %v325 = vsel %vm324, %v323, %v298
      %vm326 = vcmask 1044484
      %v327 = vsel %vm326, %v299, %v300
      %vm328 = vcmask 1043457
      %v329 = vsel %vm328, %v325, %v327
      %v331 = vrot.slane %v329, 1
      %v333 = vsel %vm309, %v260, %v301
      %v335 = vsel %vm312, %v333, %v302
      %v338 = vsel %vm315, %v303, %v304
      %v339 = vsel %vm319, %v335, %v338
      %v341 = vsel %vm322, %v260, %v301
      %v342 = vsel %vm324, %v341, %v302
      %v343 = vsel %vm326, %v303, %v304
      %v344 = vsel %vm328, %v342, %v343
      %v346 = vrot.slane %v344, 1
      %v348 = vsel %vm309, %v263, %v305
      %v350 = vsel %vm312, %v348, %v306
      %v353 = vsel %vm315, %v307, %v308
      %v354 = vsel %vm319, %v350, %v353
      %v356 = vsel %vm322, %v263, %v305
      %v357 = vsel %vm324, %v356, %v306
      %v358 = vsel %vm326, %v307, %v308
      %v359 = vsel %vm328, %v357, %v358
      %v361 = vrot.slane %v359, 1
      %v362 = vunpack.i.l.s16 %v320
      %v363 = vunpack.i.h.s16 %v320
      %v364 = vunpack.i.l.s16 %v331
      %v365 = vunpack.i.l.s16 %v339
      %v366 = vunpack.i.h.s16 %v339
      %v367 = vunpack.i.l.s16 %v346
      %v368 = vunpack.i.l.s16 %v354
      %v369 = vunpack.i.h.s16 %v354
      %v370 = vunpack.i.l.s16 %v361
      %v371 = vld [vmem:[%s1] sm:$0xf]
      %v372 = vld [vmem:[%s1 + $0x4] sm:$0xf]
      %v373 = vld [vmem:[%s1 + $0x8] sm:$0xf]
      %v374 = vld [vmem:[%s1 + $0xc] sm:$0xf]
      %v375 = vld [vmem:[%s1 + $0x10] sm:$0xf]
      %v376 = vld [vmem:[%s1 + $0x14] sm:$0xf]
      %v377 = vld [vmem:[%s1 + $0x18] sm:$0xf]
      %v378 = vld [vmem:[%s1 + $0x1c] sm:$0xf]
      %v379 = vld [vmem:[%s1 + $0x20] sm:$0xf]
      %v380 = vld [vmem:[%s1 + $0x24] sm:$0xf]
      %v381 = vld [vmem:[%s1 + $0x28] sm:$0xf]
      %v382 = vld [vmem:[%s1 + $0x2c] sm:$0xf]
      %v383 = vld [vmem:[%s1 + $0x30] sm:$0xf]
      %v384 = vld [vmem:[%s1 + $0x34] sm:$0xf]
      %v385 = vld [vmem:[%s1 + $0x38] sm:$0xf]
      %v386 = vld [vmem:[%s1 + $0x3c] sm:$0xf]
      %v387 = vld [vmem:[%s1 + $0x40] sm:$0xf]
      %v388 = vld [vmem:[%s1 + $0x44] sm:$0xf]
      %v389 = vld [vmem:[%s1 + $0x48] sm:$0xf]
      %v390 = vld [vmem:[%s1 + $0x4c] sm:$0xf]
      %v391 = vld [vmem:[%s1 + $0x50] sm:$0xf]
      %v392 = vld [vmem:[%s1 + $0x54] sm:$0xf]
      %v393 = vld [vmem:[%s1 + $0x58] sm:$0xf]
      %v394 = vld [vmem:[%s1 + $0x5c] sm:$0xf]
      %v395 = vld [vmem:[%s1 + $0x60] sm:$0xf]
      %v396 = vld [vmem:[%s1 + $0x64] sm:$0xf]
      %v397 = vld [vmem:[%s1 + $0x68] sm:$0xf]
      %v398 = vld [vmem:[%s1 + $0x6c] sm:$0xf]
      %v399 = vld [vmem:[%s1 + $0x70] sm:$0xf]
      %v400 = vld [vmem:[%s1 + $0x74] sm:$0xf]
      %v401 = vld [vmem:[%s1 + $0x78] sm:$0xf]
      %v402 = vld [vmem:[%s1 + $0x7c] sm:$0xf]
      %v403 = vld [vmem:[%s1 + $0x80] sm:$0xf]
      %v404 = vld [vmem:[%s1 + $0x84] sm:$0xf]
      %v405 = vld [vmem:[%s1 + $0x88] sm:$0xf]
      %v406 = vld [vmem:[%s1 + $0x8c] sm:$0xf]
      %v407 = vld [vmem:[%s1 + $0x90] sm:$0xf]
      %v408 = vld [vmem:[%s1 + $0x94] sm:$0xf]
      %v409 = vld [vmem:[%s1 + $0x98] sm:$0xf]
      %v410 = vld [vmem:[%s1 + $0x9c] sm:$0xf]
      %v411 = vld [vmem:[%s1 + $0xa0] sm:$0xf]
      %v412 = vld [vmem:[%s1 + $0xa4] sm:$0xf]
      %v413 = vld [vmem:[%s1 + $0xa8] sm:$0xf]
      %v414 = vld [vmem:[%s1 + $0xac] sm:$0xf]
      %v415 = vld [vmem:[%s1 + $0xb0] sm:$0xf]
      %v416 = vld [vmem:[%s1 + $0xb4] sm:$0xf]
      %v417 = vld [vmem:[%s1 + $0xb8] sm:$0xf]
      %v418 = vld [vmem:[%s1 + $0xbc] sm:$0xf]
      %v419 = vld [vmem:[%s1 + $0xc0] sm:$0xf]
      %v420 = vld [vmem:[%s1 + $0xc4] sm:$0xf]
      %v421 = vld [vmem:[%s1 + $0xc8] sm:$0xf]
      %v422 = vld [vmem:[%s1 + $0xcc] sm:$0xf]
      %v423 = vld [vmem:[%s1 + $0xd0] sm:$0xf]
      %v424 = vld [vmem:[%s1 + $0xd4] sm:$0xf]
      %v425 = vld [vmem:[%s1 + $0xd8] sm:$0xf]
      %v426 = vld [vmem:[%s1 + $0xdc] sm:$0xf]
      %v427 = vld [vmem:[%s1 + $0xe0] sm:$0xf]
      %v428 = vld [vmem:[%s1 + $0xe4] sm:$0xf]
      %v429 = vld [vmem:[%s1 + $0xe8] sm:$0xf]
      %v430 = vld [vmem:[%s1 + $0xec] sm:$0xf]
      %v431 = vld [vmem:[%s1 + $0xf0] sm:$0xf]
      %v432 = vld [vmem:[%s1 + $0xf4] sm:$0xf]
      %v433 = vld [vmem:[%s1 + $0xf8] sm:$0xf]
      %v434 = vld [vmem:[%s1 + $0xfc] sm:$0xf]
      %v435 = vld [vmem:[%s1 + $0x100] sm:$0xf]
      %v436 = vld [vmem:[%s1 + $0x104] sm:$0xf]
      %v437 = vld [vmem:[%s1 + $0x108] sm:$0xf]
      %v438 = vld [vmem:[%s1 + $0x10c] sm:$0xf]
      %v439 = vld [vmem:[%s1 + $0x110] sm:$0xf]
      %v440 = vld [vmem:[%s1 + $0x114] sm:$0xf]
      %v441 = vld [vmem:[%s1 + $0x118] sm:$0xf]
      %v442 = vld [vmem:[%s1 + $0x11c] sm:$0xf]
      %v443 = vpack.i.b16 %v363, %v362
      %v444 = vpack.i.b16 %v365, %v364
      %v445 = vpack.i.b16 %v367, %v366
      %v446 = vpack.i.b16 %v369, %v368
      %449 = vst [vmem:[#allocation1] ss:$9 sm:$0xff] %v443
      %s451 = scalar_lea.vmem [#allocation1], 1
      %452 = vst [vmem:[%s451] ss:$9 sm:$0xff] %v444
      %s454 = scalar_lea.vmem [#allocation1], 2
      %455 = vst [vmem:[%s454] ss:$9 sm:$0xff] %v445
      %s457 = scalar_lea.vmem [#allocation1], 3
      %458 = vst [vmem:[%s457] ss:$9 sm:$0xff] %v446
      %s460 = scalar_lea.vmem [#allocation1], 4
      %461 = vst [vmem:[%s460] ss:$9 sm:$0xff] %v370
      %v462 = vld [vmem:[#allocation1] sm:$0xff]
      %v463 = vld [vmem:[#allocation1 + $0x9] sm:$0xff]
      %v464 = vld [vmem:[#allocation1 + $0x12] sm:$0xff]
      %v465 = vld [vmem:[#allocation1 + $0x1b] sm:$0xff]
      %v466 = vld [vmem:[#allocation1 + $0x24] sm:$0xff]
      %v543 = vunpack.c.l.b16 %v371
      %v544 = vunpack.c.l.b16 %v372
      %v545 = vunpack.c.l.b16 %v373
      %v546 = vunpack.c.l.b16 %v374
      %v547 = vunpack.c.l.b16 %v375
      %v548 = vunpack.c.l.b16 %v376
      %v549 = vunpack.c.l.b16 %v377
      %v550 = vunpack.c.l.b16 %v378
      %v551 = vunpack.c.l.b16 %v379
      %v552 = vunpack.c.l.b16 %v380
      %v553 = vunpack.c.l.b16 %v381
      %v554 = vunpack.c.l.b16 %v382
      %v555 = vunpack.c.l.b16 %v383
      %v556 = vunpack.c.l.b16 %v384
      %v557 = vunpack.c.l.b16 %v385
      %v558 = vunpack.c.l.b16 %v386
      %v559 = vunpack.c.l.b16 %v387
      %v560 = vunpack.c.l.b16 %v388
      %v561 = vunpack.c.l.b16 %v389
      %v562 = vunpack.c.l.b16 %v390
      %v563 = vunpack.c.l.b16 %v391
      %v564 = vunpack.c.l.b16 %v392
      %v565 = vunpack.c.l.b16 %v393
      %v566 = vunpack.c.l.b16 %v394
      %v567 = vunpack.c.l.b16 %v395
      %v568 = vunpack.c.l.b16 %v396
      %v569 = vunpack.c.l.b16 %v397
      %v570 = vunpack.c.l.b16 %v398
      %v571 = vunpack.c.l.b16 %v399
      %v572 = vunpack.c.l.b16 %v400
      %v573 = vunpack.c.l.b16 %v401
      %v574 = vunpack.c.l.b16 %v402
      %v575 = vunpack.c.l.b16 %v403
      %v576 = vunpack.c.l.b16 %v404
      %v577 = vunpack.c.l.b16 %v405
      %v578 = vunpack.c.l.b16 %v406
      %v579 = vunpack.c.l.b16 %v407
      %v580 = vunpack.c.l.b16 %v408
      %v581 = vunpack.c.l.b16 %v409
      %v582 = vunpack.c.l.b16 %v410
      %v583 = vunpack.c.l.b16 %v411
      %v584 = vunpack.c.l.b16 %v412
      %v585 = vunpack.c.l.b16 %v413
      %v586 = vunpack.c.l.b16 %v414
      %v587 = vunpack.c.l.b16 %v415
      %v588 = vunpack.c.l.b16 %v416
      %v589 = vunpack.c.l.b16 %v417
      %v590 = vunpack.c.l.b16 %v418
      %v591 = vunpack.c.l.b16 %v419
      %v592 = vunpack.c.l.b16 %v420
      %v593 = vunpack.c.l.b16 %v421
      %v594 = vunpack.c.l.b16 %v422
      %v595 = vunpack.c.l.b16 %v423
      %v596 = vunpack.c.l.b16 %v424
      %v597 = vunpack.c.l.b16 %v425
      %v598 = vunpack.c.l.b16 %v426
      %v599 = vunpack.c.l.b16 %v427
      %v600 = vunpack.c.l.b16 %v428
      %v601 = vunpack.c.l.b16 %v429
      %v602 = vunpack.c.l.b16 %v430
      %v603 = vunpack.c.l.b16 %v431
      %v604 = vunpack.c.l.b16 %v432
      %v605 = vunpack.c.l.b16 %v433
      %v606 = vunpack.c.l.b16 %v434
      %v607 = vunpack.c.l.b16 %v435
      %v608 = vunpack.c.l.b16 %v436
      %v609 = vunpack.c.l.b16 %v437
      %v610 = vunpack.c.l.b16 %v438
      %v611 = vunpack.c.l.b16 %v439
      %v612 = vunpack.c.l.b16 %v440
      %v613 = vunpack.c.l.b16 %v441
      %v614 = vunpack.c.l.b16 %v442
      %v615 = vpack.c.b16 %v544, %v543
      %v616 = vpack.c.b16 %v546, %v545
      %v617 = vpack.c.b16 %v548, %v547
      %v618 = vpack.c.b16 %v550, %v549
      %v619 = vpack.c.b16 %v552, %v551
      %v620 = vpack.c.b16 %v554, %v553
      %v621 = vpack.c.b16 %v556, %v555
      %v622 = vpack.c.b16 %v558, %v557
      %v623 = vpack.c.b16 %v560, %v559
      %v624 = vpack.c.b16 %v562, %v561
      %v625 = vpack.c.b16 %v564, %v563
      %v626 = vpack.c.b16 %v566, %v565
      %v627 = vpack.c.b16 %v568, %v567
      %v628 = vpack.c.b16 %v570, %v569
      %v629 = vpack.c.b16 %v572, %v571
      %v630 = vpack.c.b16 %v574, %v573
      %v631 = vpack.c.b16 %v576, %v575
      %v632 = vpack.c.b16 %v578, %v577
      %v633 = vpack.c.b16 %v580, %v579
      %v634 = vpack.c.b16 %v582, %v581
      %v635 = vpack.c.b16 %v584, %v583
      %v636 = vpack.c.b16 %v586, %v585
      %v637 = vpack.c.b16 %v588, %v587
      %v638 = vpack.c.b16 %v590, %v589
      %v639 = vpack.c.b16 %v592, %v591
      %v640 = vpack.c.b16 %v594, %v593
      %v641 = vpack.c.b16 %v596, %v595
      %v642 = vpack.c.b16 %v598, %v597
      %v643 = vpack.c.b16 %v600, %v599
      %v644 = vpack.c.b16 %v602, %v601
      %v645 = vpack.c.b16 %v604, %v603
      %v646 = vpack.c.b16 %v606, %v605
      %v647 = vpack.c.b16 %v608, %v607
      %v648 = vpack.c.b16 %v610, %v609
      %v649 = vpack.c.b16 %v612, %v611
      %v650 = vpack.c.b16 %v614, %v613
      %v687 = vsel %vm254, %v466, 0
      %689 = vmatpush.bf16.msra.mxu0 %v622
      %690 = vmatpush.bf16.msra.mxu0 %v621
      %691 = vmatpush.bf16.msra.mxu0 %v620
      %692 = vmatpush.bf16.msra.mxu0 %v619
      %693 = vmatpush.bf16.msra.mxu0 %v618
      %694 = vmatpush.bf16.msra.mxu0 %v617
      %695 = vmatpush.bf16.msra.mxu0 %v616
      %696 = vmatpush.bf16.msra.mxu0 %v615
      %697 = vmatmul.bf16.gmra.mxu0 %v462
      %v698 = vpop.f32.mrf.mxu0
      %v699 = vadd.f32 0.0, %v698
      %v700 = vpop.f32.mrf.mxu0
      %v701 = vadd.f32 0.0, %v700
      %702 = vdwg.mxu0
      %703 = vmatpush.bf16.msra.mxu0 %v630
      %704 = vmatpush.bf16.msra.mxu0 %v629
      %705 = vmatpush.bf16.msra.mxu0 %v628
      %706 = vmatpush.bf16.msra.mxu0 %v627
      %707 = vmatpush.bf16.msra.mxu0 %v626
      %708 = vmatpush.bf16.msra.mxu0 %v625
      %709 = vmatpush.bf16.msra.mxu0 %v624
      %710 = vmatpush.bf16.msra.mxu0 %v623
      %711 = vmatmul.bf16.gmra.mxu0 %v463
      %v712 = vpop.f32.mrf.mxu0
      %v713 = vadd.f32 %v699, %v712
      %v714 = vpop.f32.mrf.mxu0
      %v715 = vadd.f32 %v701, %v714
      %716 = vdwg.mxu0
      %717 = vmatpush.bf16.msra.mxu0 %v638
      %718 = vmatpush.bf16.msra.mxu0 %v637
      %719 = vmatpush.bf16.msra.mxu0 %v636
      %720 = vmatpush.bf16.msra.mxu0 %v635
      %721 = vmatpush.bf16.msra.mxu0 %v634
      %722 = vmatpush.bf16.msra.mxu0 %v633
      %723 = vmatpush.bf16.msra.mxu0 %v632
      %724 = vmatpush.bf16.msra.mxu0 %v631
      %725 = vmatmul.bf16.gmra.mxu0 %v464
      %v726 = vpop.f32.mrf.mxu0
      %v727 = vadd.f32 %v713, %v726
      %v728 = vpop.f32.mrf.mxu0
      %v729 = vadd.f32 %v715, %v728
      %730 = vdwg.mxu0
      %731 = vmatpush.bf16.msra.mxu0 %v646
      %732 = vmatpush.bf16.msra.mxu0 %v645
      %733 = vmatpush.bf16.msra.mxu0 %v644
      %734 = vmatpush.bf16.msra.mxu0 %v643
      %735 = vmatpush.bf16.msra.mxu0 %v642
      %736 = vmatpush.bf16.msra.mxu0 %v641
      %737 = vmatpush.bf16.msra.mxu0 %v640
      %738 = vmatpush.bf16.msra.mxu0 %v639
      %739 = vmatmul.bf16.gmra.mxu0 %v465
      %v740 = vpop.f32.mrf.mxu0
      %v741 = vadd.f32 %v727, %v740
      %v742 = vpop.f32.mrf.mxu0
      %v743 = vadd.f32 %v729, %v742
      %744 = vdwg.mxu0
      %745 = vmatpush.bf16.msra.mxu0 0
      %746 = vmatpush.bf16.msra.mxu0 0
      %747 = vmatpush.bf16.msra.mxu0 0
      %748 = vmatpush.bf16.msra.mxu0 0
      %749 = vmatpush.bf16.msra.mxu0 %v650
      %750 = vmatpush.bf16.msra.mxu0 %v649
      %751 = vmatpush.bf16.msra.mxu0 %v648
      %752 = vmatpush.bf16.msra.mxu0 %v647
      %753 = vmatmul.bf16.gmra.mxu0 %v687
      %v754 = vpop.f32.mrf.mxu0
      %v755 = vadd.f32 %v741, %v754
      %v756 = vpop.f32.mrf.mxu0
      %v757 = vadd.f32 %v743, %v756
      %758 = vdwg.mxu0
      %v760 = vrot.slane %v755, 1
      %v761 = vrot.slane %v755, 2
      %v762 = vrot.slane %v755, 3
      %v763 = vrot.slane %v755, 4
      %v764 = vrot.slane %v755, 5
      %v765 = vrot.slane %v755, 6
      %v766 = vrot.slane %v755, 7
      %v774 = vld [vmem:[%s2] sm:$0x1]
      %v776 = vperm.slane %v774, 0
      %v778 = vrot.slane %v776, 1
      %v779 = vrot.slane %v776, 2
      %v782 = vadd.f32 %v755, %v776
      %v783 = vadd.f32 %v760, %v778
      %v784 = vadd.f32 %v761, %v779
      %v785 = vadd.f32 %v762, %v776
      %v786 = vadd.f32 %v763, %v778
      %v787 = vadd.f32 %v764, %v779
      %v788 = vadd.f32 %v765, %v776
      %v789 = vadd.f32 %v766, %v778
      %v790 = vadd.f32 %v757, %v779
      %v791 = vmax.f32 %v782, 0.0
      %v792 = vmax.f32 %v783, 0.0
      %v793 = vmax.f32 %v784, 0.0
      %v794 = vmax.f32 %v785, 0.0
      %v795 = vmax.f32 %v786, 0.0
      %v796 = vmax.f32 %v787, 0.0
      %v797 = vmax.f32 %v788, 0.0
      %v798 = vmax.f32 %v789, 0.0
      %v799 = vmax.f32 %v790, 0.0
      %809 = vst [vmem:[#allocation1] ss:$9 sm:$0xff] %v791
      %s810 = scalar_lea.vmem [#allocation1], 1
      %811 = vst [vmem:[%s810] ss:$9 sm:$0xff] %v792
      %s812 = scalar_lea.vmem [#allocation1], 2
      %813 = vst [vmem:[%s812] ss:$9 sm:$0xff] %v793
      %v814 = vld [vmem:[#allocation1] sm:$0xff]
      %815 = vst [vmem:[#allocation1] ss:$9 sm:$0xff] %v794
      %816 = vst [vmem:[%s810] ss:$9 sm:$0xff] %v795
      %817 = vst [vmem:[%s812] ss:$9 sm:$0xff] %v796
      %v818 = vld [vmem:[#allocation1] sm:$0xff]
      %819 = vst [vmem:[#allocation1] ss:$9 sm:$0xff] %v797
      %820 = vst [vmem:[%s810] ss:$9 sm:$0xff] %v798
      %821 = vst [vmem:[%s812] ss:$9 sm:$0xff] %v799
      %v822 = vld [vmem:[#allocation1] sm:$0xff]
      %v826 = vpack.c.bf16 %v814, %v814
      %v827 = vpack.c.bf16 %v818, %v818
      %v828 = vpack.c.bf16 %v822, %v822
      %vm829 = vcmask 517120
      %vm830 = vsmask.f32 1280
      %vm831 = vmand %vm829, %vm830
      %v832 = vld [vmem:[%s170] sm:$0x3]
      %v833 = vsel %vm831, %v826, %v832
      %834 = vst [vmem:[%s170] sm:$0x3] %v833
      %v835 = vld [vmem:[%s170 + $0x2] sm:$0x3]
      %v836 = vsel %vm831, %v827, %v835
      %837 = vst [vmem:[%s170 + $0x2] sm:$0x3] %v836
      %v838 = vld [vmem:[%s170 + $0x4] sm:$0x3]
      %v839 = vsel %vm831, %v828, %v838
      %840 = vst [vmem:[%s170 + $0x4] sm:$0x3] %v839
      %p841 = scmp.lt.s32.totalorder %s14, 1
      %s842 = scalar_select %p841, %s14, 1
      %s843 = smul.addr %s842, 3
      %s844 = smul.addr %s843, 2
      %s845 = scalar_lea.vmem %s3, %s844
      // Predicated region
      $region33: #{atari_actor_critic_forward.6} parent=31 // pred_check
        %p846 = pneg %p100
      $region34: #{atari_actor_critic_forward.6} parent=31 // pred_check_branch
        %848 = sbr.rel (%p846) target = $region36
      $region35: #{atari_actor_critic_forward.6} parent=31 // pred_region
        _
      $region36: #{atari_actor_critic_forward.6} parent=31 // pred_fallthru
        _
    $region32: #{atari_actor_critic_forward.6} parent=5 // pred_fallthru
      _
    %p849 = scmp.le.s32.totalorder 2, %s9
    // Predicated region
    $region37: #{atari_actor_critic_forward.6} parent=5 // pred_check
      %p850 = pneg %p849
    $region38: #{atari_actor_critic_forward.6} parent=5 // pred_check_branch
      %852 = sbr.rel (%p850) target = $region40
    $region39: #{atari_actor_critic_forward.6} parent=5 // pred_region
      %s853 = ssub.s32 %s9, 2
      // Predicated region
      $region41: #{atari_actor_critic_forward.6} parent=39 // pred_check
        %p854 = pneg %p106
      $region42: #{atari_actor_critic_forward.6} parent=39 // pred_check_branch
        %856 = sbr.rel (%p854) target = $region44
      $region43: #{atari_actor_critic_forward.6} parent=39 // pred_region
        %p857 = scmp.lt.s32.totalorder %s15, 1
        %s858 = scalar_select %p857, %s15, 1
        %s859 = smul.addr %s858, 3
        %s860 = smul.addr %s859, 2
        %s861 = scalar_lea.vmem %s3, %s860
      $region44: #{atari_actor_critic_forward.6} parent=39 // pred_fallthru
        _
    $region40: #{atari_actor_critic_forward.6} parent=5 // pred_fallthru
      _
  $region6: #{atari_actor_critic_forward.6} parent=0 // loop_footer
    %s13 = sadd.s32 1, %s9
  $region7: #{atari_actor_critic_forward.6} parent=0 // loop_footer_branch
    %8 = sbr.rel target = $region3
  $region8: #{atari_actor_critic_forward.6} parent=0 // loop_exit
    _

// kernel: atari_actor_critic_forward.7
$region0: #{atari_actor_critic_forward.7}
  #allocation0 [shape = 'u32[]', space=smem, size = 0x4, offset = 0x4, fixed_abs, tag = 'smem constant byte address 0x4 - core index']
  #allocation1 [shape = 'u32[72,128]{1,0:T(1,128)}', space=vmem, size = 0x9000, scoped, tag = 'internal scratch']
  %s0 = inlined_call_operand.vmem [shape: bf16[2,576], index: 0, kind: input, shape index: {}]
  %s1 = inlined_call_operand.vmem [shape: bf16[576,512], index: 1, kind: input, shape index: {}]
  %s2 = inlined_call_operand.vmem [shape: f32[1,512], index: 2, kind: input, shape index: {}]
  %s3 = inlined_call_operand.vmem [shape: bf16[512,128], index: 3, kind: input, shape index: {}]
  %s4 = inlined_call_operand.vmem [shape: f32[1,128], index: 4, kind: input, shape index: {}]
  %s5 = inlined_call_operand.vmem [shape: f32[2,128], index: 5, kind: output, shape index: {}]
  %s6 = sld [smem:[#allocation0]]
  $region30: #{atari_actor_critic_forward.7} parent=0
    _
  %s8 = ssub.s32 1, %s6
  %s9 = scalar_select 0, %s8, %s6
  // Predicated region
  $region2: #{atari_actor_critic_forward.7} parent=0 // pred_check
    _
  $region3: #{atari_actor_critic_forward.7} parent=0 // pred_check_branch
    %11 = sbr.rel (0) target = $region5
  $region4: #{atari_actor_critic_forward.7} parent=0 // pred_region
    _
  $region5: #{atari_actor_critic_forward.7} parent=0 // pred_fallthru
    _
  // Predicated region
  $region6: #{atari_actor_critic_forward.7} parent=0 // pred_check
    _
  $region7: #{atari_actor_critic_forward.7} parent=0 // pred_check_branch
    %13 = sbr.rel (0) target = $region9
  $region8: #{atari_actor_critic_forward.7} parent=0 // pred_region
    _
  $region9: #{atari_actor_critic_forward.7} parent=0 // pred_fallthru
    _
  // Predicated region
  $region10: #{atari_actor_critic_forward.7} parent=0 // pred_check
    _
  $region11: #{atari_actor_critic_forward.7} parent=0 // pred_check_branch
    %15 = sbr.rel (0) target = $region13
  $region12: #{atari_actor_critic_forward.7} parent=0 // pred_region
    _
  $region13: #{atari_actor_critic_forward.7} parent=0 // pred_fallthru
    _
  // Predicated region
  $region14: #{atari_actor_critic_forward.7} parent=0 // pred_check
    _
  $region15: #{atari_actor_critic_forward.7} parent=0 // pred_check_branch
    %17 = sbr.rel (0) target = $region17
  $region16: #{atari_actor_critic_forward.7} parent=0 // pred_region
    _
  $region17: #{atari_actor_critic_forward.7} parent=0 // pred_fallthru
    _
  // Predicated region
  $region18: #{atari_actor_critic_forward.7} parent=0 // pred_check
    _
  $region19: #{atari_actor_critic_forward.7} parent=0 // pred_check_branch
    %19 = sbr.rel (0) target = $region21
  $region20: #{atari_actor_critic_forward.7} parent=0 // pred_region
    _
  $region21: #{atari_actor_critic_forward.7} parent=0 // pred_fallthru
    _
  %v21 = vld [vmem:[%s0] sm:$0x1f]
  %v22 = vld [vmem:[%s1] sm:$0xff]
  %v23 = vld [vmem:[%s1 + $0x8] sm:$0xff]
  %v24 = vld [vmem:[%s1 + $0x10] sm:$0xff]
  %v25 = vld [vmem:[%s1 + $0x18] sm:$0xff]
  %v26 = vld [vmem:[%s1 + $0x20] sm:$0xff]
  %v27 = vld [vmem:[%s1 + $0x28] sm:$0xff]
  %v28 = vld [vmem:[%s1 + $0x30] sm:$0xff]
  %v29 = vld [vmem:[%s1 + $0x38] sm:$0xff]
  %v30 = vld [vmem:[%s1 + $0x40] sm:$0xff]
  %v31 = vld [vmem:[%s1 + $0x48] sm:$0xff]
  %v32 = vld [vmem:[%s1 + $0x50] sm:$0xff]
  %v33 = vld [vmem:[%s1 + $0x58] sm:$0xff]
  %v34 = vld [vmem:[%s1 + $0x60] sm:$0xff]
  %v35 = vld [vmem:[%s1 + $0x68] sm:$0xff]
  %v36 = vld [vmem:[%s1 + $0x70] sm:$0xff]
  %v37 = vld [vmem:[%s1 + $0x78] sm:$0xff]
  %v38 = vld [vmem:[%s1 + $0x80] sm:$0xff]
  %v39 = vld [vmem:[%s1 + $0x88] sm:$0xff]
  %v40 = vld [vmem:[%s1 + $0x90] sm:$0xff]
  %v41 = vld [vmem:[%s1 + $0x98] sm:$0xff]
  %v42 = vld [vmem:[%s1 + $0xa0] sm:$0xff]
  %v43 = vld [vmem:[%s1 + $0xa8] sm:$0xff]
  %v44 = vld [vmem:[%s1 + $0xb0] sm:$0xff]
  %v45 = vld [vmem:[%s1 + $0xb8] sm:$0xff]
  %v46 = vld [vmem:[%s1 + $0xc0] sm:$0xff]
  %v47 = vld [vmem:[%s1 + $0xc8] sm:$0xff]
  %v48 = vld [vmem:[%s1 + $0xd0] sm:$0xff]
  %v49 = vld [vmem:[%s1 + $0xd8] sm:$0xff]
  %v50 = vld [vmem:[%s1 + $0xe0] sm:$0xff]
  %v51 = vld [vmem:[%s1 + $0xe8] sm:$0xff]
  %v52 = vld [vmem:[%s1 + $0xf0] sm:$0xff]
  %v53 = vld [vmem:[%s1 + $0xf8] sm:$0xff]
  %v54 = vld [vmem:[%s1 + $0x100] sm:$0xff]
  %v55 = vld [vmem:[%s1 + $0x108] sm:$0xff]
  %v56 = vld [vmem:[%s1 + $0x110] sm:$0xff]
  %v57 = vld [vmem:[%s1 + $0x118] sm:$0xff]
  %v58 = vld [vmem:[%s1 + $0x120] sm:$0xff]
  %v59 = vld [vmem:[%s1 + $0x128] sm:$0xff]
  %v60 = vld [vmem:[%s1 + $0x130] sm:$0xff]
  %v61 = vld [vmem:[%s1 + $0x138] sm:$0xff]
  %v62 = vld [vmem:[%s1 + $0x140] sm:$0xff]
  %v63 = vld [vmem:[%s1 + $0x148] sm:$0xff]
  %v64 = vld [vmem:[%s1 + $0x150] sm:$0xff]
  %v65 = vld [vmem:[%s1 + $0x158] sm:$0xff]
  %v66 = vld [vmem:[%s1 + $0x160] sm:$0xff]
  %v67 = vld [vmem:[%s1 + $0x168] sm:$0xff]
  %v68 = vld [vmem:[%s1 + $0x170] sm:$0xff]
  %v69 = vld [vmem:[%s1 + $0x178] sm:$0xff]
  %v70 = vld [vmem:[%s1 + $0x180] sm:$0xff]
  %v71 = vld [vmem:[%s1 + $0x188] sm:$0xff]
  %v72 = vld [vmem:[%s1 + $0x190] sm:$0xff]
  %v73 = vld [vmem:[%s1 + $0x198] sm:$0xff]
  %v74 = vld [vmem:[%s1 + $0x1a0] sm:$0xff]
  %v75 = vld [vmem:[%s1 + $0x1a8] sm:$0xff]
  %v76 = vld [vmem:[%s1 + $0x1b0] sm:$0xff]
  %v77 = vld [vmem:[%s1 + $0x1b8] sm:$0xff]
  %v78 = vld [vmem:[%s1 + $0x1c0] sm:$0xff]
  %v79 = vld [vmem:[%s1 + $0x1c8] sm:$0xff]
  %v80 = vld [vmem:[%s1 + $0x1d0] sm:$0xff]
  %v81 = vld [vmem:[%s1 + $0x1d8] sm:$0xff]
  %v82 = vld [vmem:[%s1 + $0x1e0] sm:$0xff]
  %v83 = vld [vmem:[%s1 + $0x1e8] sm:$0xff]
  %v84 = vld [vmem:[%s1 + $0x1f0] sm:$0xff]
  %v85 = vld [vmem:[%s1 + $0x1f8] sm:$0xff]
  %v86 = vld [vmem:[%s1 + $0x200] sm:$0xff]
  %v87 = vld [vmem:[%s1 + $0x208] sm:$0xff]
  %v88 = vld [vmem:[%s1 + $0x210] sm:$0xff]
  %v89 = vld [vmem:[%s1 + $0x218] sm:$0xff]
  %v90 = vld [vmem:[%s1 + $0x220] sm:$0xff]
  %v91 = vld [vmem:[%s1 + $0x228] sm:$0xff]
  %v92 = vld [vmem:[%s1 + $0x230] sm:$0xff]
  %v93 = vld [vmem:[%s1 + $0x238] sm:$0xff]
  %v94 = vld [vmem:[%s1 + $0x240] sm:$0xff]
  %v95 = vld [vmem:[%s1 + $0x248] sm:$0xff]
  %v96 = vld [vmem:[%s1 + $0x250] sm:$0xff]
  %v97 = vld [vmem:[%s1 + $0x258] sm:$0xff]
  %v98 = vld [vmem:[%s1 + $0x260] sm:$0xff]
  %v99 = vld [vmem:[%s1 + $0x268] sm:$0xff]
  %v100 = vld [vmem:[%s1 + $0x270] sm:$0xff]
  %v101 = vld [vmem:[%s1 + $0x278] sm:$0xff]
  %v102 = vld [vmem:[%s1 + $0x280] sm:$0xff]
  %v103 = vld [vmem:[%s1 + $0x288] sm:$0xff]
  %v104 = vld [vmem:[%s1 + $0x290] sm:$0xff]
  %v105 = vld [vmem:[%s1 + $0x298] sm:$0xff]
  %v106 = vld [vmem:[%s1 + $0x2a0] sm:$0xff]
  %v107 = vld [vmem:[%s1 + $0x2a8] sm:$0xff]
  %v108 = vld [vmem:[%s1 + $0x2b0] sm:$0xff]
  %v109 = vld [vmem:[%s1 + $0x2b8] sm:$0xff]
  %v110 = vld [vmem:[%s1 + $0x2c0] sm:$0xff]
  %v111 = vld [vmem:[%s1 + $0x2c8] sm:$0xff]
  %v112 = vld [vmem:[%s1 + $0x2d0] sm:$0xff]
  %v113 = vld [vmem:[%s1 + $0x2d8] sm:$0xff]
  %v114 = vld [vmem:[%s1 + $0x2e0] sm:$0xff]
  %v115 = vld [vmem:[%s1 + $0x2e8] sm:$0xff]
  %v116 = vld [vmem:[%s1 + $0x2f0] sm:$0xff]
  %v117 = vld [vmem:[%s1 + $0x2f8] sm:$0xff]
  %v118 = vld [vmem:[%s1 + $0x300] sm:$0xff]
  %v119 = vld [vmem:[%s1 + $0x308] sm:$0xff]
  %v120 = vld [vmem:[%s1 + $0x310] sm:$0xff]
  %v121 = vld [vmem:[%s1 + $0x318] sm:$0xff]
  %v122 = vld [vmem:[%s1 + $0x320] sm:$0xff]
  %v123 = vld [vmem:[%s1 + $0x328] sm:$0xff]
  %v124 = vld [vmem:[%s1 + $0x330] sm:$0xff]
  %v125 = vld [vmem:[%s1 + $0x338] sm:$0xff]
  %v126 = vld [vmem:[%s1 + $0x340] sm:$0xff]
  %v127 = vld [vmem:[%s1 + $0x348] sm:$0xff]
  %v128 = vld [vmem:[%s1 + $0x350] sm:$0xff]
  %v129 = vld [vmem:[%s1 + $0x358] sm:$0xff]
  %v130 = vld [vmem:[%s1 + $0x360] sm:$0xff]
  %v131 = vld [vmem:[%s1 + $0x368] sm:$0xff]
  %v132 = vld [vmem:[%s1 + $0x370] sm:$0xff]
  %v133 = vld [vmem:[%s1 + $0x378] sm:$0xff]
  %v134 = vld [vmem:[%s1 + $0x380] sm:$0xff]
  %v135 = vld [vmem:[%s1 + $0x388] sm:$0xff]
  %v136 = vld [vmem:[%s1 + $0x390] sm:$0xff]
  %v137 = vld [vmem:[%s1 + $0x398] sm:$0xff]
  %v138 = vld [vmem:[%s1 + $0x3a0] sm:$0xff]
  %v139 = vld [vmem:[%s1 + $0x3a8] sm:$0xff]
  %v140 = vld [vmem:[%s1 + $0x3b0] sm:$0xff]
  %v141 = vld [vmem:[%s1 + $0x3b8] sm:$0xff]
  %v142 = vld [vmem:[%s1 + $0x3c0] sm:$0xff]
  %v143 = vld [vmem:[%s1 + $0x3c8] sm:$0xff]
  %v144 = vld [vmem:[%s1 + $0x3d0] sm:$0xff]
  %v145 = vld [vmem:[%s1 + $0x3d8] sm:$0xff]
  %v146 = vld [vmem:[%s1 + $0x3e0] sm:$0xff]
  %v147 = vld [vmem:[%s1 + $0x3e8] sm:$0xff]
  %v148 = vld [vmem:[%s1 + $0x3f0] sm:$0xff]
  %v149 = vld [vmem:[%s1 + $0x3f8] sm:$0xff]
  %v150 = vld [vmem:[%s1 + $0x400] sm:$0xff]
  %v151 = vld [vmem:[%s1 + $0x408] sm:$0xff]
  %v152 = vld [vmem:[%s1 + $0x410] sm:$0xff]
  %v153 = vld [vmem:[%s1 + $0x418] sm:$0xff]
  %v154 = vld [vmem:[%s1 + $0x420] sm:$0xff]
  %v155 = vld [vmem:[%s1 + $0x428] sm:$0xff]
  %v156 = vld [vmem:[%s1 + $0x430] sm:$0xff]
  %v157 = vld [vmem:[%s1 + $0x438] sm:$0xff]
  %v158 = vld [vmem:[%s1 + $0x440] sm:$0xff]
  %v159 = vld [vmem:[%s1 + $0x448] sm:$0xff]
  %v160 = vld [vmem:[%s1 + $0x450] sm:$0xff]
  %v161 = vld [vmem:[%s1 + $0x458] sm:$0xff]
  %v162 = vld [vmem:[%s1 + $0x460] sm:$0xff]
  %v163 = vld [vmem:[%s1 + $0x468] sm:$0xff]
  %v164 = vld [vmem:[%s1 + $0x470] sm:$0xff]
  %v165 = vld [vmem:[%s1 + $0x478] sm:$0xff]
  %v166 = vld [vmem:[%s2] sm:$0xf]
  %v168 = vperm.slane %v166, 0
  %v169 = vperm.slane %v166, 1
  %v170 = vperm.slane %v166, 2
  %v171 = vperm.slane %v166, 3
  %177 = vst [vmem:[#allocation1] ss:$9 sm:$0xff] %v21
  %v178 = vld [vmem:[#allocation1] sm:$0xff]
  %v179 = vld [vmem:[#allocation1 + $0x9] sm:$0xff]
  %v180 = vld [vmem:[#allocation1 + $0x12] sm:$0xff]
  %v181 = vld [vmem:[#allocation1 + $0x1b] sm:$0xff]
  %v182 = vld [vmem:[#allocation1 + $0x24] sm:$0xff]
  %v331 = vunpack.c.l.b16 %v22
  %v332 = vunpack.c.h.b16 %v22
  %v333 = vunpack.c.l.b16 %v23
  %v334 = vunpack.c.h.b16 %v23
  %v335 = vunpack.c.l.b16 %v24
  %v336 = vunpack.c.h.b16 %v24
  %v337 = vunpack.c.l.b16 %v25
  %v338 = vunpack.c.h.b16 %v25
  %v339 = vunpack.c.l.b16 %v26
  %v340 = vunpack.c.h.b16 %v26
  %v341 = vunpack.c.l.b16 %v27
  %v342 = vunpack.c.h.b16 %v27
  %v343 = vunpack.c.l.b16 %v28
  %v344 = vunpack.c.h.b16 %v28
  %v345 = vunpack.c.l.b16 %v29
  %v346 = vunpack.c.h.b16 %v29
  %v347 = vunpack.c.l.b16 %v30
  %v348 = vunpack.c.h.b16 %v30
  %v349 = vunpack.c.l.b16 %v31
  %v350 = vunpack.c.h.b16 %v31
  %v351 = vunpack.c.l.b16 %v32
  %v352 = vunpack.c.h.b16 %v32
  %v353 = vunpack.c.l.b16 %v33
  %v354 = vunpack.c.h.b16 %v33
  %v355 = vunpack.c.l.b16 %v34
  %v356 = vunpack.c.h.b16 %v34
  %v357 = vunpack.c.l.b16 %v35
  %v358 = vunpack.c.h.b16 %v35
  %v359 = vunpack.c.l.b16 %v36
  %v360 = vunpack.c.h.b16 %v36
  %v361 = vunpack.c.l.b16 %v37
  %v362 = vunpack.c.h.b16 %v37
  %v363 = vunpack.c.l.b16 %v38
  %v364 = vunpack.c.h.b16 %v38
  %v365 = vunpack.c.l.b16 %v39
  %v366 = vunpack.c.h.b16 %v39
  %v367 = vunpack.c.l.b16 %v40
  %v368 = vunpack.c.h.b16 %v40
  %v369 = vunpack.c.l.b16 %v41
  %v370 = vunpack.c.h.b16 %v41
  %v371 = vunpack.c.l.b16 %v42
  %v372 = vunpack.c.h.b16 %v42
  %v373 = vunpack.c.l.b16 %v43
  %v374 = vunpack.c.h.b16 %v43
  %v375 = vunpack.c.l.b16 %v44
  %v376 = vunpack.c.h.b16 %v44
  %v377 = vunpack.c.l.b16 %v45
  %v378 = vunpack.c.h.b16 %v45
  %v379 = vunpack.c.l.b16 %v46
  %v380 = vunpack.c.h.b16 %v46
  %v381 = vunpack.c.l.b16 %v47
  %v382 = vunpack.c.h.b16 %v47
  %v383 = vunpack.c.l.b16 %v48
  %v384 = vunpack.c.h.b16 %v48
  %v385 = vunpack.c.l.b16 %v49
  %v386 = vunpack.c.h.b16 %v49
  %v387 = vunpack.c.l.b16 %v50
  %v388 = vunpack.c.h.b16 %v50
  %v389 = vunpack.c.l.b16 %v51
  %v390 = vunpack.c.h.b16 %v51
  %v391 = vunpack.c.l.b16 %v52
  %v392 = vunpack.c.h.b16 %v52
  %v393 = vunpack.c.l.b16 %v53
  %v394 = vunpack.c.h.b16 %v53
  %v395 = vunpack.c.l.b16 %v54
  %v396 = vunpack.c.h.b16 %v54
  %v397 = vunpack.c.l.b16 %v55
  %v398 = vunpack.c.h.b16 %v55
  %v399 = vunpack.c.l.b16 %v56
  %v400 = vunpack.c.h.b16 %v56
  %v401 = vunpack.c.l.b16 %v57
  %v402 = vunpack.c.h.b16 %v57
  %v403 = vunpack.c.l.b16 %v58
  %v404 = vunpack.c.h.b16 %v58
  %v405 = vunpack.c.l.b16 %v59
  %v406 = vunpack.c.h.b16 %v59
  %v407 = vunpack.c.l.b16 %v60
  %v408 = vunpack.c.h.b16 %v60
  %v409 = vunpack.c.l.b16 %v61
  %v410 = vunpack.c.h.b16 %v61
  %v411 = vunpack.c.l.b16 %v62
  %v412 = vunpack.c.h.b16 %v62
  %v413 = vunpack.c.l.b16 %v63
  %v414 = vunpack.c.h.b16 %v63
  %v415 = vunpack.c.l.b16 %v64
  %v416 = vunpack.c.h.b16 %v64
  %v417 = vunpack.c.l.b16 %v65
  %v418 = vunpack.c.h.b16 %v65
  %v419 = vunpack.c.l.b16 %v66
  %v420 = vunpack.c.h.b16 %v66
  %v421 = vunpack.c.l.b16 %v67
  %v422 = vunpack.c.h.b16 %v67
  %v423 = vunpack.c.l.b16 %v68
  %v424 = vunpack.c.h.b16 %v68
  %v425 = vunpack.c.l.b16 %v69
  %v426 = vunpack.c.h.b16 %v69
  %v427 = vunpack.c.l.b16 %v70
  %v428 = vunpack.c.h.b16 %v70
  %v429 = vunpack.c.l.b16 %v71
  %v430 = vunpack.c.h.b16 %v71
  %v431 = vunpack.c.l.b16 %v72
  %v432 = vunpack.c.h.b16 %v72
  %v433 = vunpack.c.l.b16 %v73
  %v434 = vunpack.c.h.b16 %v73
  %v435 = vunpack.c.l.b16 %v74
  %v436 = vunpack.c.h.b16 %v74
  %v437 = vunpack.c.l.b16 %v75
  %v438 = vunpack.c.h.b16 %v75
  %v439 = vunpack.c.l.b16 %v76
  %v440 = vunpack.c.h.b16 %v76
  %v441 = vunpack.c.l.b16 %v77
  %v442 = vunpack.c.h.b16 %v77
  %v443 = vunpack.c.l.b16 %v78
  %v444 = vunpack.c.h.b16 %v78
  %v445 = vunpack.c.l.b16 %v79
  %v446 = vunpack.c.h.b16 %v79
  %v447 = vunpack.c.l.b16 %v80
  %v448 = vunpack.c.h.b16 %v80
  %v449 = vunpack.c.l.b16 %v81
  %v450 = vunpack.c.h.b16 %v81
  %v451 = vunpack.c.l.b16 %v82
  %v452 = vunpack.c.h.b16 %v82
  %v453 = vunpack.c.l.b16 %v83
  %v454 = vunpack.c.h.b16 %v83
  %v455 = vunpack.c.l.b16 %v84
  %v456 = vunpack.c.h.b16 %v84
  %v457 = vunpack.c.l.b16 %v85
  %v458 = vunpack.c.h.b16 %v85
  %v459 = vunpack.c.l.b16 %v86
  %v460 = vunpack.c.h.b16 %v86
  %v461 = vunpack.c.l.b16 %v87
  %v462 = vunpack.c.h.b16 %v87
  %v463 = vunpack.c.l.b16 %v88
  %v464 = vunpack.c.h.b16 %v88
  %v465 = vunpack.c.l.b16 %v89
  %v466 = vunpack.c.h.b16 %v89
  %v467 = vunpack.c.l.b16 %v90
  %v468 = vunpack.c.h.b16 %v90
  %v469 = vunpack.c.l.b16 %v91
  %v470 = vunpack.c.h.b16 %v91
  %v471 = vunpack.c.l.b16 %v92
  %v472 = vunpack.c.h.b16 %v92
  %v473 = vunpack.c.l.b16 %v93
  %v474 = vunpack.c.h.b16 %v93
  %v475 = vunpack.c.l.b16 %v94
  %v476 = vunpack.c.h.b16 %v94
  %v477 = vunpack.c.l.b16 %v95
  %v478 = vunpack.c.h.b16 %v95
  %v479 = vunpack.c.l.b16 %v96
  %v480 = vunpack.c.h.b16 %v96
  %v481 = vunpack.c.l.b16 %v97
  %v482 = vunpack.c.h.b16 %v97
  %v483 = vunpack.c.l.b16 %v98
  %v484 = vunpack.c.h.b16 %v98
  %v485 = vunpack.c.l.b16 %v99
  %v486 = vunpack.c.h.b16 %v99
  %v487 = vunpack.c.l.b16 %v100
  %v488 = vunpack.c.h.b16 %v100
  %v489 = vunpack.c.l.b16 %v101
  %v490 = vunpack.c.h.b16 %v101
  %v491 = vunpack.c.l.b16 %v102
  %v492 = vunpack.c.h.b16 %v102
  %v493 = vunpack.c.l.b16 %v103
  %v494 = vunpack.c.h.b16 %v103
  %v495 = vunpack.c.l.b16 %v104
  %v496 = vunpack.c.h.b16 %v104
  %v497 = vunpack.c.l.b16 %v105
  %v498 = vunpack.c.h.b16 %v105
  %v499 = vunpack.c.l.b16 %v106
  %v500 = vunpack.c.h.b16 %v106
  %v501 = vunpack.c.l.b16 %v107
  %v502 = vunpack.c.h.b16 %v107
  %v503 = vunpack.c.l.b16 %v108
  %v504 = vunpack.c.h.b16 %v108
  %v505 = vunpack.c.l.b16 %v109
  %v506 = vunpack.c.h.b16 %v109
  %v507 = vunpack.c.l.b16 %v110
  %v508 = vunpack.c.h.b16 %v110
  %v509 = vunpack.c.l.b16 %v111
  %v510 = vunpack.c.h.b16 %v111
  %v511 = vunpack.c.l.b16 %v112
  %v512 = vunpack.c.h.b16 %v112
  %v513 = vunpack.c.l.b16 %v113
  %v514 = vunpack.c.h.b16 %v113
  %v515 = vunpack.c.l.b16 %v114
  %v516 = vunpack.c.h.b16 %v114
  %v517 = vunpack.c.l.b16 %v115
  %v518 = vunpack.c.h.b16 %v115
  %v519 = vunpack.c.l.b16 %v116
  %v520 = vunpack.c.h.b16 %v116
  %v521 = vunpack.c.l.b16 %v117
  %v522 = vunpack.c.h.b16 %v117
  %v523 = vunpack.c.l.b16 %v118
  %v524 = vunpack.c.h.b16 %v118
  %v525 = vunpack.c.l.b16 %v119
  %v526 = vunpack.c.h.b16 %v119
  %v527 = vunpack.c.l.b16 %v120
  %v528 = vunpack.c.h.b16 %v120
  %v529 = vunpack.c.l.b16 %v121
  %v530 = vunpack.c.h.b16 %v121
  %v531 = vunpack.c.l.b16 %v122
  %v532 = vunpack.c.h.b16 %v122
  %v533 = vunpack.c.l.b16 %v123
  %v534 = vunpack.c.h.b16 %v123
  %v535 = vunpack.c.l.b16 %v124
  %v536 = vunpack.c.h.b16 %v124
  %v537 = vunpack.c.l.b16 %v125
  %v538 = vunpack.c.h.b16 %v125
  %v539 = vunpack.c.l.b16 %v126
  %v540 = vunpack.c.h.b16 %v126
  %v541 = vunpack.c.l.b16 %v127
  %v542 = vunpack.c.h.b16 %v127
  %v543 = vunpack.c.l.b16 %v128
  %v544 = vunpack.c.h.b16 %v128
  %v545 = vunpack.c.l.b16 %v129
  %v546 = vunpack.c.h.b16 %v129
  %v547 = vunpack.c.l.b16 %v130
  %v548 = vunpack.c.h.b16 %v130
  %v549 = vunpack.c.l.b16 %v131
  %v550 = vunpack.c.h.b16 %v131
  %v551 = vunpack.c.l.b16 %v132
  %v552 = vunpack.c.h.b16 %v132
  %v553 = vunpack.c.l.b16 %v133
  %v554 = vunpack.c.h.b16 %v133
  %v555 = vunpack.c.l.b16 %v134
  %v556 = vunpack.c.h.b16 %v134
  %v557 = vunpack.c.l.b16 %v135
  %v558 = vunpack.c.h.b16 %v135
  %v559 = vunpack.c.l.b16 %v136
  %v560 = vunpack.c.h.b16 %v136
  %v561 = vunpack.c.l.b16 %v137
  %v562 = vunpack.c.h.b16 %v137
  %v563 = vunpack.c.l.b16 %v138
  %v564 = vunpack.c.h.b16 %v138
  %v565 = vunpack.c.l.b16 %v139
  %v566 = vunpack.c.h.b16 %v139
  %v567 = vunpack.c.l.b16 %v140
  %v568 = vunpack.c.h.b16 %v140
  %v569 = vunpack.c.l.b16 %v141
  %v570 = vunpack.c.h.b16 %v141
  %v571 = vunpack.c.l.b16 %v142
  %v572 = vunpack.c.h.b16 %v142
  %v573 = vunpack.c.l.b16 %v143
  %v574 = vunpack.c.h.b16 %v143
  %v575 = vunpack.c.l.b16 %v144
  %v576 = vunpack.c.h.b16 %v144
  %v577 = vunpack.c.l.b16 %v145
  %v578 = vunpack.c.h.b16 %v145
  %v579 = vunpack.c.l.b16 %v146
  %v580 = vunpack.c.h.b16 %v146
  %v581 = vunpack.c.l.b16 %v147
  %v582 = vunpack.c.h.b16 %v147
  %v583 = vunpack.c.l.b16 %v148
  %v584 = vunpack.c.h.b16 %v148
  %v585 = vunpack.c.l.b16 %v149
  %v586 = vunpack.c.h.b16 %v149
  %v587 = vunpack.c.l.b16 %v150
  %v588 = vunpack.c.h.b16 %v150
  %v589 = vunpack.c.l.b16 %v151
  %v590 = vunpack.c.h.b16 %v151
  %v591 = vunpack.c.l.b16 %v152
  %v592 = vunpack.c.h.b16 %v152
  %v593 = vunpack.c.l.b16 %v153
  %v594 = vunpack.c.h.b16 %v153
  %v595 = vunpack.c.l.b16 %v154
  %v596 = vunpack.c.h.b16 %v154
  %v597 = vunpack.c.l.b16 %v155
  %v598 = vunpack.c.h.b16 %v155
  %v599 = vunpack.c.l.b16 %v156
  %v600 = vunpack.c.h.b16 %v156
  %v601 = vunpack.c.l.b16 %v157
  %v602 = vunpack.c.h.b16 %v157
  %v603 = vunpack.c.l.b16 %v158
  %v604 = vunpack.c.h.b16 %v158
  %v605 = vunpack.c.l.b16 %v159
  %v606 = vunpack.c.h.b16 %v159
  %v607 = vunpack.c.l.b16 %v160
  %v608 = vunpack.c.h.b16 %v160
  %v609 = vunpack.c.l.b16 %v161
  %v610 = vunpack.c.h.b16 %v161
  %v611 = vunpack.c.l.b16 %v162
  %v612 = vunpack.c.h.b16 %v162
  %v613 = vunpack.c.l.b16 %v163
  %v614 = vunpack.c.h.b16 %v163
  %v615 = vunpack.c.l.b16 %v164
  %v616 = vunpack.c.h.b16 %v164
  %v617 = vunpack.c.l.b16 %v165
  %v618 = vunpack.c.h.b16 %v165
  %v619 = vpack.c.b16 %v335, %v331
  %v620 = vpack.c.b16 %v336, %v332
  %v621 = vpack.c.b16 %v337, %v333
  %v622 = vpack.c.b16 %v338, %v334
  %v623 = vpack.c.b16 %v343, %v339
  %v624 = vpack.c.b16 %v344, %v340
  %v625 = vpack.c.b16 %v345, %v341
  %v626 = vpack.c.b16 %v346, %v342
  %v627 = vpack.c.b16 %v351, %v347
  %v628 = vpack.c.b16 %v352, %v348
  %v629 = vpack.c.b16 %v353, %v349
  %v630 = vpack.c.b16 %v354, %v350
  %v631 = vpack.c.b16 %v359, %v355
  %v632 = vpack.c.b16 %v360, %v356
  %v633 = vpack.c.b16 %v361, %v357
  %v634 = vpack.c.b16 %v362, %v358
  %v635 = vpack.c.b16 %v367, %v363
  %v636 = vpack.c.b16 %v368, %v364
  %v637 = vpack.c.b16 %v369, %v365
  %v638 = vpack.c.b16 %v370, %v366
  %v639 = vpack.c.b16 %v375, %v371
  %v640 = vpack.c.b16 %v376, %v372
  %v641 = vpack.c.b16 %v377, %v373
  %v642 = vpack.c.b16 %v378, %v374
  %v643 = vpack.c.b16 %v383, %v379
  %v644 = vpack.c.b16 %v384, %v380
  %v645 = vpack.c.b16 %v385, %v381
  %v646 = vpack.c.b16 %v386, %v382
  %v647 = vpack.c.b16 %v391, %v387
  %v648 = vpack.c.b16 %v392, %v388
  %v649 = vpack.c.b16 %v393, %v389
  %v650 = vpack.c.b16 %v394, %v390
  %v651 = vpack.c.b16 %v399, %v395
  %v652 = vpack.c.b16 %v400, %v396
  %v653 = vpack.c.b16 %v401, %v397
  %v654 = vpack.c.b16 %v402, %v398
  %v655 = vpack.c.b16 %v407, %v403
  %v656 = vpack.c.b16 %v408, %v404
  %v657 = vpack.c.b16 %v409, %v405
  %v658 = vpack.c.b16 %v410, %v406
  %v659 = vpack.c.b16 %v415, %v411
  %v660 = vpack.c.b16 %v416, %v412
  %v661 = vpack.c.b16 %v417, %v413
  %v662 = vpack.c.b16 %v418, %v414
  %v663 = vpack.c.b16 %v423, %v419
  %v664 = vpack.c.b16 %v424, %v420
  %v665 = vpack.c.b16 %v425, %v421
  %v666 = vpack.c.b16 %v426, %v422
  %v667 = vpack.c.b16 %v431, %v427
  %v668 = vpack.c.b16 %v432, %v428
  %v669 = vpack.c.b16 %v433, %v429
  %v670 = vpack.c.b16 %v434, %v430
  %v671 = vpack.c.b16 %v439, %v435
  %v672 = vpack.c.b16 %v440, %v436
  %v673 = vpack.c.b16 %v441, %v437
  %v674 = vpack.c.b16 %v442, %v438
  %v675 = vpack.c.b16 %v447, %v443
  %v676 = vpack.c.b16 %v448, %v444
  %v677 = vpack.c.b16 %v449, %v445
  %v678 = vpack.c.b16 %v450, %v446
  %v679 = vpack.c.b16 %v455, %v451
  %v680 = vpack.c.b16 %v456, %v452
  %v681 = vpack.c.b16 %v457, %v453
  %v682 = vpack.c.b16 %v458, %v454
  %v683 = vpack.c.b16 %v463, %v459
  %v684 = vpack.c.b16 %v464, %v460
  %v685 = vpack.c.b16 %v465, %v461
  %v686 = vpack.c.b16 %v466, %v462
  %v687 = vpack.c.b16 %v471, %v467
  %v688 = vpack.c.b16 %v472, %v468
  %v689 = vpack.c.b16 %v473, %v469
  %v690 = vpack.c.b16 %v474, %v470
  %v691 = vpack.c.b16 %v479, %v475
  %v692 = vpack.c.b16 %v480, %v476
  %v693 = vpack.c.b16 %v481, %v477
  %v694 = vpack.c.b16 %v482, %v478
  %v695 = vpack.c.b16 %v487, %v483
  %v696 = vpack.c.b16 %v488, %v484
  %v697 = vpack.c.b16 %v489, %v485
  %v698 = vpack.c.b16 %v490, %v486
  %v699 = vpack.c.b16 %v495, %v491
  %v700 = vpack.c.b16 %v496, %v492
  %v701 = vpack.c.b16 %v497, %v493
  %v702 = vpack.c.b16 %v498, %v494
  %v703 = vpack.c.b16 %v503, %v499
  %v704 = vpack.c.b16 %v504, %v500
  %v705 = vpack.c.b16 %v505, %v501
  %v706 = vpack.c.b16 %v506, %v502
  %v707 = vpack.c.b16 %v511, %v507
  %v708 = vpack.c.b16 %v512, %v508
  %v709 = vpack.c.b16 %v513, %v509
  %v710 = vpack.c.b16 %v514, %v510
  %v711 = vpack.c.b16 %v519, %v515
  %v712 = vpack.c.b16 %v520, %v516
  %v713 = vpack.c.b16 %v521, %v517
  %v714 = vpack.c.b16 %v522, %v518
  %v715 = vpack.c.b16 %v527, %v523
  %v716 = vpack.c.b16 %v528, %v524
  %v717 = vpack.c.b16 %v529, %v525
  %v718 = vpack.c.b16 %v530, %v526
  %v719 = vpack.c.b16 %v535, %v531
  %v720 = vpack.c.b16 %v536, %v532
  %v721 = vpack.c.b16 %v537, %v533
  %v722 = vpack.c.b16 %v538, %v534
  %v723 = vpack.c.b16 %v543, %v539
  %v724 = vpack.c.b16 %v544, %v540
  %v725 = vpack.c.b16 %v545, %v541
  %v726 = vpack.c.b16 %v546, %v542
  %v727 = vpack.c.b16 %v551, %v547
  %v728 = vpack.c.b16 %v552, %v548
  %v729 = vpack.c.b16 %v553, %v549
  %v730 = vpack.c.b16 %v554, %v550
  %v731 = vpack.c.b16 %v559, %v555
  %v732 = vpack.c.b16 %v560, %v556
  %v733 = vpack.c.b16 %v561, %v557
  %v734 = vpack.c.b16 %v562, %v558
  %v735 = vpack.c.b16 %v567, %v563
  %v736 = vpack.c.b16 %v568, %v564
  %v737 = vpack.c.b16 %v569, %v565
  %v738 = vpack.c.b16 %v570, %v566
  %v739 = vpack.c.b16 %v575, %v571
  %v740 = vpack.c.b16 %v576, %v572
  %v741 = vpack.c.b16 %v577, %v573
  %v742 = vpack.c.b16 %v578, %v574
  %v743 = vpack.c.b16 %v583, %v579
  %v744 = vpack.c.b16 %v584, %v580
  %v745 = vpack.c.b16 %v585, %v581
  %v746 = vpack.c.b16 %v586, %v582
  %v747 = vpack.c.b16 %v591, %v587
  %v748 = vpack.c.b16 %v592, %v588
  %v749 = vpack.c.b16 %v593, %v589
  %v750 = vpack.c.b16 %v594, %v590
  %v751 = vpack.c.b16 %v599, %v595
  %v752 = vpack.c.b16 %v600, %v596
  %v753 = vpack.c.b16 %v601, %v597
  %v754 = vpack.c.b16 %v602, %v598
  %v755 = vpack.c.b16 %v607, %v603
  %v756 = vpack.c.b16 %v608, %v604
  %v757 = vpack.c.b16 %v609, %v605
  %v758 = vpack.c.b16 %v610, %v606
  %v759 = vpack.c.b16 %v615, %v611
  %v760 = vpack.c.b16 %v616, %v612
  %v761 = vpack.c.b16 %v617, %v613
  %v762 = vpack.c.b16 %v618, %v614
  %vm907 = vcmask 523264
  %v908 = vsel %vm907, %v182, 0
  %910 = vmatpush.bf16.msra.mxu0 %v647
  %911 = vmatpush.bf16.msra.mxu0 %v643
  %912 = vmatpush.bf16.msra.mxu0 %v639
  %913 = vmatpush.bf16.msra.mxu0 %v635
  %914 = vmatpush.bf16.msra.mxu0 %v631
  %915 = vmatpush.bf16.msra.mxu0 %v627
  %916 = vmatpush.bf16.msra.mxu0 %v623
  %917 = vmatpush.bf16.msra.mxu0 %v619
  %918 = vmatmul.bf16.gmra.mxu0 %v178
  %v919 = vpop.f32.mrf.mxu0
  %v920 = vadd.f32 %v168, %v919
  %v921 = vpop.f32.mrf.mxu0
  %922 = vdwg.mxu0
  %923 = vmatpush.bf16.msra.mxu0 %v679
  %924 = vmatpush.bf16.msra.mxu0 %v675
  %925 = vmatpush.bf16.msra.mxu0 %v671
  %926 = vmatpush.bf16.msra.mxu0 %v667
  %927 = vmatpush.bf16.msra.mxu0 %v663
  %928 = vmatpush.bf16.msra.mxu0 %v659
  %929 = vmatpush.bf16.msra.mxu0 %v655
  %930 = vmatpush.bf16.msra.mxu0 %v651
  %931 = vmatmul.bf16.gmra.mxu0 %v179
  %v932 = vpop.f32.mrf.mxu0
  %v933 = vadd.f32 %v920, %v932
  %v934 = vpop.f32.mrf.mxu0
  %935 = vdwg.mxu0
  %936 = vmatpush.bf16.msra.mxu0 %v711
  %937 = vmatpush.bf16.msra.mxu0 %v707
  %938 = vmatpush.bf16.msra.mxu0 %v703
  %939 = vmatpush.bf16.msra.mxu0 %v699
  %940 = vmatpush.bf16.msra.mxu0 %v695
  %941 = vmatpush.bf16.msra.mxu0 %v691
  %942 = vmatpush.bf16.msra.mxu0 %v687
  %943 = vmatpush.bf16.msra.mxu0 %v683
  %944 = vmatmul.bf16.gmra.mxu0 %v180
  %v945 = vpop.f32.mrf.mxu0
  %v946 = vadd.f32 %v933, %v945
  %v947 = vpop.f32.mrf.mxu0
  %948 = vdwg.mxu0
  %949 = vmatpush.bf16.msra.mxu0 %v743
  %950 = vmatpush.bf16.msra.mxu0 %v739
  %951 = vmatpush.bf16.msra.mxu0 %v735
  %952 = vmatpush.bf16.msra.mxu0 %v731
  %953 = vmatpush.bf16.msra.mxu0 %v727
  %954 = vmatpush.bf16.msra.mxu0 %v723
  %955 = vmatpush.bf16.msra.mxu0 %v719
  %956 = vmatpush.bf16.msra.mxu0 %v715
  %957 = vmatmul.bf16.gmra.mxu0 %v181
  %v958 = vpop.f32.mrf.mxu0
  %v959 = vadd.f32 %v946, %v958
  %v960 = vpop.f32.mrf.mxu0
  %961 = vdwg.mxu0
  %962 = vmatpush.bf16.msra.mxu0 0
  %963 = vmatpush.bf16.msra.mxu0 0
  %964 = vmatpush.bf16.msra.mxu0 0
  %965 = vmatpush.bf16.msra.mxu0 0
  %966 = vmatpush.bf16.msra.mxu0 %v759
  %967 = vmatpush.bf16.msra.mxu0 %v755
  %968 = vmatpush.bf16.msra.mxu0 %v751
  %969 = vmatpush.bf16.msra.mxu0 %v747
  %970 = vmatmul.bf16.gmra.mxu0 %v908
  %v971 = vpop.f32.mrf.mxu0
  %v972 = vadd.f32 %v959, %v971
  %v973 = vpop.f32.mrf.mxu0
  %974 = vdwg.mxu0
  %975 = vmatpush.bf16.msra.mxu0 %v648
  %976 = vmatpush.bf16.msra.mxu0 %v644
  %977 = vmatpush.bf16.msra.mxu0 %v640
  %978 = vmatpush.bf16.msra.mxu0 %v636
  %979 = vmatpush.bf16.msra.mxu0 %v632
  %980 = vmatpush.bf16.msra.mxu0 %v628
  %981 = vmatpush.bf16.msra.mxu0 %v624
  %982 = vmatpush.bf16.msra.mxu0 %v620
  %983 = vmatmul.bf16.gmra.mxu0 %v178
  %v984 = vpop.f32.mrf.mxu0
  %v985 = vadd.f32 %v169, %v984
  %v986 = vpop.f32.mrf.mxu0
  %987 = vdwg.mxu0
  %988 = vmatpush.bf16.msra.mxu0 %v680
  %989 = vmatpush.bf16.msra.mxu0 %v676
  %990 = vmatpush.bf16.msra.mxu0 %v672
  %991 = vmatpush.bf16.msra.mxu0 %v668
  %992 = vmatpush.bf16.msra.mxu0 %v664
  %993 = vmatpush.bf16.msra.mxu0 %v660
  %994 = vmatpush.bf16.msra.mxu0 %v656
  %995 = vmatpush.bf16.msra.mxu0 %v652
  %996 = vmatmul.bf16.gmra.mxu0 %v179
  %v997 = vpop.f32.mrf.mxu0
  %v998 = vadd.f32 %v985, %v997
  %v999 = vpop.f32.mrf.mxu0
  %1000 = vdwg.mxu0
  %1001 = vmatpush.bf16.msra.mxu0 %v712
  %1002 = vmatpush.bf16.msra.mxu0 %v708
  %1003 = vmatpush.bf16.msra.mxu0 %v704
  %1004 = vmatpush.bf16.msra.mxu0 %v700
  %1005 = vmatpush.bf16.msra.mxu0 %v696
  %1006 = vmatpush.bf16.msra.mxu0 %v692
  %1007 = vmatpush.bf16.msra.mxu0 %v688
  %1008 = vmatpush.bf16.msra.mxu0 %v684
  %1009 = vmatmul.bf16.gmra.mxu0 %v180
  %v1010 = vpop.f32.mrf.mxu0
  %v1011 = vadd.f32 %v998, %v1010
  %v1012 = vpop.f32.mrf.mxu0
  %1013 = vdwg.mxu0
  %1014 = vmatpush.bf16.msra.mxu0 %v744
  %1015 = vmatpush.bf16.msra.mxu0 %v740
  %1016 = vmatpush.bf16.msra.mxu0 %v736
  %1017 = vmatpush.bf16.msra.mxu0 %v732
  %1018 = vmatpush.bf16.msra.mxu0 %v728
  %1019 = vmatpush.bf16.msra.mxu0 %v724
  %1020 = vmatpush.bf16.msra.mxu0 %v720
  %1021 = vmatpush.bf16.msra.mxu0 %v716
  %1022 = vmatmul.bf16.gmra.mxu0 %v181
  %v1023 = vpop.f32.mrf.mxu0
  %v1024 = vadd.f32 %v1011, %v1023
  %v1025 = vpop.f32.mrf.mxu0
  %1026 = vdwg.mxu0
  %1027 = vmatpush.bf16.msra.mxu0 0
  %1028 = vmatpush.bf16.msra.mxu0 0
  %1029 = vmatpush.bf16.msra.mxu0 0
  %1030 = vmatpush.bf16.msra.mxu0 0
  %1031 = vmatpush.bf16.msra.mxu0 %v760
  %1032 = vmatpush.bf16.msra.mxu0 %v756
  %1033 = vmatpush.bf16.msra.mxu0 %v752
  %1034 = vmatpush.bf16.msra.mxu0 %v748
  %1035 = vmatmul.bf16.gmra.mxu0 %v908
  %v1036 = vpop.f32.mrf.mxu0
  %v1037 = vadd.f32 %v1024, %v1036
  %v1038 = vpop.f32.mrf.mxu0
  %1039 = vdwg.mxu0
  %1040 = vmatpush.bf16.msra.mxu0 %v649
  %1041 = vmatpush.bf16.msra.mxu0 %v645
  %1042 = vmatpush.bf16.msra.mxu0 %v641
  %1043 = vmatpush.bf16.msra.mxu0 %v637
  %1044 = vmatpush.bf16.msra.mxu0 %v633
  %1045 = vmatpush.bf16.msra.mxu0 %v629
  %1046 = vmatpush.bf16.msra.mxu0 %v625
  %1047 = vmatpush.bf16.msra.mxu0 %v621
  %1048 = vmatmul.bf16.gmra.mxu0 %v178
  %v1049 = vpop.f32.mrf.mxu0
  %v1050 = vadd.f32 %v170, %v1049
  %v1051 = vpop.f32.mrf.mxu0
  %1052 = vdwg.mxu0
  %1053 = vmatpush.bf16.msra.mxu0 %v681
  %1054 = vmatpush.bf16.msra.mxu0 %v677
  %1055 = vmatpush.bf16.msra.mxu0 %v673
  %1056 = vmatpush.bf16.msra.mxu0 %v669
  %1057 = vmatpush.bf16.msra.mxu0 %v665
  %1058 = vmatpush.bf16.msra.mxu0 %v661
  %1059 = vmatpush.bf16.msra.mxu0 %v657
  %1060 = vmatpush.bf16.msra.mxu0 %v653
  %1061 = vmatmul.bf16.gmra.mxu0 %v179
  %v1062 = vpop.f32.mrf.mxu0
  %v1063 = vadd.f32 %v1050, %v1062
  %v1064 = vpop.f32.mrf.mxu0
  %1065 = vdwg.mxu0
  %1066 = vmatpush.bf16.msra.mxu0 %v713
  %1067 = vmatpush.bf16.msra.mxu0 %v709
  %1068 = vmatpush.bf16.msra.mxu0 %v705
  %1069 = vmatpush.bf16.msra.mxu0 %v701
  %1070 = vmatpush.bf16.msra.mxu0 %v697
  %1071 = vmatpush.bf16.msra.mxu0 %v693
  %1072 = vmatpush.bf16.msra.mxu0 %v689
  %1073 = vmatpush.bf16.msra.mxu0 %v685
  %1074 = vmatmul.bf16.gmra.mxu0 %v180
  %v1075 = vpop.f32.mrf.mxu0
  %v1076 = vadd.f32 %v1063, %v1075
  %v1077 = vpop.f32.mrf.mxu0
  %1078 = vdwg.mxu0
  %1079 = vmatpush.bf16.msra.mxu0 %v745
  %1080 = vmatpush.bf16.msra.mxu0 %v741
  %1081 = vmatpush.bf16.msra.mxu0 %v737
  %1082 = vmatpush.bf16.msra.mxu0 %v733
  %1083 = vmatpush.bf16.msra.mxu0 %v729
  %1084 = vmatpush.bf16.msra.mxu0 %v725
  %1085 = vmatpush.bf16.msra.mxu0 %v721
  %1086 = vmatpush.bf16.msra.mxu0 %v717
  %1087 = vmatmul.bf16.gmra.mxu0 %v181
  %v1088 = vpop.f32.mrf.mxu0
  %v1089 = vadd.f32 %v1076, %v1088
  %v1090 = vpop.f32.mrf.mxu0
  %1091 = vdwg.mxu0
  %1092 = vmatpush.bf16.msra.mxu0 0
  %1093 = vmatpush.bf16.msra.mxu0 0
  %1094 = vmatpush.bf16.msra.mxu0 0
  %1095 = vmatpush.bf16.msra.mxu0 0
  %1096 = vmatpush.bf16.msra.mxu0 %v761
  %1097 = vmatpush.bf16.msra.mxu0 %v757
  %1098 = vmatpush.bf16.msra.mxu0 %v753
  %1099 = vmatpush.bf16.msra.mxu0 %v749
  %1100 = vmatmul.bf16.gmra.mxu0 %v908
  %v1101 = vpop.f32.mrf.mxu0
  %v1102 = vadd.f32 %v1089, %v1101
  %v1103 = vpop.f32.mrf.mxu0
  %1104 = vdwg.mxu0
  %1105 = vmatpush.bf16.msra.mxu0 %v650
  %1106 = vmatpush.bf16.msra.mxu0 %v646
  %1107 = vmatpush.bf16.msra.mxu0 %v642
  %1108 = vmatpush.bf16.msra.mxu0 %v638
  %1109 = vmatpush.bf16.msra.mxu0 %v634
  %1110 = vmatpush.bf16.msra.mxu0 %v630
  %1111 = vmatpush.bf16.msra.mxu0 %v626
  %1112 = vmatpush.bf16.msra.mxu0 %v622
  %1113 = vmatmul.bf16.gmra.mxu0 %v178
  %v1114 = vpop.f32.mrf.mxu0
  %v1115 = vadd.f32 %v171, %v1114
  %v1116 = vpop.f32.mrf.mxu0
  %1117 = vdwg.mxu0
  %1118 = vmatpush.bf16.msra.mxu0 %v682
  %1119 = vmatpush.bf16.msra.mxu0 %v678
  %1120 = vmatpush.bf16.msra.mxu0 %v674
  %1121 = vmatpush.bf16.msra.mxu0 %v670
  %1122 = vmatpush.bf16.msra.mxu0 %v666
  %1123 = vmatpush.bf16.msra.mxu0 %v662
  %1124 = vmatpush.bf16.msra.mxu0 %v658
  %1125 = vmatpush.bf16.msra.mxu0 %v654
  %1126 = vmatmul.bf16.gmra.mxu0 %v179
  %v1127 = vpop.f32.mrf.mxu0
  %v1128 = vadd.f32 %v1115, %v1127
  %v1129 = vpop.f32.mrf.mxu0
  %1130 = vdwg.mxu0
  %1131 = vmatpush.bf16.msra.mxu0 %v714
  %1132 = vmatpush.bf16.msra.mxu0 %v710
  %1133 = vmatpush.bf16.msra.mxu0 %v706
  %1134 = vmatpush.bf16.msra.mxu0 %v702
  %1135 = vmatpush.bf16.msra.mxu0 %v698
  %1136 = vmatpush.bf16.msra.mxu0 %v694
  %1137 = vmatpush.bf16.msra.mxu0 %v690
  %1138 = vmatpush.bf16.msra.mxu0 %v686
  %1139 = vmatmul.bf16.gmra.mxu0 %v180
  %v1140 = vpop.f32.mrf.mxu0
  %v1141 = vadd.f32 %v1128, %v1140
  %v1142 = vpop.f32.mrf.mxu0
  %1143 = vdwg.mxu0
  %1144 = vmatpush.bf16.msra.mxu0 %v746
  %1145 = vmatpush.bf16.msra.mxu0 %v742
  %1146 = vmatpush.bf16.msra.mxu0 %v738
  %1147 = vmatpush.bf16.msra.mxu0 %v734
  %1148 = vmatpush.bf16.msra.mxu0 %v730
  %1149 = vmatpush.bf16.msra.mxu0 %v726
  %1150 = vmatpush.bf16.msra.mxu0 %v722
  %1151 = vmatpush.bf16.msra.mxu0 %v718
  %1152 = vmatmul.bf16.gmra.mxu0 %v181
  %v1153 = vpop.f32.mrf.mxu0
  %v1154 = vadd.f32 %v1141, %v1153
  %v1155 = vpop.f32.mrf.mxu0
  %1156 = vdwg.mxu0
  %1157 = vmatpush.bf16.msra.mxu0 0
  %1158 = vmatpush.bf16.msra.mxu0 0
  %1159 = vmatpush.bf16.msra.mxu0 0
  %1160 = vmatpush.bf16.msra.mxu0 0
  %1161 = vmatpush.bf16.msra.mxu0 %v762
  %1162 = vmatpush.bf16.msra.mxu0 %v758
  %1163 = vmatpush.bf16.msra.mxu0 %v754
  %1164 = vmatpush.bf16.msra.mxu0 %v750
  %1165 = vmatmul.bf16.gmra.mxu0 %v908
  %v1166 = vpop.f32.mrf.mxu0
  %v1167 = vadd.f32 %v1154, %v1166
  %v1168 = vpop.f32.mrf.mxu0
  %1169 = vdwg.mxu0
  %v1170 = vmax.f32 %v972, 0.0
  %v1171 = vmax.f32 %v1037, 0.0
  %v1172 = vmax.f32 %v1102, 0.0
  %v1173 = vmax.f32 %v1167, 0.0
  %v1174 = vpack.c.bf16 %v1170, %v1170
  %v1175 = vpack.c.bf16 %v1171, %v1171
  %v1176 = vpack.c.bf16 %v1172, %v1172
  %v1177 = vpack.c.bf16 %v1173, %v1173
  %v1178 = vld [vmem:[%s3] sm:$0xf]
  %v1179 = vld [vmem:[%s3 + $0x4] sm:$0xf]
  %v1180 = vld [vmem:[%s3 + $0x8] sm:$0xf]
  %v1181 = vld [vmem:[%s3 + $0xc] sm:$0xf]
  %v1182 = vld [vmem:[%s3 + $0x10] sm:$0xf]
  %v1183 = vld [vmem:[%s3 + $0x14] sm:$0xf]
  %v1184 = vld [vmem:[%s3 + $0x18] sm:$0xf]
  %v1185 = vld [vmem:[%s3 + $0x1c] sm:$0xf]
  %v1186 = vld [vmem:[%s3 + $0x20] sm:$0xf]
  %v1187 = vld [vmem:[%s3 + $0x24] sm:$0xf]
  %v1188 = vld [vmem:[%s3 + $0x28] sm:$0xf]
  %v1189 = vld [vmem:[%s3 + $0x2c] sm:$0xf]
  %v1190 = vld [vmem:[%s3 + $0x30] sm:$0xf]
  %v1191 = vld [vmem:[%s3 + $0x34] sm:$0xf]
  %v1192 = vld [vmem:[%s3 + $0x38] sm:$0xf]
  %v1193 = vld [vmem:[%s3 + $0x3c] sm:$0xf]
  %v1194 = vld [vmem:[%s3 + $0x40] sm:$0xf]
  %v1195 = vld [vmem:[%s3 + $0x44] sm:$0xf]
  %v1196 = vld [vmem:[%s3 + $0x48] sm:$0xf]
  %v1197 = vld [vmem:[%s3 + $0x4c] sm:$0xf]
  %v1198 = vld [vmem:[%s3 + $0x50] sm:$0xf]
  %v1199 = vld [vmem:[%s3 + $0x54] sm:$0xf]
  %v1200 = vld [vmem:[%s3 + $0x58] sm:$0xf]
  %v1201 = vld [vmem:[%s3 + $0x5c] sm:$0xf]
  %v1202 = vld [vmem:[%s3 + $0x60] sm:$0xf]
  %v1203 = vld [vmem:[%s3 + $0x64] sm:$0xf]
  %v1204 = vld [vmem:[%s3 + $0x68] sm:$0xf]
  %v1205 = vld [vmem:[%s3 + $0x6c] sm:$0xf]
  %v1206 = vld [vmem:[%s3 + $0x70] sm:$0xf]
  %v1207 = vld [vmem:[%s3 + $0x74] sm:$0xf]
  %v1208 = vld [vmem:[%s3 + $0x78] sm:$0xf]
  %v1209 = vld [vmem:[%s3 + $0x7c] sm:$0xf]
  %v1210 = vld [vmem:[%s3 + $0x80] sm:$0xf]
  %v1211 = vld [vmem:[%s3 + $0x84] sm:$0xf]
  %v1212 = vld [vmem:[%s3 + $0x88] sm:$0xf]
  %v1213 = vld [vmem:[%s3 + $0x8c] sm:$0xf]
  %v1214 = vld [vmem:[%s3 + $0x90] sm:$0xf]
  %v1215 = vld [vmem:[%s3 + $0x94] sm:$0xf]
  %v1216 = vld [vmem:[%s3 + $0x98] sm:$0xf]
  %v1217 = vld [vmem:[%s3 + $0x9c] sm:$0xf]
  %v1218 = vld [vmem:[%s3 + $0xa0] sm:$0xf]
  %v1219 = vld [vmem:[%s3 + $0xa4] sm:$0xf]
  %v1220 = vld [vmem:[%s3 + $0xa8] sm:$0xf]
  %v1221 = vld [vmem:[%s3 + $0xac] sm:$0xf]
  %v1222 = vld [vmem:[%s3 + $0xb0] sm:$0xf]
  %v1223 = vld [vmem:[%s3 + $0xb4] sm:$0xf]
  %v1224 = vld [vmem:[%s3 + $0xb8] sm:$0xf]
  %v1225 = vld [vmem:[%s3 + $0xbc] sm:$0xf]
  %v1226 = vld [vmem:[%s3 + $0xc0] sm:$0xf]
  %v1227 = vld [vmem:[%s3 + $0xc4] sm:$0xf]
  %v1228 = vld [vmem:[%s3 + $0xc8] sm:$0xf]
  %v1229 = vld [vmem:[%s3 + $0xcc] sm:$0xf]
  %v1230 = vld [vmem:[%s3 + $0xd0] sm:$0xf]
  %v1231 = vld [vmem:[%s3 + $0xd4] sm:$0xf]
  %v1232 = vld [vmem:[%s3 + $0xd8] sm:$0xf]
  %v1233 = vld [vmem:[%s3 + $0xdc] sm:$0xf]
  %v1234 = vld [vmem:[%s3 + $0xe0] sm:$0xf]
  %v1235 = vld [vmem:[%s3 + $0xe4] sm:$0xf]
  %v1236 = vld [vmem:[%s3 + $0xe8] sm:$0xf]
  %v1237 = vld [vmem:[%s3 + $0xec] sm:$0xf]
  %v1238 = vld [vmem:[%s3 + $0xf0] sm:$0xf]
  %v1239 = vld [vmem:[%s3 + $0xf4] sm:$0xf]
  %v1240 = vld [vmem:[%s3 + $0xf8] sm:$0xf]
  %v1241 = vld [vmem:[%s3 + $0xfc] sm:$0xf]
  %v1242 = vld [vmem:[%s4] sm:$0x1]
  %v1244 = vperm.slane %v1242, 0
  %v1310 = vunpack.c.l.b16 %v1178
  %v1311 = vunpack.c.l.b16 %v1179
  %v1312 = vunpack.c.l.b16 %v1180
  %v1313 = vunpack.c.l.b16 %v1181
  %v1314 = vunpack.c.l.b16 %v1182
  %v1315 = vunpack.c.l.b16 %v1183
  %v1316 = vunpack.c.l.b16 %v1184
  %v1317 = vunpack.c.l.b16 %v1185
  %v1318 = vunpack.c.l.b16 %v1186
  %v1319 = vunpack.c.l.b16 %v1187
  %v1320 = vunpack.c.l.b16 %v1188
  %v1321 = vunpack.c.l.b16 %v1189
  %v1322 = vunpack.c.l.b16 %v1190
  %v1323 = vunpack.c.l.b16 %v1191
  %v1324 = vunpack.c.l.b16 %v1192
  %v1325 = vunpack.c.l.b16 %v1193
  %v1326 = vunpack.c.l.b16 %v1194
  %v1327 = vunpack.c.l.b16 %v1195
  %v1328 = vunpack.c.l.b16 %v1196
  %v1329 = vunpack.c.l.b16 %v1197
  %v1330 = vunpack.c.l.b16 %v1198
  %v1331 = vunpack.c.l.b16 %v1199
  %v1332 = vunpack.c.l.b16 %v1200
  %v1333 = vunpack.c.l.b16 %v1201
  %v1334 = vunpack.c.l.b16 %v1202
  %v1335 = vunpack.c.l.b16 %v1203
  %v1336 = vunpack.c.l.b16 %v1204
  %v1337 = vunpack.c.l.b16 %v1205
  %v1338 = vunpack.c.l.b16 %v1206
  %v1339 = vunpack.c.l.b16 %v1207
  %v1340 = vunpack.c.l.b16 %v1208
  %v1341 = vunpack.c.l.b16 %v1209
  %v1342 = vunpack.c.l.b16 %v1210
  %v1343 = vunpack.c.l.b16 %v1211
  %v1344 = vunpack.c.l.b16 %v1212
  %v1345 = vunpack.c.l.b16 %v1213
  %v1346 = vunpack.c.l.b16 %v1214
  %v1347 = vunpack.c.l.b16 %v1215
  %v1348 = vunpack.c.l.b16 %v1216
  %v1349 = vunpack.c.l.b16 %v1217
  %v1350 = vunpack.c.l.b16 %v1218
  %v1351 = vunpack.c.l.b16 %v1219
  %v1352 = vunpack.c.l.b16 %v1220
  %v1353 = vunpack.c.l.b16 %v1221
  %v1354 = vunpack.c.l.b16 %v1222
  %v1355 = vunpack.c.l.b16 %v1223
  %v1356 = vunpack.c.l.b16 %v1224
  %v1357 = vunpack.c.l.b16 %v1225
  %v1358 = vunpack.c.l.b16 %v1226
  %v1359 = vunpack.c.l.b16 %v1227
  %v1360 = vunpack.c.l.b16 %v1228
  %v1361 = vunpack.c.l.b16 %v1229
  %v1362 = vunpack.c.l.b16 %v1230
  %v1363 = vunpack.c.l.b16 %v1231
  %v1364 = vunpack.c.l.b16 %v1232
  %v1365 = vunpack.c.l.b16 %v1233
  %v1366 = vunpack.c.l.b16 %v1234
  %v1367 = vunpack.c.l.b16 %v1235
  %v1368 = vunpack.c.l.b16 %v1236
  %v1369 = vunpack.c.l.b16 %v1237
  %v1370 = vunpack.c.l.b16 %v1238
  %v1371 = vunpack.c.l.b16 %v1239
  %v1372 = vunpack.c.l.b16 %v1240
  %v1373 = vunpack.c.l.b16 %v1241
  %v1374 = vpack.c.b16 %v1311, %v1310
  %v1375 = vpack.c.b16 %v1313, %v1312
  %v1376 = vpack.c.b16 %v1315, %v1314
  %v1377 = vpack.c.b16 %v1317, %v1316
  %v1378 = vpack.c.b16 %v1319, %v1318
  %v1379 = vpack.c.b16 %v1321, %v1320
  %v1380 = vpack.c.b16 %v1323, %v1322
  %v1381 = vpack.c.b16 %v1325, %v1324
  %v1382 = vpack.c.b16 %v1327, %v1326
  %v1383 = vpack.c.b16 %v1329, %v1328
  %v1384 = vpack.c.b16 %v1331, %v1330
  %v1385 = vpack.c.b16 %v1333, %v1332
  %v1386 = vpack.c.b16 %v1335, %v1334
  %v1387 = vpack.c.b16 %v1337, %v1336
  %v1388 = vpack.c.b16 %v1339, %v1338
  %v1389 = vpack.c.b16 %v1341, %v1340
  %v1390 = vpack.c.b16 %v1343, %v1342
  %v1391 = vpack.c.b16 %v1345, %v1344
  %v1392 = vpack.c.b16 %v1347, %v1346
  %v1393 = vpack.c.b16 %v1349, %v1348
  %v1394 = vpack.c.b16 %v1351, %v1350
  %v1395 = vpack.c.b16 %v1353, %v1352
  %v1396 = vpack.c.b16 %v1355, %v1354
  %v1397 = vpack.c.b16 %v1357, %v1356
  %v1398 = vpack.c.b16 %v1359, %v1358
  %v1399 = vpack.c.b16 %v1361, %v1360
  %v1400 = vpack.c.b16 %v1363, %v1362
  %v1401 = vpack.c.b16 %v1365, %v1364
  %v1402 = vpack.c.b16 %v1367, %v1366
  %v1403 = vpack.c.b16 %v1369, %v1368
  %v1404 = vpack.c.b16 %v1371, %v1370
  %v1405 = vpack.c.b16 %v1373, %v1372
  %1438 = vmatpush.bf16.msra.mxu0 %v1381
  %1439 = vmatpush.bf16.msra.mxu0 %v1380
  %1440 = vmatpush.bf16.msra.mxu0 %v1379
  %1441 = vmatpush.bf16.msra.mxu0 %v1378
  %1442 = vmatpush.bf16.msra.mxu0 %v1377
  %1443 = vmatpush.bf16.msra.mxu0 %v1376
  %1444 = vmatpush.bf16.msra.mxu0 %v1375
  %1445 = vmatpush.bf16.msra.mxu0 %v1374
  %1446 = vmatmul.bf16.gmra.mxu0 %v1174
  %v1447 = vpop.f32.mrf.mxu0
  %v1448 = vadd.f32 %v1244, %v1447
  %v1449 = vpop.f32.mrf.mxu0
  %1450 = vdwg.mxu0
  %1451 = vmatpush.bf16.msra.mxu0 %v1389
  %1452 = vmatpush.bf16.msra.mxu0 %v1388
  %1453 = vmatpush.bf16.msra.mxu0 %v1387
  %1454 = vmatpush.bf16.msra.mxu0 %v1386
  %1455 = vmatpush.bf16.msra.mxu0 %v1385
  %1456 = vmatpush.bf16.msra.mxu0 %v1384
  %1457 = vmatpush.bf16.msra.mxu0 %v1383
  %1458 = vmatpush.bf16.msra.mxu0 %v1382
  %1459 = vmatmul.bf16.gmra.mxu0 %v1175
  %v1460 = vpop.f32.mrf.mxu0
  %v1461 = vadd.f32 %v1448, %v1460
  %v1462 = vpop.f32.mrf.mxu0
  %1463 = vdwg.mxu0
  %1464 = vmatpush.bf16.msra.mxu0 %v1397
  %1465 = vmatpush.bf16.msra.mxu0 %v1396
  %1466 = vmatpush.bf16.msra.mxu0 %v1395
  %1467 = vmatpush.bf16.msra.mxu0 %v1394
  %1468 = vmatpush.bf16.msra.mxu0 %v1393
  %1469 = vmatpush.bf16.msra.mxu0 %v1392
  %1470 = vmatpush.bf16.msra.mxu0 %v1391
  %1471 = vmatpush.bf16.msra.mxu0 %v1390
  %1472 = vmatmul.bf16.gmra.mxu0 %v1176
  %v1473 = vpop.f32.mrf.mxu0
  %v1474 = vadd.f32 %v1461, %v1473
  %v1475 = vpop.f32.mrf.mxu0
  %1476 = vdwg.mxu0
  %1477 = vmatpush.bf16.msra.mxu0 %v1405
  %1478 = vmatpush.bf16.msra.mxu0 %v1404
  %1479 = vmatpush.bf16.msra.mxu0 %v1403
  %1480 = vmatpush.bf16.msra.mxu0 %v1402
  %1481 = vmatpush.bf16.msra.mxu0 %v1401
  %1482 = vmatpush.bf16.msra.mxu0 %v1400
  %1483 = vmatpush.bf16.msra.mxu0 %v1399
  %1484 = vmatpush.bf16.msra.mxu0 %v1398
  %1485 = vmatmul.bf16.gmra.mxu0 %v1177
  %v1486 = vpop.f32.mrf.mxu0
  %v1487 = vadd.f32 %v1474, %v1486
  %v1488 = vpop.f32.mrf.mxu0
  %1489 = vdwg.mxu0
  %1490 = vst [vmem:[%s5] sm:$0x3] %v1487
  // Predicated region
  $region22: #{atari_actor_critic_forward.7} parent=0 // pred_check
    _
  $region23: #{atari_actor_critic_forward.7} parent=0 // pred_check_branch
    %1492 = sbr.rel (0) target = $region25
  $region24: #{atari_actor_critic_forward.7} parent=0 // pred_region
    _
  $region25: #{atari_actor_critic_forward.7} parent=0 // pred_fallthru
    _
  // Predicated region
  $region26: #{atari_actor_critic_forward.7} parent=0 // pred_check
    _
  $region27: #{atari_actor_critic_forward.7} parent=0 // pred_check_branch
    %1494 = sbr.rel (0) target = $region29
  $region28: #{atari_actor_critic_forward.7} parent=0 // pred_region
    _
  $region29: #{atari_actor_critic_forward.7} parent=0 // pred_fallthru
    _

</llo_original>
